<compile_context>
chip_gen: v7x
topology: tpu7x:2x2x1
jax: 0.10.0
libtpu: 0.0.40
codegen_flags: <defaults>
</compile_context>

<pallas_src>
import functools

import jax
import jax.numpy as jnp
from jax.experimental import pallas as pl
from jax.experimental.pallas import tpu as pltpu

HIDDEN = 20          # nn.LSTM hidden_size
NQ = 9               # len(np.arange(0.1, 1.0, 0.1)) quantile heads
GP = 128             # per-gate / per-state lane padding (one full lane block)


def _pad_gate_cols(w, hidden, gp):
    """(in_dim, 4*hidden) -> (in_dim, 4*gp); gate k occupies lanes [k*gp, k*gp+hidden)."""
    pad = gp - hidden
    parts = []
    for k in range(4):
        parts.append(w[:, k * hidden:(k + 1) * hidden])
        parts.append(jnp.zeros((w.shape[0], pad), w.dtype))
    return jnp.concatenate(parts, axis=-1)


def _pad_rows(w, rows_to):
    """(r, c) -> (rows_to, c) with zero rows appended."""
    r, c = w.shape
    return jnp.concatenate([w, jnp.zeros((rows_to - r, c), w.dtype)], axis=0)


def lstm_kernel(x_ref,
                wih1_ref, whh1_ref, b1_ref,
                w2_ref, b2_ref,
                wout_ref, bout_ref,
                o_ref,
                xp_sc, h2_sc,
                *, gp):
    T, B, F = x_ref.shape
    nq = o_ref.shape[-1]
    gw = 4 * gp

    # ---- Phase 1 (recurrence-free): batched layer-1 input projection over all T*B rows.
    x_flat = x_ref[...].reshape(T * B, F)
    xp = (jnp.dot(x_flat, wih1_ref[...], preferred_element_type=jnp.float32)
          + b1_ref[...])
    xp_sc[...] = xp.reshape(T, B, gw)

    # ---- Hoisted loop invariants (no per-iteration loads / broadcasts).
    whh1 = whh1_ref[...]                                   # (gp, 4*gp)
    w2 = w2_ref[...]                                       # (2*gp, 4*gp)
    b2 = jnp.broadcast_to(b2_ref[...], (B, gw))

    def gates_to_hc(gates, c):
        # Gate order i, f, g, o; each gate is a full 128-lane block (vreg-aligned slice).
        i = jax.nn.sigmoid(gates[:, 0 * gp:1 * gp])
        f = jax.nn.sigmoid(gates[:, 1 * gp:2 * gp])
        g = jnp.tanh(gates[:, 2 * gp:3 * gp])
        o = jax.nn.sigmoid(gates[:, 3 * gp:4 * gp])
        c_new = f * c + i * g
        return o * jnp.tanh(c_new), c_new

    def step(t, carry):
        h1, c1, h2, c2 = carry
        # Layer 1: only the recurrent matmul remains on the serial path.
        g1 = xp_sc[t] + jnp.dot(h1, whh1, preferred_element_type=jnp.float32)
        h1, c1 = gates_to_hc(g1, c1)
        # TODO(synk): nn.LSTM dropout=0.3 between layers is train-time only; eval forward omits it.
        # Layer 2: input + recurrent matmuls fused via a 128-aligned K-concat.
        h12 = jnp.concatenate([h1, h2], axis=-1)           # (B, 2*gp)
        g2 = jnp.dot(h12, w2, preferred_element_type=jnp.float32) + b2
        h2, c2 = gates_to_hc(g2, c2)
        h2_sc[t] = h2
        return (h1, c1, h2, c2)

    z = jnp.zeros((B, gp), jnp.float32)
    jax.lax.fori_loop(0, T, step, (z, z, z, z), unroll=True)

    # ---- Phase 3 (recurrence-free): batched quantile head, single output store.
    h2_flat = h2_sc[...].reshape(T * B, gp)
    out = (jnp.dot(h2_flat, wout_ref[...], preferred_element_type=jnp.float32)
           + bout_ref[...])
    o_ref[...] = out.reshape(T, B, nq).astype(o_ref.dtype)


@jax.jit
def lstm_model_forward(x, params):
    """x: (B, T, F) float32 -> (B, T, NQ) float32."""
    B, T, F = x.shape
    (wih1_t, whh1_t, b1, wih2_t, whh2_t, b2, wout, bout) = params
    hidden = whh1_t.shape[0]
    nq = wout.shape[1]
    gp = GP

    # Pack/pad weights once: gate k lives at lanes [k*gp, k*gp+hidden); hidden/cell
    # states live in the first `hidden` lanes of a full 128-lane block (zero rows
    # make the pad lanes inert).
    wih1_p = _pad_gate_cols(wih1_t, hidden, gp)                      # (F, 4*gp)
    whh1_p = _pad_rows(_pad_gate_cols(whh1_t, hidden, gp), gp)       # (gp, 4*gp)
    b1_p = _pad_gate_cols(b1, hidden, gp)                            # (1, 4*gp)

    # Fused layer-2 weight: rows [0:hidden) multiply h1 lanes, rows [gp:gp+hidden)
    # multiply h2 lanes of the concatenated (B, 2*gp) input.
    w2_p = jnp.concatenate([
        _pad_rows(_pad_gate_cols(wih2_t, hidden, gp), gp),
        _pad_rows(_pad_gate_cols(whh2_t, hidden, gp), gp),
    ], axis=0)                                                       # (2*gp, 4*gp)
    b2_p = _pad_gate_cols(b2, hidden, gp)                            # (1, 4*gp)

    wout_p = _pad_rows(wout, gp)                                     # (gp, nq)

    x_tbf = jnp.transpose(x, (1, 0, 2))  # (T, B, F)

    def full(shape):
        return pl.BlockSpec(shape, lambda i: (0,) * len(shape))

    out_tbq = pl.pallas_call(
        functools.partial(lstm_kernel, gp=gp),
        out_shape=jax.ShapeDtypeStruct((T, B, nq), jnp.float32),
        grid_spec=pltpu.PrefetchScalarGridSpec(
            num_scalar_prefetch=0,
            grid=(1,),                       # single step; recurrence is an in-kernel loop
            in_specs=[
                full(x_tbf.shape),
                full(wih1_p.shape), full(whh1_p.shape), full(b1_p.shape),
                full(w2_p.shape), full(b2_p.shape),
                full(wout_p.shape), full(bout.shape),
            ],
            out_specs=full((T, B, nq)),
            scratch_shapes=[
                pltpu.VMEM((T, B, 4 * gp), jnp.float32),   # precomputed input projections
                pltpu.VMEM((T, B, gp), jnp.float32),       # all h2 states for batched head
            ],
        ),
        compiler_params=pltpu.CompilerParams(
            dimension_semantics=("arbitrary",),
        ),
    )(x_tbf, wih1_p, whh1_p, b1_p, w2_p, b2_p, wout_p, bout)

    return jnp.transpose(out_tbq, (1, 0, 2))  # (B, T, NQ)


def init_params(key, len_features, hidden, nq):
    """Deterministic synthetic parameters (PyTorch nn.LSTM shapes, pre-transposed)."""
    ks = jax.random.split(key, 8)
    scale = 0.2
    # Layer 1: W_ih (4H, F), W_hh (4H, H) — stored transposed for x @ W^T
    wih1_t = scale * jax.random.normal(ks[0], (len_features, 4 * hidden), jnp.float32)
    whh1_t = scale * jax.random.normal(ks[1], (hidden, 4 * hidden), jnp.float32)
    b1 = scale * jax.random.normal(ks[2], (1, 4 * hidden), jnp.float32)  # b_ih + b_hh folded
    # Layer 2: input is hidden
    wih2_t = scale * jax.random.normal(ks[3], (hidden, 4 * hidden), jnp.float32)
    whh2_t = scale * jax.random.normal(ks[4], (hidden, 4 * hidden), jnp.float32)
    b2 = scale * jax.random.normal(ks[5], (1, 4 * hidden), jnp.float32)
    # Final layers: 9 x Linear(20, 1), orthogonal weight, zero bias (per init_weights),
    # fused into a (20, 9) matmul.
    q, _ = jnp.linalg.qr(jax.random.normal(ks[6], (hidden, hidden), jnp.float32))
    wout = q[:, :nq]                      # (hidden, nq)
    bout = jnp.zeros((1, nq), jnp.float32)
    return (wih1_t, whh1_t, b1, wih2_t, whh2_t, b2, wout, bout)


def reference_forward(x, params):
    """Pure-JAX reference (lax.scan) for verification."""
    (wih1_t, whh1_t, b1, wih2_t, whh2_t, b2, wout, bout) = params
    B, T, F = x.shape
    hidden = whh1_t.shape[0]

    def cell(x_t, h, c, wih_t, whh_t, b):
        gates = x_t @ wih_t + h @ whh_t + b
        i = jax.nn.sigmoid(gates[:, :hidden])
        f = jax.nn.sigmoid(gates[:, hidden:2 * hidden])
        g = jnp.tanh(gates[:, 2 * hidden:3 * hidden])
        o = jax.nn.sigmoid(gates[:, 3 * hidden:])
        c_new = f * c + i * g
        return o * jnp.tanh(c_new), c_new

    def step(carry, x_t):
        h1, c1, h2, c2 = carry
        h1, c1 = cell(x_t, h1, c1, wih1_t, whh1_t, b1)
        h2, c2 = cell(h1, h2, c2, wih2_t, whh2_t, b2)
        return (h1, c1, h2, c2), h2 @ wout + bout

    z = jnp.zeros((B, hidden), jnp.float32)
    _, outs = jax.lax.scan(step, (z, z, z, z), jnp.transpose(x, (1, 0, 2)))
    return jnp.transpose(outs, (1, 0, 2))


if __name__ == "__main__":
    B, T, F = 2, 8, 66  # len_features=66 from LSTM_model default
    key = jax.random.PRNGKey(0)
    kx, kp = jax.random.split(key)
    x = jax.random.normal(kx, (B, T, F), jnp.float32)
    params = init_params(kp, F, HIDDEN, NQ)

    out = jax.block_until_ready(lstm_model_forward(x, params))
    ref = jax.block_until_ready(reference_forward(x, params))

    assert out.shape == (B, T, NQ), out.shape
    assert jnp.allclose(out, ref, atol=1e-5, rtol=1e-5), float(jnp.max(jnp.abs(out - ref)))
    print("KERNEL_OK")
</pallas_src>

<mosaic_0001>
module attributes {stable_mosaic.version = 11 : i64} {
  func.func @lstm_kernel(%arg0: i32, %arg1: memref<8x2x66xf32, #tpu.memory_space<vmem>>, %arg2: memref<66x512xf32, #tpu.memory_space<vmem>>, %arg3: memref<128x512xf32, #tpu.memory_space<vmem>>, %arg4: memref<1x512xf32, #tpu.memory_space<vmem>>, %arg5: memref<256x512xf32, #tpu.memory_space<vmem>>, %arg6: memref<1x512xf32, #tpu.memory_space<vmem>>, %arg7: memref<128x9xf32, #tpu.memory_space<vmem>>, %arg8: memref<1x9xf32, #tpu.memory_space<vmem>>, %arg9: memref<8x2x9xf32, #tpu.memory_space<vmem>>, %arg10: memref<8x2x512xf32, #tpu.memory_space<vmem>>, %arg11: memref<8x2x128xf32, #tpu.memory_space<vmem>>) attributes {dimension_semantics = [#tpu.dimension_semantics<arbitrary>], iteration_bounds = array<i64: 1>, scalar_prefetch = 0 : i64, scratch_operands = 2 : i64, tpu.core_type = #tpu.core_type<tc>, window_params = [{pipeline_mode = #tpu.pipeline_mode<synchronous>, transform_indices = @transform_0, window_bounds = array<i64: 8, 2, 66>}, {pipeline_mode = #tpu.pipeline_mode<synchronous>, transform_indices = @transform_1, window_bounds = array<i64: 66, 512>}, {pipeline_mode = #tpu.pipeline_mode<synchronous>, transform_indices = @transform_2, window_bounds = array<i64: 128, 512>}, {pipeline_mode = #tpu.pipeline_mode<synchronous>, transform_indices = @transform_3, window_bounds = array<i64: 1, 512>}, {pipeline_mode = #tpu.pipeline_mode<synchronous>, transform_indices = @transform_4, window_bounds = array<i64: 256, 512>}, {pipeline_mode = #tpu.pipeline_mode<synchronous>, transform_indices = @transform_5, window_bounds = array<i64: 1, 512>}, {pipeline_mode = #tpu.pipeline_mode<synchronous>, transform_indices = @transform_6, window_bounds = array<i64: 128, 9>}, {pipeline_mode = #tpu.pipeline_mode<synchronous>, transform_indices = @transform_7, window_bounds = array<i64: 1, 9>}, {pipeline_mode = #tpu.pipeline_mode<synchronous>, transform_indices = @transform_8, window_bounds = array<i64: 8, 2, 9>}]} {
    %c0 = arith.constant 0 : index
    %c0_0 = arith.constant 0 : index
    %c0_1 = arith.constant 0 : index
    %0 = vector.load %arg1[%c0, %c0_0, %c0_1] : memref<8x2x66xf32, #tpu.memory_space<vmem>>, vector<8x2x66xf32>
    %1 = vector.shape_cast %0 : vector<8x2x66xf32> to vector<16x66xf32>
    %c0_2 = arith.constant 0 : index
    %c0_3 = arith.constant 0 : index
    %2 = vector.load %arg2[%c0_2, %c0_3] : memref<66x512xf32, #tpu.memory_space<vmem>>, vector<66x512xf32>
    %cst = arith.constant dense<0.000000e+00> : vector<16x512xf32>
    %3 = tpu.matmul %1, %2, %cst {dimension_numbers = #tpu.dot_dimension_numbers<[1], [0], [0], [1], [0, 0, 1, 1], [], []>} : vector<16x66xf32>, vector<66x512xf32>, vector<16x512xf32> -> vector<16x512xf32>
    %c0_4 = arith.constant 0 : index
    %c0_5 = arith.constant 0 : index
    %4 = vector.load %arg4[%c0_4, %c0_5] : memref<1x512xf32, #tpu.memory_space<vmem>>, vector<1x512xf32>
    %5 = vector.broadcast %4 : vector<1x512xf32> to vector<16x512xf32>
    %6 = arith.addf %3, %5 : vector<16x512xf32>
    %7 = vector.shape_cast %6 : vector<16x512xf32> to vector<8x2x512xf32>
    %c0_6 = arith.constant 0 : index
    %c0_7 = arith.constant 0 : index
    %c0_8 = arith.constant 0 : index
    %8 = vector.load %arg10[%c0_6, %c0_7, %c0_8] : memref<8x2x512xf32, #tpu.memory_space<vmem>>, vector<8x2x512xf32>
    tpu.vector_store %arg10[%c0_6, %c0_7, %c0_8], %7 {strides = array<i32>} : memref<8x2x512xf32, #tpu.memory_space<vmem>>, vector<8x2x512xf32>,
    %c0_9 = arith.constant 0 : index
    %c0_10 = arith.constant 0 : index
    %9 = vector.load %arg3[%c0_9, %c0_10] : memref<128x512xf32, #tpu.memory_space<vmem>>, vector<128x512xf32>
    %c0_11 = arith.constant 0 : index
    %c0_12 = arith.constant 0 : index
    %10 = vector.load %arg5[%c0_11, %c0_12] : memref<256x512xf32, #tpu.memory_space<vmem>>, vector<256x512xf32>
    %c0_13 = arith.constant 0 : index
    %c0_14 = arith.constant 0 : index
    %11 = vector.load %arg6[%c0_13, %c0_14] : memref<1x512xf32, #tpu.memory_space<vmem>>, vector<1x512xf32>
    %12 = vector.shape_cast %11 : vector<1x512xf32> to vector<1x512xf32>
    %13 = vector.broadcast %12 : vector<1x512xf32> to vector<2x512xf32>
    %cst_15 = arith.constant 0.000000e+00 : f32
    %14 = vector.broadcast %cst_15 : f32 to vector<2x128xf32>
    %c0_i32 = arith.constant 0 : i32
    %15 = arith.index_cast %c0_i32 : i32 to index
    %c0_16 = arith.constant 0 : index
    %c0_17 = arith.constant 0 : index
    %16 = vector.load %arg10[%15, %c0_16, %c0_17] : memref<8x2x512xf32, #tpu.memory_space<vmem>>, vector<1x2x512xf32>
    %17 = vector.shape_cast %16 : vector<1x2x512xf32> to vector<2x512xf32>
    %cst_18 = arith.constant dense<0.000000e+00> : vector<2x512xf32>
    %18 = tpu.matmul %14, %9, %cst_18 {dimension_numbers = #tpu.dot_dimension_numbers<[1], [0], [0], [1], [0, 0, 1, 1], [], []>} : vector<2x128xf32>, vector<128x512xf32>, vector<2x512xf32> -> vector<2x512xf32>
    %19 = arith.addf %17, %18 : vector<2x512xf32>
    %20 = vector.extract_strided_slice %19 {offsets = [0, 0], sizes = [2, 128], strides = [1, 1]} : vector<2x512xf32> to vector<2x128xf32>
    %21 = arith.negf %20 : vector<2x128xf32>
    %22 = math.exp %21 : vector<2x128xf32>
    %cst_19 = arith.constant 1.000000e+00 : f32
    %23 = vector.broadcast %cst_19 : f32 to vector<2x128xf32>
    %24 = arith.addf %23, %22 : vector<2x128xf32>
    %25 = arith.divf %23, %24 : vector<2x128xf32>
    %26 = vector.extract_strided_slice %19 {offsets = [0, 128], sizes = [2, 128], strides = [1, 1]} : vector<2x512xf32> to vector<2x128xf32>
    %27 = arith.negf %26 : vector<2x128xf32>
    %28 = math.exp %27 : vector<2x128xf32>
    %cst_20 = arith.constant 1.000000e+00 : f32
    %29 = vector.broadcast %cst_20 : f32 to vector<2x128xf32>
    %30 = arith.addf %29, %28 : vector<2x128xf32>
    %31 = arith.divf %29, %30 : vector<2x128xf32>
    %32 = vector.extract_strided_slice %19 {offsets = [0, 256], sizes = [2, 128], strides = [1, 1]} : vector<2x512xf32> to vector<2x128xf32>
    %33 = math.tanh %32 : vector<2x128xf32>
    %34 = vector.extract_strided_slice %19 {offsets = [0, 384], sizes = [2, 128], strides = [1, 1]} : vector<2x512xf32> to vector<2x128xf32>
    %35 = arith.negf %34 : vector<2x128xf32>
    %36 = math.exp %35 : vector<2x128xf32>
    %cst_21 = arith.constant 1.000000e+00 : f32
    %37 = vector.broadcast %cst_21 : f32 to vector<2x128xf32>
    %38 = arith.addf %37, %36 : vector<2x128xf32>
    %39 = arith.divf %37, %38 : vector<2x128xf32>
    %40 = arith.mulf %31, %14 : vector<2x128xf32>
    %41 = arith.mulf %25, %33 : vector<2x128xf32>
    %42 = arith.addf %40, %41 : vector<2x128xf32>
    %43 = math.tanh %42 : vector<2x128xf32>
    %44 = arith.mulf %39, %43 : vector<2x128xf32>
    %45 = tpu.concatenate %44, %14 in 1 : vector<2x128xf32>, vector<2x128xf32> -> vector<2x256xf32>
    %cst_22 = arith.constant dense<0.000000e+00> : vector<2x512xf32>
    %46 = tpu.matmul %45, %10, %cst_22 {dimension_numbers = #tpu.dot_dimension_numbers<[1], [0], [0], [1], [0, 0, 1, 1], [], []>} : vector<2x256xf32>, vector<256x512xf32>, vector<2x512xf32> -> vector<2x512xf32>
    %47 = arith.addf %46, %13 : vector<2x512xf32>
    %48 = vector.extract_strided_slice %47 {offsets = [0, 0], sizes = [2, 128], strides = [1, 1]} : vector<2x512xf32> to vector<2x128xf32>
    %49 = arith.negf %48 : vector<2x128xf32>
    %50 = math.exp %49 : vector<2x128xf32>
    %cst_23 = arith.constant 1.000000e+00 : f32
    %51 = vector.broadcast %cst_23 : f32 to vector<2x128xf32>
    %52 = arith.addf %51, %50 : vector<2x128xf32>
    %53 = arith.divf %51, %52 : vector<2x128xf32>
    %54 = vector.extract_strided_slice %47 {offsets = [0, 128], sizes = [2, 128], strides = [1, 1]} : vector<2x512xf32> to vector<2x128xf32>
    %55 = arith.negf %54 : vector<2x128xf32>
    %56 = math.exp %55 : vector<2x128xf32>
    %cst_24 = arith.constant 1.000000e+00 : f32
    %57 = vector.broadcast %cst_24 : f32 to vector<2x128xf32>
    %58 = arith.addf %57, %56 : vector<2x128xf32>
    %59 = arith.divf %57, %58 : vector<2x128xf32>
    %60 = vector.extract_strided_slice %47 {offsets = [0, 256], sizes = [2, 128], strides = [1, 1]} : vector<2x512xf32> to vector<2x128xf32>
    %61 = math.tanh %60 : vector<2x128xf32>
    %62 = vector.extract_strided_slice %47 {offsets = [0, 384], sizes = [2, 128], strides = [1, 1]} : vector<2x512xf32> to vector<2x128xf32>
    %63 = arith.negf %62 : vector<2x128xf32>
    %64 = math.exp %63 : vector<2x128xf32>
    %cst_25 = arith.constant 1.000000e+00 : f32
    %65 = vector.broadcast %cst_25 : f32 to vector<2x128xf32>
    %66 = arith.addf %65, %64 : vector<2x128xf32>
    %67 = arith.divf %65, %66 : vector<2x128xf32>
    %68 = arith.mulf %59, %14 : vector<2x128xf32>
    %69 = arith.mulf %53, %61 : vector<2x128xf32>
    %70 = arith.addf %68, %69 : vector<2x128xf32>
    %71 = math.tanh %70 : vector<2x128xf32>
    %72 = arith.mulf %67, %71 : vector<2x128xf32>
    %73 = arith.index_cast %c0_i32 : i32 to index
    %c0_26 = arith.constant 0 : index
    %c0_27 = arith.constant 0 : index
    %74 = vector.load %arg11[%73, %c0_26, %c0_27] : memref<8x2x128xf32, #tpu.memory_space<vmem>>, vector<1x2x128xf32>
    %75 = vector.shape_cast %74 : vector<1x2x128xf32> to vector<2x128xf32>
    %76 = vector.shape_cast %72 : vector<2x128xf32> to vector<1x2x128xf32>
    tpu.vector_store %arg11[%73, %c0_26, %c0_27], %76 {strides = array<i32>} : memref<8x2x128xf32, #tpu.memory_space<vmem>>, vector<1x2x128xf32>,
    %c1_i32 = arith.constant 1 : i32
    %77 = arith.index_cast %c1_i32 : i32 to index
    %c0_28 = arith.constant 0 : index
    %c0_29 = arith.constant 0 : index
    %78 = vector.load %arg10[%77, %c0_28, %c0_29] : memref<8x2x512xf32, #tpu.memory_space<vmem>>, vector<1x2x512xf32>
    %79 = vector.shape_cast %78 : vector<1x2x512xf32> to vector<2x512xf32>
    %cst_30 = arith.constant dense<0.000000e+00> : vector<2x512xf32>
    %80 = tpu.matmul %44, %9, %cst_30 {dimension_numbers = #tpu.dot_dimension_numbers<[1], [0], [0], [1], [0, 0, 1, 1], [], []>} : vector<2x128xf32>, vector<128x512xf32>, vector<2x512xf32> -> vector<2x512xf32>
    %81 = arith.addf %79, %80 : vector<2x512xf32>
    %82 = vector.extract_strided_slice %81 {offsets = [0, 0], sizes = [2, 128], strides = [1, 1]} : vector<2x512xf32> to vector<2x128xf32>
    %83 = arith.negf %82 : vector<2x128xf32>
    %84 = math.exp %83 : vector<2x128xf32>
    %cst_31 = arith.constant 1.000000e+00 : f32
    %85 = vector.broadcast %cst_31 : f32 to vector<2x128xf32>
    %86 = arith.addf %85, %84 : vector<2x128xf32>
    %87 = arith.divf %85, %86 : vector<2x128xf32>
    %88 = vector.extract_strided_slice %81 {offsets = [0, 128], sizes = [2, 128], strides = [1, 1]} : vector<2x512xf32> to vector<2x128xf32>
    %89 = arith.negf %88 : vector<2x128xf32>
    %90 = math.exp %89 : vector<2x128xf32>
    %cst_32 = arith.constant 1.000000e+00 : f32
    %91 = vector.broadcast %cst_32 : f32 to vector<2x128xf32>
    %92 = arith.addf %91, %90 : vector<2x128xf32>
    %93 = arith.divf %91, %92 : vector<2x128xf32>
    %94 = vector.extract_strided_slice %81 {offsets = [0, 256], sizes = [2, 128], strides = [1, 1]} : vector<2x512xf32> to vector<2x128xf32>
    %95 = math.tanh %94 : vector<2x128xf32>
    %96 = vector.extract_strided_slice %81 {offsets = [0, 384], sizes = [2, 128], strides = [1, 1]} : vector<2x512xf32> to vector<2x128xf32>
    %97 = arith.negf %96 : vector<2x128xf32>
    %98 = math.exp %97 : vector<2x128xf32>
    %cst_33 = arith.constant 1.000000e+00 : f32
    %99 = vector.broadcast %cst_33 : f32 to vector<2x128xf32>
    %100 = arith.addf %99, %98 : vector<2x128xf32>
    %101 = arith.divf %99, %100 : vector<2x128xf32>
    %102 = arith.mulf %93, %42 : vector<2x128xf32>
    %103 = arith.mulf %87, %95 : vector<2x128xf32>
    %104 = arith.addf %102, %103 : vector<2x128xf32>
    %105 = math.tanh %104 : vector<2x128xf32>
    %106 = arith.mulf %101, %105 : vector<2x128xf32>
    %107 = tpu.concatenate %106, %72 in 1 : vector<2x128xf32>, vector<2x128xf32> -> vector<2x256xf32>
    %cst_34 = arith.constant dense<0.000000e+00> : vector<2x512xf32>
    %108 = tpu.matmul %107, %10, %cst_34 {dimension_numbers = #tpu.dot_dimension_numbers<[1], [0], [0], [1], [0, 0, 1, 1], [], []>} : vector<2x256xf32>, vector<256x512xf32>, vector<2x512xf32> -> vector<2x512xf32>
    %109 = arith.addf %108, %13 : vector<2x512xf32>
    %110 = vector.extract_strided_slice %109 {offsets = [0, 0], sizes = [2, 128], strides = [1, 1]} : vector<2x512xf32> to vector<2x128xf32>
    %111 = arith.negf %110 : vector<2x128xf32>
    %112 = math.exp %111 : vector<2x128xf32>
    %cst_35 = arith.constant 1.000000e+00 : f32
    %113 = vector.broadcast %cst_35 : f32 to vector<2x128xf32>
    %114 = arith.addf %113, %112 : vector<2x128xf32>
    %115 = arith.divf %113, %114 : vector<2x128xf32>
    %116 = vector.extract_strided_slice %109 {offsets = [0, 128], sizes = [2, 128], strides = [1, 1]} : vector<2x512xf32> to vector<2x128xf32>
    %117 = arith.negf %116 : vector<2x128xf32>
    %118 = math.exp %117 : vector<2x128xf32>
    %cst_36 = arith.constant 1.000000e+00 : f32
    %119 = vector.broadcast %cst_36 : f32 to vector<2x128xf32>
    %120 = arith.addf %119, %118 : vector<2x128xf32>
    %121 = arith.divf %119, %120 : vector<2x128xf32>
    %122 = vector.extract_strided_slice %109 {offsets = [0, 256], sizes = [2, 128], strides = [1, 1]} : vector<2x512xf32> to vector<2x128xf32>
    %123 = math.tanh %122 : vector<2x128xf32>
    %124 = vector.extract_strided_slice %109 {offsets = [0, 384], sizes = [2, 128], strides = [1, 1]} : vector<2x512xf32> to vector<2x128xf32>
    %125 = arith.negf %124 : vector<2x128xf32>
    %126 = math.exp %125 : vector<2x128xf32>
    %cst_37 = arith.constant 1.000000e+00 : f32
    %127 = vector.broadcast %cst_37 : f32 to vector<2x128xf32>
    %128 = arith.addf %127, %126 : vector<2x128xf32>
    %129 = arith.divf %127, %128 : vector<2x128xf32>
    %130 = arith.mulf %121, %70 : vector<2x128xf32>
    %131 = arith.mulf %115, %123 : vector<2x128xf32>
    %132 = arith.addf %130, %131 : vector<2x128xf32>
    %133 = math.tanh %132 : vector<2x128xf32>
    %134 = arith.mulf %129, %133 : vector<2x128xf32>
    %135 = arith.index_cast %c1_i32 : i32 to index
    %c0_38 = arith.constant 0 : index
    %c0_39 = arith.constant 0 : index
    %136 = vector.load %arg11[%135, %c0_38, %c0_39] : memref<8x2x128xf32, #tpu.memory_space<vmem>>, vector<1x2x128xf32>
    %137 = vector.shape_cast %136 : vector<1x2x128xf32> to vector<2x128xf32>
    %138 = vector.shape_cast %134 : vector<2x128xf32> to vector<1x2x128xf32>
    tpu.vector_store %arg11[%135, %c0_38, %c0_39], %138 {strides = array<i32>} : memref<8x2x128xf32, #tpu.memory_space<vmem>>, vector<1x2x128xf32>,
    %c2_i32 = arith.constant 2 : i32
    %139 = arith.index_cast %c2_i32 : i32 to index
    %c0_40 = arith.constant 0 : index
    %c0_41 = arith.constant 0 : index
    %140 = vector.load %arg10[%139, %c0_40, %c0_41] : memref<8x2x512xf32, #tpu.memory_space<vmem>>, vector<1x2x512xf32>
    %141 = vector.shape_cast %140 : vector<1x2x512xf32> to vector<2x512xf32>
    %cst_42 = arith.constant dense<0.000000e+00> : vector<2x512xf32>
    %142 = tpu.matmul %106, %9, %cst_42 {dimension_numbers = #tpu.dot_dimension_numbers<[1], [0], [0], [1], [0, 0, 1, 1], [], []>} : vector<2x128xf32>, vector<128x512xf32>, vector<2x512xf32> -> vector<2x512xf32>
    %143 = arith.addf %141, %142 : vector<2x512xf32>
    %144 = vector.extract_strided_slice %143 {offsets = [0, 0], sizes = [2, 128], strides = [1, 1]} : vector<2x512xf32> to vector<2x128xf32>
    %145 = arith.negf %144 : vector<2x128xf32>
    %146 = math.exp %145 : vector<2x128xf32>
    %cst_43 = arith.constant 1.000000e+00 : f32
    %147 = vector.broadcast %cst_43 : f32 to vector<2x128xf32>
    %148 = arith.addf %147, %146 : vector<2x128xf32>
    %149 = arith.divf %147, %148 : vector<2x128xf32>
    %150 = vector.extract_strided_slice %143 {offsets = [0, 128], sizes = [2, 128], strides = [1, 1]} : vector<2x512xf32> to vector<2x128xf32>
    %151 = arith.negf %150 : vector<2x128xf32>
    %152 = math.exp %151 : vector<2x128xf32>
    %cst_44 = arith.constant 1.000000e+00 : f32
    %153 = vector.broadcast %cst_44 : f32 to vector<2x128xf32>
    %154 = arith.addf %153, %152 : vector<2x128xf32>
    %155 = arith.divf %153, %154 : vector<2x128xf32>
    %156 = vector.extract_strided_slice %143 {offsets = [0, 256], sizes = [2, 128], strides = [1, 1]} : vector<2x512xf32> to vector<2x128xf32>
    %157 = math.tanh %156 : vector<2x128xf32>
    %158 = vector.extract_strided_slice %143 {offsets = [0, 384], sizes = [2, 128], strides = [1, 1]} : vector<2x512xf32> to vector<2x128xf32>
    %159 = arith.negf %158 : vector<2x128xf32>
    %160 = math.exp %159 : vector<2x128xf32>
    %cst_45 = arith.constant 1.000000e+00 : f32
    %161 = vector.broadcast %cst_45 : f32 to vector<2x128xf32>
    %162 = arith.addf %161, %160 : vector<2x128xf32>
    %163 = arith.divf %161, %162 : vector<2x128xf32>
    %164 = arith.mulf %155, %104 : vector<2x128xf32>
    %165 = arith.mulf %149, %157 : vector<2x128xf32>
    %166 = arith.addf %164, %165 : vector<2x128xf32>
    %167 = math.tanh %166 : vector<2x128xf32>
    %168 = arith.mulf %163, %167 : vector<2x128xf32>
    %169 = tpu.concatenate %168, %134 in 1 : vector<2x128xf32>, vector<2x128xf32> -> vector<2x256xf32>
    %cst_46 = arith.constant dense<0.000000e+00> : vector<2x512xf32>
    %170 = tpu.matmul %169, %10, %cst_46 {dimension_numbers = #tpu.dot_dimension_numbers<[1], [0], [0], [1], [0, 0, 1, 1], [], []>} : vector<2x256xf32>, vector<256x512xf32>, vector<2x512xf32> -> vector<2x512xf32>
    %171 = arith.addf %170, %13 : vector<2x512xf32>
    %172 = vector.extract_strided_slice %171 {offsets = [0, 0], sizes = [2, 128], strides = [1, 1]} : vector<2x512xf32> to vector<2x128xf32>
    %173 = arith.negf %172 : vector<2x128xf32>
    %174 = math.exp %173 : vector<2x128xf32>
    %cst_47 = arith.constant 1.000000e+00 : f32
    %175 = vector.broadcast %cst_47 : f32 to vector<2x128xf32>
    %176 = arith.addf %175, %174 : vector<2x128xf32>
    %177 = arith.divf %175, %176 : vector<2x128xf32>
    %178 = vector.extract_strided_slice %171 {offsets = [0, 128], sizes = [2, 128], strides = [1, 1]} : vector<2x512xf32> to vector<2x128xf32>
    %179 = arith.negf %178 : vector<2x128xf32>
    %180 = math.exp %179 : vector<2x128xf32>
    %cst_48 = arith.constant 1.000000e+00 : f32
    %181 = vector.broadcast %cst_48 : f32 to vector<2x128xf32>
    %182 = arith.addf %181, %180 : vector<2x128xf32>
    %183 = arith.divf %181, %182 : vector<2x128xf32>
    %184 = vector.extract_strided_slice %171 {offsets = [0, 256], sizes = [2, 128], strides = [1, 1]} : vector<2x512xf32> to vector<2x128xf32>
    %185 = math.tanh %184 : vector<2x128xf32>
    %186 = vector.extract_strided_slice %171 {offsets = [0, 384], sizes = [2, 128], strides = [1, 1]} : vector<2x512xf32> to vector<2x128xf32>
    %187 = arith.negf %186 : vector<2x128xf32>
    %188 = math.exp %187 : vector<2x128xf32>
    %cst_49 = arith.constant 1.000000e+00 : f32
    %189 = vector.broadcast %cst_49 : f32 to vector<2x128xf32>
    %190 = arith.addf %189, %188 : vector<2x128xf32>
    %191 = arith.divf %189, %190 : vector<2x128xf32>
    %192 = arith.mulf %183, %132 : vector<2x128xf32>
    %193 = arith.mulf %177, %185 : vector<2x128xf32>
    %194 = arith.addf %192, %193 : vector<2x128xf32>
    %195 = math.tanh %194 : vector<2x128xf32>
    %196 = arith.mulf %191, %195 : vector<2x128xf32>
    %197 = arith.index_cast %c2_i32 : i32 to index
    %c0_50 = arith.constant 0 : index
    %c0_51 = arith.constant 0 : index
    %198 = vector.load %arg11[%197, %c0_50, %c0_51] : memref<8x2x128xf32, #tpu.memory_space<vmem>>, vector<1x2x128xf32>
    %199 = vector.shape_cast %198 : vector<1x2x128xf32> to vector<2x128xf32>
    %200 = vector.shape_cast %196 : vector<2x128xf32> to vector<1x2x128xf32>
    tpu.vector_store %arg11[%197, %c0_50, %c0_51], %200 {strides = array<i32>} : memref<8x2x128xf32, #tpu.memory_space<vmem>>, vector<1x2x128xf32>,
    %c3_i32 = arith.constant 3 : i32
    %201 = arith.index_cast %c3_i32 : i32 to index
    %c0_52 = arith.constant 0 : index
    %c0_53 = arith.constant 0 : index
    %202 = vector.load %arg10[%201, %c0_52, %c0_53] : memref<8x2x512xf32, #tpu.memory_space<vmem>>, vector<1x2x512xf32>
    %203 = vector.shape_cast %202 : vector<1x2x512xf32> to vector<2x512xf32>
    %cst_54 = arith.constant dense<0.000000e+00> : vector<2x512xf32>
    %204 = tpu.matmul %168, %9, %cst_54 {dimension_numbers = #tpu.dot_dimension_numbers<[1], [0], [0], [1], [0, 0, 1, 1], [], []>} : vector<2x128xf32>, vector<128x512xf32>, vector<2x512xf32> -> vector<2x512xf32>
    %205 = arith.addf %203, %204 : vector<2x512xf32>
    %206 = vector.extract_strided_slice %205 {offsets = [0, 0], sizes = [2, 128], strides = [1, 1]} : vector<2x512xf32> to vector<2x128xf32>
    %207 = arith.negf %206 : vector<2x128xf32>
    %208 = math.exp %207 : vector<2x128xf32>
    %cst_55 = arith.constant 1.000000e+00 : f32
    %209 = vector.broadcast %cst_55 : f32 to vector<2x128xf32>
    %210 = arith.addf %209, %208 : vector<2x128xf32>
    %211 = arith.divf %209, %210 : vector<2x128xf32>
    %212 = vector.extract_strided_slice %205 {offsets = [0, 128], sizes = [2, 128], strides = [1, 1]} : vector<2x512xf32> to vector<2x128xf32>
    %213 = arith.negf %212 : vector<2x128xf32>
    %214 = math.exp %213 : vector<2x128xf32>
    %cst_56 = arith.constant 1.000000e+00 : f32
    %215 = vector.broadcast %cst_56 : f32 to vector<2x128xf32>
    %216 = arith.addf %215, %214 : vector<2x128xf32>
    %217 = arith.divf %215, %216 : vector<2x128xf32>
    %218 = vector.extract_strided_slice %205 {offsets = [0, 256], sizes = [2, 128], strides = [1, 1]} : vector<2x512xf32> to vector<2x128xf32>
    %219 = math.tanh %218 : vector<2x128xf32>
    %220 = vector.extract_strided_slice %205 {offsets = [0, 384], sizes = [2, 128], strides = [1, 1]} : vector<2x512xf32> to vector<2x128xf32>
    %221 = arith.negf %220 : vector<2x128xf32>
    %222 = math.exp %221 : vector<2x128xf32>
    %cst_57 = arith.constant 1.000000e+00 : f32
    %223 = vector.broadcast %cst_57 : f32 to vector<2x128xf32>
    %224 = arith.addf %223, %222 : vector<2x128xf32>
    %225 = arith.divf %223, %224 : vector<2x128xf32>
    %226 = arith.mulf %217, %166 : vector<2x128xf32>
    %227 = arith.mulf %211, %219 : vector<2x128xf32>
    %228 = arith.addf %226, %227 : vector<2x128xf32>
    %229 = math.tanh %228 : vector<2x128xf32>
    %230 = arith.mulf %225, %229 : vector<2x128xf32>
    %231 = tpu.concatenate %230, %196 in 1 : vector<2x128xf32>, vector<2x128xf32> -> vector<2x256xf32>
    %cst_58 = arith.constant dense<0.000000e+00> : vector<2x512xf32>
    %232 = tpu.matmul %231, %10, %cst_58 {dimension_numbers = #tpu.dot_dimension_numbers<[1], [0], [0], [1], [0, 0, 1, 1], [], []>} : vector<2x256xf32>, vector<256x512xf32>, vector<2x512xf32> -> vector<2x512xf32>
    %233 = arith.addf %232, %13 : vector<2x512xf32>
    %234 = vector.extract_strided_slice %233 {offsets = [0, 0], sizes = [2, 128], strides = [1, 1]} : vector<2x512xf32> to vector<2x128xf32>
    %235 = arith.negf %234 : vector<2x128xf32>
    %236 = math.exp %235 : vector<2x128xf32>
    %cst_59 = arith.constant 1.000000e+00 : f32
    %237 = vector.broadcast %cst_59 : f32 to vector<2x128xf32>
    %238 = arith.addf %237, %236 : vector<2x128xf32>
    %239 = arith.divf %237, %238 : vector<2x128xf32>
    %240 = vector.extract_strided_slice %233 {offsets = [0, 128], sizes = [2, 128], strides = [1, 1]} : vector<2x512xf32> to vector<2x128xf32>
    %241 = arith.negf %240 : vector<2x128xf32>
    %242 = math.exp %241 : vector<2x128xf32>
    %cst_60 = arith.constant 1.000000e+00 : f32
    %243 = vector.broadcast %cst_60 : f32 to vector<2x128xf32>
    %244 = arith.addf %243, %242 : vector<2x128xf32>
    %245 = arith.divf %243, %244 : vector<2x128xf32>
    %246 = vector.extract_strided_slice %233 {offsets = [0, 256], sizes = [2, 128], strides = [1, 1]} : vector<2x512xf32> to vector<2x128xf32>
    %247 = math.tanh %246 : vector<2x128xf32>
    %248 = vector.extract_strided_slice %233 {offsets = [0, 384], sizes = [2, 128], strides = [1, 1]} : vector<2x512xf32> to vector<2x128xf32>
    %249 = arith.negf %248 : vector<2x128xf32>
    %250 = math.exp %249 : vector<2x128xf32>
    %cst_61 = arith.constant 1.000000e+00 : f32
    %251 = vector.broadcast %cst_61 : f32 to vector<2x128xf32>
    %252 = arith.addf %251, %250 : vector<2x128xf32>
    %253 = arith.divf %251, %252 : vector<2x128xf32>
    %254 = arith.mulf %245, %194 : vector<2x128xf32>
    %255 = arith.mulf %239, %247 : vector<2x128xf32>
    %256 = arith.addf %254, %255 : vector<2x128xf32>
    %257 = math.tanh %256 : vector<2x128xf32>
    %258 = arith.mulf %253, %257 : vector<2x128xf32>
    %259 = arith.index_cast %c3_i32 : i32 to index
    %c0_62 = arith.constant 0 : index
    %c0_63 = arith.constant 0 : index
    %260 = vector.load %arg11[%259, %c0_62, %c0_63] : memref<8x2x128xf32, #tpu.memory_space<vmem>>, vector<1x2x128xf32>
    %261 = vector.shape_cast %260 : vector<1x2x128xf32> to vector<2x128xf32>
    %262 = vector.shape_cast %258 : vector<2x128xf32> to vector<1x2x128xf32>
    tpu.vector_store %arg11[%259, %c0_62, %c0_63], %262 {strides = array<i32>} : memref<8x2x128xf32, #tpu.memory_space<vmem>>, vector<1x2x128xf32>,
    %c4_i32 = arith.constant 4 : i32
    %263 = arith.index_cast %c4_i32 : i32 to index
    %c0_64 = arith.constant 0 : index
    %c0_65 = arith.constant 0 : index
    %264 = vector.load %arg10[%263, %c0_64, %c0_65] : memref<8x2x512xf32, #tpu.memory_space<vmem>>, vector<1x2x512xf32>
    %265 = vector.shape_cast %264 : vector<1x2x512xf32> to vector<2x512xf32>
    %cst_66 = arith.constant dense<0.000000e+00> : vector<2x512xf32>
    %266 = tpu.matmul %230, %9, %cst_66 {dimension_numbers = #tpu.dot_dimension_numbers<[1], [0], [0], [1], [0, 0, 1, 1], [], []>} : vector<2x128xf32>, vector<128x512xf32>, vector<2x512xf32> -> vector<2x512xf32>
    %267 = arith.addf %265, %266 : vector<2x512xf32>
    %268 = vector.extract_strided_slice %267 {offsets = [0, 0], sizes = [2, 128], strides = [1, 1]} : vector<2x512xf32> to vector<2x128xf32>
    %269 = arith.negf %268 : vector<2x128xf32>
    %270 = math.exp %269 : vector<2x128xf32>
    %cst_67 = arith.constant 1.000000e+00 : f32
    %271 = vector.broadcast %cst_67 : f32 to vector<2x128xf32>
    %272 = arith.addf %271, %270 : vector<2x128xf32>
    %273 = arith.divf %271, %272 : vector<2x128xf32>
    %274 = vector.extract_strided_slice %267 {offsets = [0, 128], sizes = [2, 128], strides = [1, 1]} : vector<2x512xf32> to vector<2x128xf32>
    %275 = arith.negf %274 : vector<2x128xf32>
    %276 = math.exp %275 : vector<2x128xf32>
    %cst_68 = arith.constant 1.000000e+00 : f32
    %277 = vector.broadcast %cst_68 : f32 to vector<2x128xf32>
    %278 = arith.addf %277, %276 : vector<2x128xf32>
    %279 = arith.divf %277, %278 : vector<2x128xf32>
    %280 = vector.extract_strided_slice %267 {offsets = [0, 256], sizes = [2, 128], strides = [1, 1]} : vector<2x512xf32> to vector<2x128xf32>
    %281 = math.tanh %280 : vector<2x128xf32>
    %282 = vector.extract_strided_slice %267 {offsets = [0, 384], sizes = [2, 128], strides = [1, 1]} : vector<2x512xf32> to vector<2x128xf32>
    %283 = arith.negf %282 : vector<2x128xf32>
    %284 = math.exp %283 : vector<2x128xf32>
    %cst_69 = arith.constant 1.000000e+00 : f32
    %285 = vector.broadcast %cst_69 : f32 to vector<2x128xf32>
    %286 = arith.addf %285, %284 : vector<2x128xf32>
    %287 = arith.divf %285, %286 : vector<2x128xf32>
    %288 = arith.mulf %279, %228 : vector<2x128xf32>
    %289 = arith.mulf %273, %281 : vector<2x128xf32>
    %290 = arith.addf %288, %289 : vector<2x128xf32>
    %291 = math.tanh %290 : vector<2x128xf32>
    %292 = arith.mulf %287, %291 : vector<2x128xf32>
    %293 = tpu.concatenate %292, %258 in 1 : vector<2x128xf32>, vector<2x128xf32> -> vector<2x256xf32>
    %cst_70 = arith.constant dense<0.000000e+00> : vector<2x512xf32>
    %294 = tpu.matmul %293, %10, %cst_70 {dimension_numbers = #tpu.dot_dimension_numbers<[1], [0], [0], [1], [0, 0, 1, 1], [], []>} : vector<2x256xf32>, vector<256x512xf32>, vector<2x512xf32> -> vector<2x512xf32>
    %295 = arith.addf %294, %13 : vector<2x512xf32>
    %296 = vector.extract_strided_slice %295 {offsets = [0, 0], sizes = [2, 128], strides = [1, 1]} : vector<2x512xf32> to vector<2x128xf32>
    %297 = arith.negf %296 : vector<2x128xf32>
    %298 = math.exp %297 : vector<2x128xf32>
    %cst_71 = arith.constant 1.000000e+00 : f32
    %299 = vector.broadcast %cst_71 : f32 to vector<2x128xf32>
    %300 = arith.addf %299, %298 : vector<2x128xf32>
    %301 = arith.divf %299, %300 : vector<2x128xf32>
    %302 = vector.extract_strided_slice %295 {offsets = [0, 128], sizes = [2, 128], strides = [1, 1]} : vector<2x512xf32> to vector<2x128xf32>
    %303 = arith.negf %302 : vector<2x128xf32>
    %304 = math.exp %303 : vector<2x128xf32>
    %cst_72 = arith.constant 1.000000e+00 : f32
    %305 = vector.broadcast %cst_72 : f32 to vector<2x128xf32>
    %306 = arith.addf %305, %304 : vector<2x128xf32>
    %307 = arith.divf %305, %306 : vector<2x128xf32>
    %308 = vector.extract_strided_slice %295 {offsets = [0, 256], sizes = [2, 128], strides = [1, 1]} : vector<2x512xf32> to vector<2x128xf32>
    %309 = math.tanh %308 : vector<2x128xf32>
    %310 = vector.extract_strided_slice %295 {offsets = [0, 384], sizes = [2, 128], strides = [1, 1]} : vector<2x512xf32> to vector<2x128xf32>
    %311 = arith.negf %310 : vector<2x128xf32>
    %312 = math.exp %311 : vector<2x128xf32>
    %cst_73 = arith.constant 1.000000e+00 : f32
    %313 = vector.broadcast %cst_73 : f32 to vector<2x128xf32>
    %314 = arith.addf %313, %312 : vector<2x128xf32>
    %315 = arith.divf %313, %314 : vector<2x128xf32>
    %316 = arith.mulf %307, %256 : vector<2x128xf32>
    %317 = arith.mulf %301, %309 : vector<2x128xf32>
    %318 = arith.addf %316, %317 : vector<2x128xf32>
    %319 = math.tanh %318 : vector<2x128xf32>
    %320 = arith.mulf %315, %319 : vector<2x128xf32>
    %321 = arith.index_cast %c4_i32 : i32 to index
    %c0_74 = arith.constant 0 : index
    %c0_75 = arith.constant 0 : index
    %322 = vector.load %arg11[%321, %c0_74, %c0_75] : memref<8x2x128xf32, #tpu.memory_space<vmem>>, vector<1x2x128xf32>
    %323 = vector.shape_cast %322 : vector<1x2x128xf32> to vector<2x128xf32>
    %324 = vector.shape_cast %320 : vector<2x128xf32> to vector<1x2x128xf32>
    tpu.vector_store %arg11[%321, %c0_74, %c0_75], %324 {strides = array<i32>} : memref<8x2x128xf32, #tpu.memory_space<vmem>>, vector<1x2x128xf32>,
    %c5_i32 = arith.constant 5 : i32
    %325 = arith.index_cast %c5_i32 : i32 to index
    %c0_76 = arith.constant 0 : index
    %c0_77 = arith.constant 0 : index
    %326 = vector.load %arg10[%325, %c0_76, %c0_77] : memref<8x2x512xf32, #tpu.memory_space<vmem>>, vector<1x2x512xf32>
    %327 = vector.shape_cast %326 : vector<1x2x512xf32> to vector<2x512xf32>
    %cst_78 = arith.constant dense<0.000000e+00> : vector<2x512xf32>
    %328 = tpu.matmul %292, %9, %cst_78 {dimension_numbers = #tpu.dot_dimension_numbers<[1], [0], [0], [1], [0, 0, 1, 1], [], []>} : vector<2x128xf32>, vector<128x512xf32>, vector<2x512xf32> -> vector<2x512xf32>
    %329 = arith.addf %327, %328 : vector<2x512xf32>
    %330 = vector.extract_strided_slice %329 {offsets = [0, 0], sizes = [2, 128], strides = [1, 1]} : vector<2x512xf32> to vector<2x128xf32>
    %331 = arith.negf %330 : vector<2x128xf32>
    %332 = math.exp %331 : vector<2x128xf32>
    %cst_79 = arith.constant 1.000000e+00 : f32
    %333 = vector.broadcast %cst_79 : f32 to vector<2x128xf32>
    %334 = arith.addf %333, %332 : vector<2x128xf32>
    %335 = arith.divf %333, %334 : vector<2x128xf32>
    %336 = vector.extract_strided_slice %329 {offsets = [0, 128], sizes = [2, 128], strides = [1, 1]} : vector<2x512xf32> to vector<2x128xf32>
    %337 = arith.negf %336 : vector<2x128xf32>
    %338 = math.exp %337 : vector<2x128xf32>
    %cst_80 = arith.constant 1.000000e+00 : f32
    %339 = vector.broadcast %cst_80 : f32 to vector<2x128xf32>
    %340 = arith.addf %339, %338 : vector<2x128xf32>
    %341 = arith.divf %339, %340 : vector<2x128xf32>
    %342 = vector.extract_strided_slice %329 {offsets = [0, 256], sizes = [2, 128], strides = [1, 1]} : vector<2x512xf32> to vector<2x128xf32>
    %343 = math.tanh %342 : vector<2x128xf32>
    %344 = vector.extract_strided_slice %329 {offsets = [0, 384], sizes = [2, 128], strides = [1, 1]} : vector<2x512xf32> to vector<2x128xf32>
    %345 = arith.negf %344 : vector<2x128xf32>
    %346 = math.exp %345 : vector<2x128xf32>
    %cst_81 = arith.constant 1.000000e+00 : f32
    %347 = vector.broadcast %cst_81 : f32 to vector<2x128xf32>
    %348 = arith.addf %347, %346 : vector<2x128xf32>
    %349 = arith.divf %347, %348 : vector<2x128xf32>
    %350 = arith.mulf %341, %290 : vector<2x128xf32>
    %351 = arith.mulf %335, %343 : vector<2x128xf32>
    %352 = arith.addf %350, %351 : vector<2x128xf32>
    %353 = math.tanh %352 : vector<2x128xf32>
    %354 = arith.mulf %349, %353 : vector<2x128xf32>
    %355 = tpu.concatenate %354, %320 in 1 : vector<2x128xf32>, vector<2x128xf32> -> vector<2x256xf32>
    %cst_82 = arith.constant dense<0.000000e+00> : vector<2x512xf32>
    %356 = tpu.matmul %355, %10, %cst_82 {dimension_numbers = #tpu.dot_dimension_numbers<[1], [0], [0], [1], [0, 0, 1, 1], [], []>} : vector<2x256xf32>, vector<256x512xf32>, vector<2x512xf32> -> vector<2x512xf32>
    %357 = arith.addf %356, %13 : vector<2x512xf32>
    %358 = vector.extract_strided_slice %357 {offsets = [0, 0], sizes = [2, 128], strides = [1, 1]} : vector<2x512xf32> to vector<2x128xf32>
    %359 = arith.negf %358 : vector<2x128xf32>
    %360 = math.exp %359 : vector<2x128xf32>
    %cst_83 = arith.constant 1.000000e+00 : f32
    %361 = vector.broadcast %cst_83 : f32 to vector<2x128xf32>
    %362 = arith.addf %361, %360 : vector<2x128xf32>
    %363 = arith.divf %361, %362 : vector<2x128xf32>
    %364 = vector.extract_strided_slice %357 {offsets = [0, 128], sizes = [2, 128], strides = [1, 1]} : vector<2x512xf32> to vector<2x128xf32>
    %365 = arith.negf %364 : vector<2x128xf32>
    %366 = math.exp %365 : vector<2x128xf32>
    %cst_84 = arith.constant 1.000000e+00 : f32
    %367 = vector.broadcast %cst_84 : f32 to vector<2x128xf32>
    %368 = arith.addf %367, %366 : vector<2x128xf32>
    %369 = arith.divf %367, %368 : vector<2x128xf32>
    %370 = vector.extract_strided_slice %357 {offsets = [0, 256], sizes = [2, 128], strides = [1, 1]} : vector<2x512xf32> to vector<2x128xf32>
    %371 = math.tanh %370 : vector<2x128xf32>
    %372 = vector.extract_strided_slice %357 {offsets = [0, 384], sizes = [2, 128], strides = [1, 1]} : vector<2x512xf32> to vector<2x128xf32>
    %373 = arith.negf %372 : vector<2x128xf32>
    %374 = math.exp %373 : vector<2x128xf32>
    %cst_85 = arith.constant 1.000000e+00 : f32
    %375 = vector.broadcast %cst_85 : f32 to vector<2x128xf32>
    %376 = arith.addf %375, %374 : vector<2x128xf32>
    %377 = arith.divf %375, %376 : vector<2x128xf32>
    %378 = arith.mulf %369, %318 : vector<2x128xf32>
    %379 = arith.mulf %363, %371 : vector<2x128xf32>
    %380 = arith.addf %378, %379 : vector<2x128xf32>
    %381 = math.tanh %380 : vector<2x128xf32>
    %382 = arith.mulf %377, %381 : vector<2x128xf32>
    %383 = arith.index_cast %c5_i32 : i32 to index
    %c0_86 = arith.constant 0 : index
    %c0_87 = arith.constant 0 : index
    %384 = vector.load %arg11[%383, %c0_86, %c0_87] : memref<8x2x128xf32, #tpu.memory_space<vmem>>, vector<1x2x128xf32>
    %385 = vector.shape_cast %384 : vector<1x2x128xf32> to vector<2x128xf32>
    %386 = vector.shape_cast %382 : vector<2x128xf32> to vector<1x2x128xf32>
    tpu.vector_store %arg11[%383, %c0_86, %c0_87], %386 {strides = array<i32>} : memref<8x2x128xf32, #tpu.memory_space<vmem>>, vector<1x2x128xf32>,
    %c6_i32 = arith.constant 6 : i32
    %387 = arith.index_cast %c6_i32 : i32 to index
    %c0_88 = arith.constant 0 : index
    %c0_89 = arith.constant 0 : index
    %388 = vector.load %arg10[%387, %c0_88, %c0_89] : memref<8x2x512xf32, #tpu.memory_space<vmem>>, vector<1x2x512xf32>
    %389 = vector.shape_cast %388 : vector<1x2x512xf32> to vector<2x512xf32>
    %cst_90 = arith.constant dense<0.000000e+00> : vector<2x512xf32>
    %390 = tpu.matmul %354, %9, %cst_90 {dimension_numbers = #tpu.dot_dimension_numbers<[1], [0], [0], [1], [0, 0, 1, 1], [], []>} : vector<2x128xf32>, vector<128x512xf32>, vector<2x512xf32> -> vector<2x512xf32>
    %391 = arith.addf %389, %390 : vector<2x512xf32>
    %392 = vector.extract_strided_slice %391 {offsets = [0, 0], sizes = [2, 128], strides = [1, 1]} : vector<2x512xf32> to vector<2x128xf32>
    %393 = arith.negf %392 : vector<2x128xf32>
    %394 = math.exp %393 : vector<2x128xf32>
    %cst_91 = arith.constant 1.000000e+00 : f32
    %395 = vector.broadcast %cst_91 : f32 to vector<2x128xf32>
    %396 = arith.addf %395, %394 : vector<2x128xf32>
    %397 = arith.divf %395, %396 : vector<2x128xf32>
    %398 = vector.extract_strided_slice %391 {offsets = [0, 128], sizes = [2, 128], strides = [1, 1]} : vector<2x512xf32> to vector<2x128xf32>
    %399 = arith.negf %398 : vector<2x128xf32>
    %400 = math.exp %399 : vector<2x128xf32>
    %cst_92 = arith.constant 1.000000e+00 : f32
    %401 = vector.broadcast %cst_92 : f32 to vector<2x128xf32>
    %402 = arith.addf %401, %400 : vector<2x128xf32>
    %403 = arith.divf %401, %402 : vector<2x128xf32>
    %404 = vector.extract_strided_slice %391 {offsets = [0, 256], sizes = [2, 128], strides = [1, 1]} : vector<2x512xf32> to vector<2x128xf32>
    %405 = math.tanh %404 : vector<2x128xf32>
    %406 = vector.extract_strided_slice %391 {offsets = [0, 384], sizes = [2, 128], strides = [1, 1]} : vector<2x512xf32> to vector<2x128xf32>
    %407 = arith.negf %406 : vector<2x128xf32>
    %408 = math.exp %407 : vector<2x128xf32>
    %cst_93 = arith.constant 1.000000e+00 : f32
    %409 = vector.broadcast %cst_93 : f32 to vector<2x128xf32>
    %410 = arith.addf %409, %408 : vector<2x128xf32>
    %411 = arith.divf %409, %410 : vector<2x128xf32>
    %412 = arith.mulf %403, %352 : vector<2x128xf32>
    %413 = arith.mulf %397, %405 : vector<2x128xf32>
    %414 = arith.addf %412, %413 : vector<2x128xf32>
    %415 = math.tanh %414 : vector<2x128xf32>
    %416 = arith.mulf %411, %415 : vector<2x128xf32>
    %417 = tpu.concatenate %416, %382 in 1 : vector<2x128xf32>, vector<2x128xf32> -> vector<2x256xf32>
    %cst_94 = arith.constant dense<0.000000e+00> : vector<2x512xf32>
    %418 = tpu.matmul %417, %10, %cst_94 {dimension_numbers = #tpu.dot_dimension_numbers<[1], [0], [0], [1], [0, 0, 1, 1], [], []>} : vector<2x256xf32>, vector<256x512xf32>, vector<2x512xf32> -> vector<2x512xf32>
    %419 = arith.addf %418, %13 : vector<2x512xf32>
    %420 = vector.extract_strided_slice %419 {offsets = [0, 0], sizes = [2, 128], strides = [1, 1]} : vector<2x512xf32> to vector<2x128xf32>
    %421 = arith.negf %420 : vector<2x128xf32>
    %422 = math.exp %421 : vector<2x128xf32>
    %cst_95 = arith.constant 1.000000e+00 : f32
    %423 = vector.broadcast %cst_95 : f32 to vector<2x128xf32>
    %424 = arith.addf %423, %422 : vector<2x128xf32>
    %425 = arith.divf %423, %424 : vector<2x128xf32>
    %426 = vector.extract_strided_slice %419 {offsets = [0, 128], sizes = [2, 128], strides = [1, 1]} : vector<2x512xf32> to vector<2x128xf32>
    %427 = arith.negf %426 : vector<2x128xf32>
    %428 = math.exp %427 : vector<2x128xf32>
    %cst_96 = arith.constant 1.000000e+00 : f32
    %429 = vector.broadcast %cst_96 : f32 to vector<2x128xf32>
    %430 = arith.addf %429, %428 : vector<2x128xf32>
    %431 = arith.divf %429, %430 : vector<2x128xf32>
    %432 = vector.extract_strided_slice %419 {offsets = [0, 256], sizes = [2, 128], strides = [1, 1]} : vector<2x512xf32> to vector<2x128xf32>
    %433 = math.tanh %432 : vector<2x128xf32>
    %434 = vector.extract_strided_slice %419 {offsets = [0, 384], sizes = [2, 128], strides = [1, 1]} : vector<2x512xf32> to vector<2x128xf32>
    %435 = arith.negf %434 : vector<2x128xf32>
    %436 = math.exp %435 : vector<2x128xf32>
    %cst_97 = arith.constant 1.000000e+00 : f32
    %437 = vector.broadcast %cst_97 : f32 to vector<2x128xf32>
    %438 = arith.addf %437, %436 : vector<2x128xf32>
    %439 = arith.divf %437, %438 : vector<2x128xf32>
    %440 = arith.mulf %431, %380 : vector<2x128xf32>
    %441 = arith.mulf %425, %433 : vector<2x128xf32>
    %442 = arith.addf %440, %441 : vector<2x128xf32>
    %443 = math.tanh %442 : vector<2x128xf32>
    %444 = arith.mulf %439, %443 : vector<2x128xf32>
    %445 = arith.index_cast %c6_i32 : i32 to index
    %c0_98 = arith.constant 0 : index
    %c0_99 = arith.constant 0 : index
    %446 = vector.load %arg11[%445, %c0_98, %c0_99] : memref<8x2x128xf32, #tpu.memory_space<vmem>>, vector<1x2x128xf32>
    %447 = vector.shape_cast %446 : vector<1x2x128xf32> to vector<2x128xf32>
    %448 = vector.shape_cast %444 : vector<2x128xf32> to vector<1x2x128xf32>
    tpu.vector_store %arg11[%445, %c0_98, %c0_99], %448 {strides = array<i32>} : memref<8x2x128xf32, #tpu.memory_space<vmem>>, vector<1x2x128xf32>,
    %c7_i32 = arith.constant 7 : i32
    %449 = arith.index_cast %c7_i32 : i32 to index
    %c0_100 = arith.constant 0 : index
    %c0_101 = arith.constant 0 : index
    %450 = vector.load %arg10[%449, %c0_100, %c0_101] : memref<8x2x512xf32, #tpu.memory_space<vmem>>, vector<1x2x512xf32>
    %451 = vector.shape_cast %450 : vector<1x2x512xf32> to vector<2x512xf32>
    %cst_102 = arith.constant dense<0.000000e+00> : vector<2x512xf32>
    %452 = tpu.matmul %416, %9, %cst_102 {dimension_numbers = #tpu.dot_dimension_numbers<[1], [0], [0], [1], [0, 0, 1, 1], [], []>} : vector<2x128xf32>, vector<128x512xf32>, vector<2x512xf32> -> vector<2x512xf32>
    %453 = arith.addf %451, %452 : vector<2x512xf32>
    %454 = vector.extract_strided_slice %453 {offsets = [0, 0], sizes = [2, 128], strides = [1, 1]} : vector<2x512xf32> to vector<2x128xf32>
    %455 = arith.negf %454 : vector<2x128xf32>
    %456 = math.exp %455 : vector<2x128xf32>
    %cst_103 = arith.constant 1.000000e+00 : f32
    %457 = vector.broadcast %cst_103 : f32 to vector<2x128xf32>
    %458 = arith.addf %457, %456 : vector<2x128xf32>
    %459 = arith.divf %457, %458 : vector<2x128xf32>
    %460 = vector.extract_strided_slice %453 {offsets = [0, 128], sizes = [2, 128], strides = [1, 1]} : vector<2x512xf32> to vector<2x128xf32>
    %461 = arith.negf %460 : vector<2x128xf32>
    %462 = math.exp %461 : vector<2x128xf32>
    %cst_104 = arith.constant 1.000000e+00 : f32
    %463 = vector.broadcast %cst_104 : f32 to vector<2x128xf32>
    %464 = arith.addf %463, %462 : vector<2x128xf32>
    %465 = arith.divf %463, %464 : vector<2x128xf32>
    %466 = vector.extract_strided_slice %453 {offsets = [0, 256], sizes = [2, 128], strides = [1, 1]} : vector<2x512xf32> to vector<2x128xf32>
    %467 = math.tanh %466 : vector<2x128xf32>
    %468 = vector.extract_strided_slice %453 {offsets = [0, 384], sizes = [2, 128], strides = [1, 1]} : vector<2x512xf32> to vector<2x128xf32>
    %469 = arith.negf %468 : vector<2x128xf32>
    %470 = math.exp %469 : vector<2x128xf32>
    %cst_105 = arith.constant 1.000000e+00 : f32
    %471 = vector.broadcast %cst_105 : f32 to vector<2x128xf32>
    %472 = arith.addf %471, %470 : vector<2x128xf32>
    %473 = arith.divf %471, %472 : vector<2x128xf32>
    %474 = arith.mulf %465, %414 : vector<2x128xf32>
    %475 = arith.mulf %459, %467 : vector<2x128xf32>
    %476 = arith.addf %474, %475 : vector<2x128xf32>
    %477 = math.tanh %476 : vector<2x128xf32>
    %478 = arith.mulf %473, %477 : vector<2x128xf32>
    %479 = tpu.concatenate %478, %444 in 1 : vector<2x128xf32>, vector<2x128xf32> -> vector<2x256xf32>
    %cst_106 = arith.constant dense<0.000000e+00> : vector<2x512xf32>
    %480 = tpu.matmul %479, %10, %cst_106 {dimension_numbers = #tpu.dot_dimension_numbers<[1], [0], [0], [1], [0, 0, 1, 1], [], []>} : vector<2x256xf32>, vector<256x512xf32>, vector<2x512xf32> -> vector<2x512xf32>
    %481 = arith.addf %480, %13 : vector<2x512xf32>
    %482 = vector.extract_strided_slice %481 {offsets = [0, 0], sizes = [2, 128], strides = [1, 1]} : vector<2x512xf32> to vector<2x128xf32>
    %483 = arith.negf %482 : vector<2x128xf32>
    %484 = math.exp %483 : vector<2x128xf32>
    %cst_107 = arith.constant 1.000000e+00 : f32
    %485 = vector.broadcast %cst_107 : f32 to vector<2x128xf32>
    %486 = arith.addf %485, %484 : vector<2x128xf32>
    %487 = arith.divf %485, %486 : vector<2x128xf32>
    %488 = vector.extract_strided_slice %481 {offsets = [0, 128], sizes = [2, 128], strides = [1, 1]} : vector<2x512xf32> to vector<2x128xf32>
    %489 = arith.negf %488 : vector<2x128xf32>
    %490 = math.exp %489 : vector<2x128xf32>
    %cst_108 = arith.constant 1.000000e+00 : f32
    %491 = vector.broadcast %cst_108 : f32 to vector<2x128xf32>
    %492 = arith.addf %491, %490 : vector<2x128xf32>
    %493 = arith.divf %491, %492 : vector<2x128xf32>
    %494 = vector.extract_strided_slice %481 {offsets = [0, 256], sizes = [2, 128], strides = [1, 1]} : vector<2x512xf32> to vector<2x128xf32>
    %495 = math.tanh %494 : vector<2x128xf32>
    %496 = vector.extract_strided_slice %481 {offsets = [0, 384], sizes = [2, 128], strides = [1, 1]} : vector<2x512xf32> to vector<2x128xf32>
    %497 = arith.negf %496 : vector<2x128xf32>
    %498 = math.exp %497 : vector<2x128xf32>
    %cst_109 = arith.constant 1.000000e+00 : f32
    %499 = vector.broadcast %cst_109 : f32 to vector<2x128xf32>
    %500 = arith.addf %499, %498 : vector<2x128xf32>
    %501 = arith.divf %499, %500 : vector<2x128xf32>
    %502 = arith.mulf %493, %442 : vector<2x128xf32>
    %503 = arith.mulf %487, %495 : vector<2x128xf32>
    %504 = arith.addf %502, %503 : vector<2x128xf32>
    %505 = math.tanh %504 : vector<2x128xf32>
    %506 = arith.mulf %501, %505 : vector<2x128xf32>
    %507 = arith.index_cast %c7_i32 : i32 to index
    %c0_110 = arith.constant 0 : index
    %c0_111 = arith.constant 0 : index
    %508 = vector.load %arg11[%507, %c0_110, %c0_111] : memref<8x2x128xf32, #tpu.memory_space<vmem>>, vector<1x2x128xf32>
    %509 = vector.shape_cast %508 : vector<1x2x128xf32> to vector<2x128xf32>
    %510 = vector.shape_cast %506 : vector<2x128xf32> to vector<1x2x128xf32>
    tpu.vector_store %arg11[%507, %c0_110, %c0_111], %510 {strides = array<i32>} : memref<8x2x128xf32, #tpu.memory_space<vmem>>, vector<1x2x128xf32>,
    %c8_i32 = arith.constant 8 : i32
    %c0_112 = arith.constant 0 : index
    %c0_113 = arith.constant 0 : index
    %c0_114 = arith.constant 0 : index
    %511 = vector.load %arg11[%c0_112, %c0_113, %c0_114] : memref<8x2x128xf32, #tpu.memory_space<vmem>>, vector<8x2x128xf32>
    %512 = vector.shape_cast %511 : vector<8x2x128xf32> to vector<16x128xf32>
    %c0_115 = arith.constant 0 : index
    %c0_116 = arith.constant 0 : index
    %513 = vector.load %arg7[%c0_115, %c0_116] : memref<128x9xf32, #tpu.memory_space<vmem>>, vector<128x9xf32>
    %cst_117 = arith.constant dense<0.000000e+00> : vector<16x9xf32>
    %514 = tpu.matmul %512, %513, %cst_117 {dimension_numbers = #tpu.dot_dimension_numbers<[1], [0], [0], [1], [0, 0, 1, 1], [], []>} : vector<16x128xf32>, vector<128x9xf32>, vector<16x9xf32> -> vector<16x9xf32>
    %c0_118 = arith.constant 0 : index
    %c0_119 = arith.constant 0 : index
    %515 = vector.load %arg8[%c0_118, %c0_119] : memref<1x9xf32, #tpu.memory_space<vmem>>, vector<1x9xf32>
    %516 = vector.broadcast %515 : vector<1x9xf32> to vector<16x9xf32>
    %517 = arith.addf %514, %516 : vector<16x9xf32>
    %518 = vector.shape_cast %517 : vector<16x9xf32> to vector<8x2x9xf32>
    %c0_120 = arith.constant 0 : index
    %c0_121 = arith.constant 0 : index
    %c0_122 = arith.constant 0 : index
    %519 = vector.load %arg9[%c0_120, %c0_121, %c0_122] : memref<8x2x9xf32, #tpu.memory_space<vmem>>, vector<8x2x9xf32>
    tpu.vector_store %arg9[%c0_120, %c0_121, %c0_122], %518 {strides = array<i32>} : memref<8x2x9xf32, #tpu.memory_space<vmem>>, vector<8x2x9xf32>,
    return
  }
  func.func @transform_0(%arg0: i32) -> (i32, i32, i32) {
    %c0_i32 = arith.constant 0 : i32
    %c0_i32_0 = arith.constant 0 : i32
    %c0_i32_1 = arith.constant 0 : i32
    %c0_i32_2 = arith.constant 0 : i32
    return %c0_i32, %c0_i32_0, %c0_i32_1 : i32, i32, i32
  }
  func.func @transform_1(%arg0: i32) -> (i32, i32) {
    %c0_i32 = arith.constant 0 : i32
    %c0_i32_0 = arith.constant 0 : i32
    %c0_i32_1 = arith.constant 0 : i32
    return %c0_i32, %c0_i32_0 : i32, i32
  }
  func.func @transform_2(%arg0: i32) -> (i32, i32) {
    %c0_i32 = arith.constant 0 : i32
    %c0_i32_0 = arith.constant 0 : i32
    %c0_i32_1 = arith.constant 0 : i32
    return %c0_i32, %c0_i32_0 : i32, i32
  }
  func.func @transform_3(%arg0: i32) -> (i32, i32) {
    %c0_i32 = arith.constant 0 : i32
    %c0_i32_0 = arith.constant 0 : i32
    %c0_i32_1 = arith.constant 0 : i32
    return %c0_i32, %c0_i32_0 : i32, i32
  }
  func.func @transform_4(%arg0: i32) -> (i32, i32) {
    %c0_i32 = arith.constant 0 : i32
    %c0_i32_0 = arith.constant 0 : i32
    %c0_i32_1 = arith.constant 0 : i32
    return %c0_i32, %c0_i32_0 : i32, i32
  }
  func.func @transform_5(%arg0: i32) -> (i32, i32) {
    %c0_i32 = arith.constant 0 : i32
    %c0_i32_0 = arith.constant 0 : i32
    %c0_i32_1 = arith.constant 0 : i32
    return %c0_i32, %c0_i32_0 : i32, i32
  }
  func.func @transform_6(%arg0: i32) -> (i32, i32) {
    %c0_i32 = arith.constant 0 : i32
    %c0_i32_0 = arith.constant 0 : i32
    %c0_i32_1 = arith.constant 0 : i32
    return %c0_i32, %c0_i32_0 : i32, i32
  }
  func.func @transform_7(%arg0: i32) -> (i32, i32) {
    %c0_i32 = arith.constant 0 : i32
    %c0_i32_0 = arith.constant 0 : i32
    %c0_i32_1 = arith.constant 0 : i32
    return %c0_i32, %c0_i32_0 : i32, i32
  }
  func.func @transform_8(%arg0: i32) -> (i32, i32, i32) {
    %c0_i32 = arith.constant 0 : i32
    %c0_i32_0 = arith.constant 0 : i32
    %c0_i32_1 = arith.constant 0 : i32
    %c0_i32_2 = arith.constant 0 : i32
    return %c0_i32, %c0_i32_0, %c0_i32_1 : i32, i32, i32
  }
}

</mosaic_0001>

<llo_original>
// kernel: lstm_model_forward.1
$region0: #{lstm_model_forward.1}
  #allocation0 [shape = 'u32[]', space=smem, size = 0x4, offset = 0x4, fixed_abs, tag = 'smem constant byte address 0x4 - core index']
  #allocation1 [shape = 'u32[144,128]{1,0:T(1,128)}', space=vmem, size = 0x12000, scoped, tag = 'internal scratch']
  #allocation2 [shape = 'f32[8,2,512]{2,1,0:T(2,128)}', space=vmem, size = 0x8000, scoped, tag = 'scratch operand']
  #allocation3 [shape = 'f32[8,2,128]{2,1,0:T(2,128)}', space=vmem, size = 0x2000, scoped, tag = 'scratch operand']
  %s0 = inlined_call_operand.vmem [shape: f32[8,2,66], index: 0, kind: input, shape index: {}]
  %s1 = inlined_call_operand.vmem [shape: f32[66,512], index: 1, kind: input, shape index: {}]
  %s2 = inlined_call_operand.vmem [shape: f32[128,512], index: 2, kind: input, shape index: {}]
  %s3 = inlined_call_operand.vmem [shape: f32[1,512], index: 3, kind: input, shape index: {}]
  %s4 = inlined_call_operand.vmem [shape: f32[256,512], index: 4, kind: input, shape index: {}]
  %s5 = inlined_call_operand.vmem [shape: f32[1,512], index: 5, kind: input, shape index: {}]
  %s6 = inlined_call_operand.vmem [shape: f32[128,9], index: 6, kind: input, shape index: {}]
  %s7 = inlined_call_operand.vmem [shape: f32[1,9], index: 7, kind: input, shape index: {}]
  %s8 = inlined_call_operand.vmem [shape: f32[8,2,9], index: 8, kind: output, shape index: {}]
  %s9 = sld [smem:[#allocation0]]
  $region42: #{lstm_model_forward.1} parent=0
    _
  %s11 = ssub.s32 1, %s9
  %s12 = scalar_select 0, %s11, %s9
  // Predicated region
  $region2: #{lstm_model_forward.1} parent=0 // pred_check
    _
  $region3: #{lstm_model_forward.1} parent=0 // pred_check_branch
    %14 = sbr.rel (0) target = $region5
  $region4: #{lstm_model_forward.1} parent=0 // pred_region
    _
  $region5: #{lstm_model_forward.1} parent=0 // pred_fallthru
    _
  // Predicated region
  $region6: #{lstm_model_forward.1} parent=0 // pred_check
    _
  $region7: #{lstm_model_forward.1} parent=0 // pred_check_branch
    %16 = sbr.rel (0) target = $region9
  $region8: #{lstm_model_forward.1} parent=0 // pred_region
    _
  $region9: #{lstm_model_forward.1} parent=0 // pred_fallthru
    _
  // Predicated region
  $region10: #{lstm_model_forward.1} parent=0 // pred_check
    _
  $region11: #{lstm_model_forward.1} parent=0 // pred_check_branch
    %18 = sbr.rel (0) target = $region13
  $region12: #{lstm_model_forward.1} parent=0 // pred_region
    _
  $region13: #{lstm_model_forward.1} parent=0 // pred_fallthru
    _
  // Predicated region
  $region14: #{lstm_model_forward.1} parent=0 // pred_check
    _
  $region15: #{lstm_model_forward.1} parent=0 // pred_check_branch
    %20 = sbr.rel (0) target = $region17
  $region16: #{lstm_model_forward.1} parent=0 // pred_region
    _
  $region17: #{lstm_model_forward.1} parent=0 // pred_fallthru
    _
  // Predicated region
  $region18: #{lstm_model_forward.1} parent=0 // pred_check
    _
  $region19: #{lstm_model_forward.1} parent=0 // pred_check_branch
    %22 = sbr.rel (0) target = $region21
  $region20: #{lstm_model_forward.1} parent=0 // pred_region
    _
  $region21: #{lstm_model_forward.1} parent=0 // pred_fallthru
    _
  // Predicated region
  $region22: #{lstm_model_forward.1} parent=0 // pred_check
    _
  $region23: #{lstm_model_forward.1} parent=0 // pred_check_branch
    %24 = sbr.rel (0) target = $region25
  $region24: #{lstm_model_forward.1} parent=0 // pred_region
    _
  $region25: #{lstm_model_forward.1} parent=0 // pred_fallthru
    _
  // Predicated region
  $region26: #{lstm_model_forward.1} parent=0 // pred_check
    _
  $region27: #{lstm_model_forward.1} parent=0 // pred_check_branch
    %26 = sbr.rel (0) target = $region29
  $region28: #{lstm_model_forward.1} parent=0 // pred_region
    _
  $region29: #{lstm_model_forward.1} parent=0 // pred_fallthru
    _
  // Predicated region
  $region30: #{lstm_model_forward.1} parent=0 // pred_check
    _
  $region31: #{lstm_model_forward.1} parent=0 // pred_check_branch
    %28 = sbr.rel (0) target = $region33
  $region32: #{lstm_model_forward.1} parent=0 // pred_region
    _
  $region33: #{lstm_model_forward.1} parent=0 // pred_fallthru
    _
  %v29 = vld [vmem:[%s0] sm:$0x3]
  %v30 = vld [vmem:[%s0 + $0x2] sm:$0x3]
  %v31 = vld [vmem:[%s0 + $0x4] sm:$0x3]
  %v32 = vld [vmem:[%s0 + $0x6] sm:$0x3]
  %v33 = vld [vmem:[%s0 + $0x8] sm:$0x3]
  %v34 = vld [vmem:[%s0 + $0xa] sm:$0x3]
  %v35 = vld [vmem:[%s0 + $0xc] sm:$0x3]
  %v36 = vld [vmem:[%s0 + $0xe] sm:$0x3]
  %v37 = vld [vmem:[%s1] sm:$0xff]
  %v38 = vld [vmem:[%s1 + $0x8] sm:$0xff]
  %v39 = vld [vmem:[%s1 + $0x10] sm:$0xff]
  %v40 = vld [vmem:[%s1 + $0x18] sm:$0xff]
  %v41 = vld [vmem:[%s1 + $0x20] sm:$0xff]
  %v42 = vld [vmem:[%s1 + $0x28] sm:$0xff]
  %v43 = vld [vmem:[%s1 + $0x30] sm:$0xff]
  %v44 = vld [vmem:[%s1 + $0x38] sm:$0xff]
  %v45 = vld [vmem:[%s1 + $0x40] sm:$0xff]
  %v46 = vld [vmem:[%s1 + $0x48] sm:$0xff]
  %v47 = vld [vmem:[%s1 + $0x50] sm:$0xff]
  %v48 = vld [vmem:[%s1 + $0x58] sm:$0xff]
  %v49 = vld [vmem:[%s1 + $0x60] sm:$0xff]
  %v50 = vld [vmem:[%s1 + $0x68] sm:$0xff]
  %v51 = vld [vmem:[%s1 + $0x70] sm:$0xff]
  %v52 = vld [vmem:[%s1 + $0x78] sm:$0xff]
  %v53 = vld [vmem:[%s1 + $0x80] sm:$0xff]
  %v54 = vld [vmem:[%s1 + $0x88] sm:$0xff]
  %v55 = vld [vmem:[%s1 + $0x90] sm:$0xff]
  %v56 = vld [vmem:[%s1 + $0x98] sm:$0xff]
  %v57 = vld [vmem:[%s1 + $0xa0] sm:$0xff]
  %v58 = vld [vmem:[%s1 + $0xa8] sm:$0xff]
  %v59 = vld [vmem:[%s1 + $0xb0] sm:$0xff]
  %v60 = vld [vmem:[%s1 + $0xb8] sm:$0xff]
  %v61 = vld [vmem:[%s1 + $0xc0] sm:$0xff]
  %v62 = vld [vmem:[%s1 + $0xc8] sm:$0xff]
  %v63 = vld [vmem:[%s1 + $0xd0] sm:$0xff]
  %v64 = vld [vmem:[%s1 + $0xd8] sm:$0xff]
  %v65 = vld [vmem:[%s1 + $0xe0] sm:$0xff]
  %v66 = vld [vmem:[%s1 + $0xe8] sm:$0xff]
  %v67 = vld [vmem:[%s1 + $0xf0] sm:$0xff]
  %v68 = vld [vmem:[%s1 + $0xf8] sm:$0xff]
  %v69 = vld [vmem:[%s1 + $0x100] sm:$0x3]
  %v70 = vld [vmem:[%s1 + $0x108] sm:$0x3]
  %v71 = vld [vmem:[%s1 + $0x110] sm:$0x3]
  %v72 = vld [vmem:[%s1 + $0x118] sm:$0x3]
  %v73 = vld [vmem:[%s3] sm:$0xf]
  %v75 = vlaneseq
  %v76 = vshrl.u32 %v75, 7
  %v77 = vsub.s32 0, %v76
  %v78 = vrot.slane %v73, %v77
  %v79 = vlaneseq
  %v80 = vshrl.u32 %v79, 7
  %v81 = vsub.s32 1, %v80
  %v82 = vrot.slane %v73, %v81
  %v83 = vlaneseq
  %v84 = vshrl.u32 %v83, 7
  %v85 = vsub.s32 2, %v84
  %v86 = vrot.slane %v73, %v85
  %v87 = vlaneseq
  %v88 = vshrl.u32 %v87, 7
  %v89 = vsub.s32 3, %v88
  %v90 = vrot.slane %v73, %v89
  %v103 = vcombine.low %v29, %v30
  %v104 = vcombine.low %v31, %v32
  %v106 = vunpack.c.l.s4 1983009808
  %v107 = vunpack.c.0.s8 %v106
  %v108 = vlaneseq
  %v109 = vshrl.u32 %v108, 7
  %v110 = vsub.s32 %v107, %v109
  %v111 = vrot.slane %v103, %v110
  %v113 = vunpack.c.l.s4 1983009808
  %v114 = vunpack.c.0.s8 %v113
  %v115 = vlaneseq
  %v116 = vshrl.u32 %v115, 7
  %v117 = vsub.s32 %v114, %v116
  %v118 = vrot.slane %v104, %v117
  %v119 = vcombine.low %v111, %v118
  %v120 = vcombine.low %v33, %v34
  %v121 = vcombine.low %v35, %v36
  %v123 = vunpack.c.l.s4 1983009808
  %v124 = vunpack.c.0.s8 %v123
  %v125 = vlaneseq
  %v126 = vshrl.u32 %v125, 7
  %v127 = vsub.s32 %v124, %v126
  %v128 = vrot.slane %v120, %v127
  %v130 = vunpack.c.l.s4 1983009808
  %v131 = vunpack.c.0.s8 %v130
  %v132 = vlaneseq
  %v133 = vshrl.u32 %v132, 7
  %v134 = vsub.s32 %v131, %v133
  %v135 = vrot.slane %v121, %v134
  %v136 = vcombine.low %v128, %v135
  %vm137 = vcmask 539648
  %v138 = vsel %vm137, %v119, 0
  %v140 = vsel %vm137, %v136, 0
  %vm142 = vcmask 1041408
  %v144 = vsel %vm142, %v69, 0
  %v147 = vsel %vm142, %v70, 0
  %v150 = vsel %vm142, %v71, 0
  %v153 = vsel %vm142, %v72, 0
  %155 = vmatprep.subr.mxu0 %v38
  %156 = vmatpush1.msra.mxu0 %v37
  %157 = vmatprep.subr.mxu0 %v42
  %158 = vmatpush1.msra.mxu0 %v41
  %159 = vmatprep.subr.mxu0 %v46
  %160 = vmatpush1.msra.mxu0 %v45
  %161 = vmatprep.subr.mxu0 %v50
  %162 = vmatpush1.msra.mxu0 %v49
  %163 = vmatprep.subr.mxu0 %v54
  %164 = vmatpush1.msra.mxu0 %v53
  %165 = vmatprep.subr.mxu0 %v58
  %166 = vmatpush1.msra.mxu0 %v57
  %167 = vmatprep.subr.mxu0 %v62
  %168 = vmatpush1.msra.mxu0 %v61
  %169 = vmatprep.subr.mxu0 %v66
  %170 = vmatpush1.msra.mxu0 %v65
  %171 = vmatprep.subr.mxu0 %v147
  %172 = vmatpush1.msra.mxu0 %v144
  %173 = vmatprep.subr.mxu0 0.0
  %174 = vmatpush1.msra.mxu0 0.0
  %175 = vmatprep.subr.mxu0 0.0
  %176 = vmatpush1.msra.mxu0 0.0
  %177 = vmatprep.subr.mxu0 0.0
  %178 = vmatpush1.msra.mxu0 0.0
  %179 = vmatprep.subr.mxu0 0.0
  %180 = vmatpush1.msra.mxu0 0.0
  %181 = vmatprep.subr.mxu0 0.0
  %182 = vmatpush1.msra.mxu0 0.0
  %183 = vmatprep.subr.mxu0 0.0
  %184 = vmatpush1.msra.mxu0 0.0
  %185 = vmatprep.subr.mxu0 0.0
  %186 = vmatpush1.msra.mxu0 0.0
  %187 = vmatprep.subr.mxu0 0.0
  %188 = vmatpush1.msra.mxu0 0.0
  %189 = vmatprep.subr.mxu0 0.0
  %190 = vmatpush1.msra.mxu0 0.0
  %191 = vmatprep.subr.mxu0 0.0
  %192 = vmatpush1.msra.mxu0 0.0
  %193 = vmatprep.subr.mxu0 0.0
  %194 = vmatpush1.msra.mxu0 0.0
  %195 = vmatprep.subr.mxu0 0.0
  %196 = vmatpush1.msra.mxu0 0.0
  %197 = vmatprep.subr.mxu0 0.0
  %198 = vmatpush1.msra.mxu0 0.0
  %199 = vmatprep.subr.mxu0 0.0
  %200 = vmatpush1.msra.mxu0 0.0
  %201 = vmatprep.subr.mxu0 0.0
  %202 = vmatpush1.msra.mxu0 0.0
  %203 = vmatprep.subr.mxu0 0.0
  %204 = vmatpush1.msra.mxu0 0.0
  %205 = vmatprep.subr.mxu0 0.0
  %206 = vmatpush1.msra.mxu0 0.0
  %207 = vmatprep.subr.mxu0 0.0
  %208 = vmatpush1.msra.mxu0 0.0
  %209 = vmatprep.subr.mxu0 0.0
  %210 = vmatpush1.msra.mxu0 0.0
  %211 = vmatprep.subr.mxu0 0.0
  %212 = vmatpush1.msra.mxu0 0.0
  %213 = vmatprep.subr.mxu0 0.0
  %214 = vmatpush1.msra.mxu0 0.0
  %215 = vmatprep.subr.mxu0 0.0
  %216 = vmatpush1.msra.mxu0 0.0
  %217 = vmatprep.subr.mxu0 0.0
  %218 = vmatpush1.msra.mxu0 0.0
  %219 = vmatprep.mubr.f32.mxu0 0.0
  %220 = vmatmul.mubr.f32.gmra.mrb[0].mxu0 %v138
  %v221 = vpop.f32.mrb[0].mxu0
  %v222 = vadd.f32 %v78, %v221
  %v223 = vpop.f32.mrb[0].mxu0
  %v224 = vadd.f32 %v82, %v223
  %225 = vmatprep.mubr.f32.mxu0 0.0
  %226 = vmatmul.mubr.f32.gmra.mrb[0].mxu0 %v140
  %v227 = vpop.f32.mrb[0].mxu0
  %v228 = vadd.f32 %v78, %v227
  %v229 = vpop.f32.mrb[0].mxu0
  %v230 = vadd.f32 %v82, %v229
  %231 = vdwg.mxu0
  %232 = vmatprep.subr.mxu0 %v40
  %233 = vmatpush1.msra.mxu0 %v39
  %234 = vmatprep.subr.mxu0 %v44
  %235 = vmatpush1.msra.mxu0 %v43
  %236 = vmatprep.subr.mxu0 %v48
  %237 = vmatpush1.msra.mxu0 %v47
  %238 = vmatprep.subr.mxu0 %v52
  %239 = vmatpush1.msra.mxu0 %v51
  %240 = vmatprep.subr.mxu0 %v56
  %241 = vmatpush1.msra.mxu0 %v55
  %242 = vmatprep.subr.mxu0 %v60
  %243 = vmatpush1.msra.mxu0 %v59
  %244 = vmatprep.subr.mxu0 %v64
  %245 = vmatpush1.msra.mxu0 %v63
  %246 = vmatprep.subr.mxu0 %v68
  %247 = vmatpush1.msra.mxu0 %v67
  %248 = vmatprep.subr.mxu0 %v153
  %249 = vmatpush1.msra.mxu0 %v150
  %250 = vmatprep.subr.mxu0 0.0
  %251 = vmatpush1.msra.mxu0 0.0
  %252 = vmatprep.subr.mxu0 0.0
  %253 = vmatpush1.msra.mxu0 0.0
  %254 = vmatprep.subr.mxu0 0.0
  %255 = vmatpush1.msra.mxu0 0.0
  %256 = vmatprep.subr.mxu0 0.0
  %257 = vmatpush1.msra.mxu0 0.0
  %258 = vmatprep.subr.mxu0 0.0
  %259 = vmatpush1.msra.mxu0 0.0
  %260 = vmatprep.subr.mxu0 0.0
  %261 = vmatpush1.msra.mxu0 0.0
  %262 = vmatprep.subr.mxu0 0.0
  %263 = vmatpush1.msra.mxu0 0.0
  %264 = vmatprep.subr.mxu0 0.0
  %265 = vmatpush1.msra.mxu0 0.0
  %266 = vmatprep.subr.mxu0 0.0
  %267 = vmatpush1.msra.mxu0 0.0
  %268 = vmatprep.subr.mxu0 0.0
  %269 = vmatpush1.msra.mxu0 0.0
  %270 = vmatprep.subr.mxu0 0.0
  %271 = vmatpush1.msra.mxu0 0.0
  %272 = vmatprep.subr.mxu0 0.0
  %273 = vmatpush1.msra.mxu0 0.0
  %274 = vmatprep.subr.mxu0 0.0
  %275 = vmatpush1.msra.mxu0 0.0
  %276 = vmatprep.subr.mxu0 0.0
  %277 = vmatpush1.msra.mxu0 0.0
  %278 = vmatprep.subr.mxu0 0.0
  %279 = vmatpush1.msra.mxu0 0.0
  %280 = vmatprep.subr.mxu0 0.0
  %281 = vmatpush1.msra.mxu0 0.0
  %282 = vmatprep.subr.mxu0 0.0
  %283 = vmatpush1.msra.mxu0 0.0
  %284 = vmatprep.subr.mxu0 0.0
  %285 = vmatpush1.msra.mxu0 0.0
  %286 = vmatprep.subr.mxu0 0.0
  %287 = vmatpush1.msra.mxu0 0.0
  %288 = vmatprep.subr.mxu0 0.0
  %289 = vmatpush1.msra.mxu0 0.0
  %290 = vmatprep.subr.mxu0 0.0
  %291 = vmatpush1.msra.mxu0 0.0
  %292 = vmatprep.subr.mxu0 0.0
  %293 = vmatpush1.msra.mxu0 0.0
  %294 = vmatprep.subr.mxu0 0.0
  %295 = vmatpush1.msra.mxu0 0.0
  %296 = vmatprep.mubr.f32.mxu0 0.0
  %297 = vmatmul.mubr.f32.gmra.mrb[0].mxu0 %v138
  %v298 = vpop.f32.mrb[0].mxu0
  %v299 = vadd.f32 %v86, %v298
  %v300 = vpop.f32.mrb[0].mxu0
  %v301 = vadd.f32 %v90, %v300
  %302 = vmatprep.mubr.f32.mxu0 0.0
  %303 = vmatmul.mubr.f32.gmra.mrb[0].mxu0 %v140
  %v304 = vpop.f32.mrb[0].mxu0
  %v305 = vadd.f32 %v86, %v304
  %v306 = vpop.f32.mrb[0].mxu0
  %v307 = vadd.f32 %v90, %v306
  %308 = vdwg.mxu0
  %v317 = vcombine.low %v222, %v224
  %v318 = vcombine.high %v222, %v224
  %v319 = vcombine.low %v299, %v301
  %v320 = vcombine.high %v299, %v301
  %v322 = vunpack.c.l.s4 1983009808
  %v323 = vunpack.c.0.s8 %v322
  %v324 = vlaneseq
  %v325 = vshrl.u32 %v324, 7
  %v326 = vsub.s32 %v323, %v325
  %v327 = vrot.slane %v317, %v326
  %v329 = vunpack.c.l.s4 1983009808
  %v330 = vunpack.c.0.s8 %v329
  %v331 = vlaneseq
  %v332 = vshrl.u32 %v331, 7
  %v333 = vsub.s32 %v330, %v332
  %v334 = vrot.slane %v318, %v333
  %v336 = vunpack.c.l.s4 1983009808
  %v337 = vunpack.c.0.s8 %v336
  %v338 = vlaneseq
  %v339 = vshrl.u32 %v338, 7
  %v340 = vsub.s32 %v337, %v339
  %v341 = vrot.slane %v319, %v340
  %v343 = vunpack.c.l.s4 1983009808
  %v344 = vunpack.c.0.s8 %v343
  %v345 = vlaneseq
  %v346 = vshrl.u32 %v345, 7
  %v347 = vsub.s32 %v344, %v346
  %v348 = vrot.slane %v320, %v347
  %v349 = vcombine.low %v327, %v341
  %v350 = vcombine.high %v327, %v341
  %v351 = vcombine.low %v334, %v348
  %v352 = vcombine.high %v334, %v348
  %v353 = vcombine.low %v228, %v230
  %v354 = vcombine.high %v228, %v230
  %v355 = vcombine.low %v305, %v307
  %v356 = vcombine.high %v305, %v307
  %v358 = vunpack.c.l.s4 1983009808
  %v359 = vunpack.c.0.s8 %v358
  %v360 = vlaneseq
  %v361 = vshrl.u32 %v360, 7
  %v362 = vsub.s32 %v359, %v361
  %v363 = vrot.slane %v353, %v362
  %v365 = vunpack.c.l.s4 1983009808
  %v366 = vunpack.c.0.s8 %v365
  %v367 = vlaneseq
  %v368 = vshrl.u32 %v367, 7
  %v369 = vsub.s32 %v366, %v368
  %v370 = vrot.slane %v354, %v369
  %v372 = vunpack.c.l.s4 1983009808
  %v373 = vunpack.c.0.s8 %v372
  %v374 = vlaneseq
  %v375 = vshrl.u32 %v374, 7
  %v376 = vsub.s32 %v373, %v375
  %v377 = vrot.slane %v355, %v376
  %v379 = vunpack.c.l.s4 1983009808
  %v380 = vunpack.c.0.s8 %v379
  %v381 = vlaneseq
  %v382 = vshrl.u32 %v381, 7
  %v383 = vsub.s32 %v380, %v382
  %v384 = vrot.slane %v356, %v383
  %v385 = vcombine.low %v363, %v377
  %v386 = vcombine.high %v363, %v377
  %v387 = vcombine.low %v370, %v384
  %v388 = vcombine.high %v370, %v384
  %397 = vst [vmem:[#allocation2] sm:$0xff] %v349
  %398 = vst [vmem:[#allocation2 + $0x8] sm:$0xff] %v350
  %399 = vst [vmem:[#allocation2 + $0x10] sm:$0xff] %v351
  %400 = vst [vmem:[#allocation2 + $0x18] sm:$0xff] %v352
  %401 = vst [vmem:[#allocation2 + $0x20] sm:$0xff] %v385
  %402 = vst [vmem:[#allocation2 + $0x28] sm:$0xff] %v386
  %403 = vst [vmem:[#allocation2 + $0x30] sm:$0xff] %v387
  %404 = vst [vmem:[#allocation2 + $0x38] sm:$0xff] %v388
  %v405 = vld [vmem:[%s2] sm:$0xff]
  %v406 = vld [vmem:[%s2 + $0x8] sm:$0xff]
  %v407 = vld [vmem:[%s2 + $0x10] sm:$0xff]
  %v408 = vld [vmem:[%s2 + $0x18] sm:$0xff]
  %v409 = vld [vmem:[%s2 + $0x20] sm:$0xff]
  %v410 = vld [vmem:[%s2 + $0x28] sm:$0xff]
  %v411 = vld [vmem:[%s2 + $0x30] sm:$0xff]
  %v412 = vld [vmem:[%s2 + $0x38] sm:$0xff]
  %v413 = vld [vmem:[%s2 + $0x40] sm:$0xff]
  %v414 = vld [vmem:[%s2 + $0x48] sm:$0xff]
  %v415 = vld [vmem:[%s2 + $0x50] sm:$0xff]
  %v416 = vld [vmem:[%s2 + $0x58] sm:$0xff]
  %v417 = vld [vmem:[%s2 + $0x60] sm:$0xff]
  %v418 = vld [vmem:[%s2 + $0x68] sm:$0xff]
  %v419 = vld [vmem:[%s2 + $0x70] sm:$0xff]
  %v420 = vld [vmem:[%s2 + $0x78] sm:$0xff]
  %v421 = vld [vmem:[%s2 + $0x80] sm:$0xff]
  %v422 = vld [vmem:[%s2 + $0x88] sm:$0xff]
  %v423 = vld [vmem:[%s2 + $0x90] sm:$0xff]
  %v424 = vld [vmem:[%s2 + $0x98] sm:$0xff]
  %v425 = vld [vmem:[%s2 + $0xa0] sm:$0xff]
  %v426 = vld [vmem:[%s2 + $0xa8] sm:$0xff]
  %v427 = vld [vmem:[%s2 + $0xb0] sm:$0xff]
  %v428 = vld [vmem:[%s2 + $0xb8] sm:$0xff]
  %v429 = vld [vmem:[%s2 + $0xc0] sm:$0xff]
  %v430 = vld [vmem:[%s2 + $0xc8] sm:$0xff]
  %v431 = vld [vmem:[%s2 + $0xd0] sm:$0xff]
  %v432 = vld [vmem:[%s2 + $0xd8] sm:$0xff]
  %v433 = vld [vmem:[%s2 + $0xe0] sm:$0xff]
  %v434 = vld [vmem:[%s2 + $0xe8] sm:$0xff]
  %v435 = vld [vmem:[%s2 + $0xf0] sm:$0xff]
  %v436 = vld [vmem:[%s2 + $0xf8] sm:$0xff]
  %v437 = vld [vmem:[%s2 + $0x100] sm:$0xff]
  %v438 = vld [vmem:[%s2 + $0x108] sm:$0xff]
  %v439 = vld [vmem:[%s2 + $0x110] sm:$0xff]
  %v440 = vld [vmem:[%s2 + $0x118] sm:$0xff]
  %v441 = vld [vmem:[%s2 + $0x120] sm:$0xff]
  %v442 = vld [vmem:[%s2 + $0x128] sm:$0xff]
  %v443 = vld [vmem:[%s2 + $0x130] sm:$0xff]
  %v444 = vld [vmem:[%s2 + $0x138] sm:$0xff]
  %v445 = vld [vmem:[%s2 + $0x140] sm:$0xff]
  %v446 = vld [vmem:[%s2 + $0x148] sm:$0xff]
  %v447 = vld [vmem:[%s2 + $0x150] sm:$0xff]
  %v448 = vld [vmem:[%s2 + $0x158] sm:$0xff]
  %v449 = vld [vmem:[%s2 + $0x160] sm:$0xff]
  %v450 = vld [vmem:[%s2 + $0x168] sm:$0xff]
  %v451 = vld [vmem:[%s2 + $0x170] sm:$0xff]
  %v452 = vld [vmem:[%s2 + $0x178] sm:$0xff]
  %v453 = vld [vmem:[%s2 + $0x180] sm:$0xff]
  %v454 = vld [vmem:[%s2 + $0x188] sm:$0xff]
  %v455 = vld [vmem:[%s2 + $0x190] sm:$0xff]
  %v456 = vld [vmem:[%s2 + $0x198] sm:$0xff]
  %v457 = vld [vmem:[%s2 + $0x1a0] sm:$0xff]
  %v458 = vld [vmem:[%s2 + $0x1a8] sm:$0xff]
  %v459 = vld [vmem:[%s2 + $0x1b0] sm:$0xff]
  %v460 = vld [vmem:[%s2 + $0x1b8] sm:$0xff]
  %v461 = vld [vmem:[%s2 + $0x1c0] sm:$0xff]
  %v462 = vld [vmem:[%s2 + $0x1c8] sm:$0xff]
  %v463 = vld [vmem:[%s2 + $0x1d0] sm:$0xff]
  %v464 = vld [vmem:[%s2 + $0x1d8] sm:$0xff]
  %v465 = vld [vmem:[%s2 + $0x1e0] sm:$0xff]
  %v466 = vld [vmem:[%s2 + $0x1e8] sm:$0xff]
  %v467 = vld [vmem:[%s2 + $0x1f0] sm:$0xff]
  %v468 = vld [vmem:[%s2 + $0x1f8] sm:$0xff]
  %v469 = vld [vmem:[%s4] sm:$0xff]
  %v470 = vld [vmem:[%s4 + $0x8] sm:$0xff]
  %v471 = vld [vmem:[%s4 + $0x10] sm:$0xff]
  %v472 = vld [vmem:[%s4 + $0x18] sm:$0xff]
  %v473 = vld [vmem:[%s4 + $0x20] sm:$0xff]
  %v474 = vld [vmem:[%s4 + $0x28] sm:$0xff]
  %v475 = vld [vmem:[%s4 + $0x30] sm:$0xff]
  %v476 = vld [vmem:[%s4 + $0x38] sm:$0xff]
  %v477 = vld [vmem:[%s4 + $0x40] sm:$0xff]
  %v478 = vld [vmem:[%s4 + $0x48] sm:$0xff]
  %v479 = vld [vmem:[%s4 + $0x50] sm:$0xff]
  %v480 = vld [vmem:[%s4 + $0x58] sm:$0xff]
  %v481 = vld [vmem:[%s4 + $0x60] sm:$0xff]
  %v482 = vld [vmem:[%s4 + $0x68] sm:$0xff]
  %v483 = vld [vmem:[%s4 + $0x70] sm:$0xff]
  %v484 = vld [vmem:[%s4 + $0x78] sm:$0xff]
  %v485 = vld [vmem:[%s4 + $0x80] sm:$0xff]
  %v486 = vld [vmem:[%s4 + $0x88] sm:$0xff]
  %v487 = vld [vmem:[%s4 + $0x90] sm:$0xff]
  %v488 = vld [vmem:[%s4 + $0x98] sm:$0xff]
  %v489 = vld [vmem:[%s4 + $0xa0] sm:$0xff]
  %v490 = vld [vmem:[%s4 + $0xa8] sm:$0xff]
  %v491 = vld [vmem:[%s4 + $0xb0] sm:$0xff]
  %v492 = vld [vmem:[%s4 + $0xb8] sm:$0xff]
  %v493 = vld [vmem:[%s4 + $0xc0] sm:$0xff]
  %v494 = vld [vmem:[%s4 + $0xc8] sm:$0xff]
  %v495 = vld [vmem:[%s4 + $0xd0] sm:$0xff]
  %v496 = vld [vmem:[%s4 + $0xd8] sm:$0xff]
  %v497 = vld [vmem:[%s4 + $0xe0] sm:$0xff]
  %v498 = vld [vmem:[%s4 + $0xe8] sm:$0xff]
  %v499 = vld [vmem:[%s4 + $0xf0] sm:$0xff]
  %v500 = vld [vmem:[%s4 + $0xf8] sm:$0xff]
  %v501 = vld [vmem:[%s4 + $0x100] sm:$0xff]
  %v502 = vld [vmem:[%s4 + $0x108] sm:$0xff]
  %v503 = vld [vmem:[%s4 + $0x110] sm:$0xff]
  %v504 = vld [vmem:[%s4 + $0x118] sm:$0xff]
  %v505 = vld [vmem:[%s4 + $0x120] sm:$0xff]
  %v506 = vld [vmem:[%s4 + $0x128] sm:$0xff]
  %v507 = vld [vmem:[%s4 + $0x130] sm:$0xff]
  %v508 = vld [vmem:[%s4 + $0x138] sm:$0xff]
  %v509 = vld [vmem:[%s4 + $0x140] sm:$0xff]
  %v510 = vld [vmem:[%s4 + $0x148] sm:$0xff]
  %v511 = vld [vmem:[%s4 + $0x150] sm:$0xff]
  %v512 = vld [vmem:[%s4 + $0x158] sm:$0xff]
  %v513 = vld [vmem:[%s4 + $0x160] sm:$0xff]
  %v514 = vld [vmem:[%s4 + $0x168] sm:$0xff]
  %v515 = vld [vmem:[%s4 + $0x170] sm:$0xff]
  %v516 = vld [vmem:[%s4 + $0x178] sm:$0xff]
  %v517 = vld [vmem:[%s4 + $0x180] sm:$0xff]
  %v518 = vld [vmem:[%s4 + $0x188] sm:$0xff]
  %v519 = vld [vmem:[%s4 + $0x190] sm:$0xff]
  %v520 = vld [vmem:[%s4 + $0x198] sm:$0xff]
  %v521 = vld [vmem:[%s4 + $0x1a0] sm:$0xff]
  %v522 = vld [vmem:[%s4 + $0x1a8] sm:$0xff]
  %v523 = vld [vmem:[%s4 + $0x1b0] sm:$0xff]
  %v524 = vld [vmem:[%s4 + $0x1b8] sm:$0xff]
  %v525 = vld [vmem:[%s4 + $0x1c0] sm:$0xff]
  %v526 = vld [vmem:[%s4 + $0x1c8] sm:$0xff]
  %v527 = vld [vmem:[%s4 + $0x1d0] sm:$0xff]
  %v528 = vld [vmem:[%s4 + $0x1d8] sm:$0xff]
  %v529 = vld [vmem:[%s4 + $0x1e0] sm:$0xff]
  %v530 = vld [vmem:[%s4 + $0x1e8] sm:$0xff]
  %v531 = vld [vmem:[%s4 + $0x1f0] sm:$0xff]
  %v532 = vld [vmem:[%s4 + $0x1f8] sm:$0xff]
  %v533 = vld [vmem:[%s4 + $0x200] sm:$0xff]
  %v534 = vld [vmem:[%s4 + $0x208] sm:$0xff]
  %v535 = vld [vmem:[%s4 + $0x210] sm:$0xff]
  %v536 = vld [vmem:[%s4 + $0x218] sm:$0xff]
  %v537 = vld [vmem:[%s4 + $0x220] sm:$0xff]
  %v538 = vld [vmem:[%s4 + $0x228] sm:$0xff]
  %v539 = vld [vmem:[%s4 + $0x230] sm:$0xff]
  %v540 = vld [vmem:[%s4 + $0x238] sm:$0xff]
  %v541 = vld [vmem:[%s4 + $0x240] sm:$0xff]
  %v542 = vld [vmem:[%s4 + $0x248] sm:$0xff]
  %v543 = vld [vmem:[%s4 + $0x250] sm:$0xff]
  %v544 = vld [vmem:[%s4 + $0x258] sm:$0xff]
  %v545 = vld [vmem:[%s4 + $0x260] sm:$0xff]
  %v546 = vld [vmem:[%s4 + $0x268] sm:$0xff]
  %v547 = vld [vmem:[%s4 + $0x270] sm:$0xff]
  %v548 = vld [vmem:[%s4 + $0x278] sm:$0xff]
  %v549 = vld [vmem:[%s4 + $0x280] sm:$0xff]
  %v550 = vld [vmem:[%s4 + $0x288] sm:$0xff]
  %v551 = vld [vmem:[%s4 + $0x290] sm:$0xff]
  %v552 = vld [vmem:[%s4 + $0x298] sm:$0xff]
  %v553 = vld [vmem:[%s4 + $0x2a0] sm:$0xff]
  %v554 = vld [vmem:[%s4 + $0x2a8] sm:$0xff]
  %v555 = vld [vmem:[%s4 + $0x2b0] sm:$0xff]
  %v556 = vld [vmem:[%s4 + $0x2b8] sm:$0xff]
  %v557 = vld [vmem:[%s4 + $0x2c0] sm:$0xff]
  %v558 = vld [vmem:[%s4 + $0x2c8] sm:$0xff]
  %v559 = vld [vmem:[%s4 + $0x2d0] sm:$0xff]
  %v560 = vld [vmem:[%s4 + $0x2d8] sm:$0xff]
  %v561 = vld [vmem:[%s4 + $0x2e0] sm:$0xff]
  %v562 = vld [vmem:[%s4 + $0x2e8] sm:$0xff]
  %v563 = vld [vmem:[%s4 + $0x2f0] sm:$0xff]
  %v564 = vld [vmem:[%s4 + $0x2f8] sm:$0xff]
  %v565 = vld [vmem:[%s4 + $0x300] sm:$0xff]
  %v566 = vld [vmem:[%s4 + $0x308] sm:$0xff]
  %v567 = vld [vmem:[%s4 + $0x310] sm:$0xff]
  %v568 = vld [vmem:[%s4 + $0x318] sm:$0xff]
  %v569 = vld [vmem:[%s4 + $0x320] sm:$0xff]
  %v570 = vld [vmem:[%s4 + $0x328] sm:$0xff]
  %v571 = vld [vmem:[%s4 + $0x330] sm:$0xff]
  %v572 = vld [vmem:[%s4 + $0x338] sm:$0xff]
  %v573 = vld [vmem:[%s4 + $0x340] sm:$0xff]
  %v574 = vld [vmem:[%s4 + $0x348] sm:$0xff]
  %v575 = vld [vmem:[%s4 + $0x350] sm:$0xff]
  %v576 = vld [vmem:[%s4 + $0x358] sm:$0xff]
  %v577 = vld [vmem:[%s4 + $0x360] sm:$0xff]
  %v578 = vld [vmem:[%s4 + $0x368] sm:$0xff]
  %v579 = vld [vmem:[%s4 + $0x370] sm:$0xff]
  %v580 = vld [vmem:[%s4 + $0x378] sm:$0xff]
  %v581 = vld [vmem:[%s4 + $0x380] sm:$0xff]
  %v582 = vld [vmem:[%s4 + $0x388] sm:$0xff]
  %v583 = vld [vmem:[%s4 + $0x390] sm:$0xff]
  %v584 = vld [vmem:[%s4 + $0x398] sm:$0xff]
  %v585 = vld [vmem:[%s4 + $0x3a0] sm:$0xff]
  %v586 = vld [vmem:[%s4 + $0x3a8] sm:$0xff]
  %v587 = vld [vmem:[%s4 + $0x3b0] sm:$0xff]
  %v588 = vld [vmem:[%s4 + $0x3b8] sm:$0xff]
  %v589 = vld [vmem:[%s4 + $0x3c0] sm:$0xff]
  %v590 = vld [vmem:[%s4 + $0x3c8] sm:$0xff]
  %v591 = vld [vmem:[%s4 + $0x3d0] sm:$0xff]
  %v592 = vld [vmem:[%s4 + $0x3d8] sm:$0xff]
  %v593 = vld [vmem:[%s4 + $0x3e0] sm:$0xff]
  %v594 = vld [vmem:[%s4 + $0x3e8] sm:$0xff]
  %v595 = vld [vmem:[%s4 + $0x3f0] sm:$0xff]
  %v596 = vld [vmem:[%s4 + $0x3f8] sm:$0xff]
  %v597 = vld [vmem:[%s5] sm:$0xf]
  %v599 = vlaneseq
  %v600 = vshrl.u32 %v599, 7
  %v601 = vsub.s32 0, %v600
  %v602 = vrot.slane %v597, %v601
  %v603 = vlaneseq
  %v604 = vshrl.u32 %v603, 7
  %v605 = vsub.s32 1, %v604
  %v606 = vrot.slane %v597, %v605
  %v607 = vlaneseq
  %v608 = vshrl.u32 %v607, 7
  %v609 = vsub.s32 2, %v608
  %v610 = vrot.slane %v597, %v609
  %v611 = vlaneseq
  %v612 = vshrl.u32 %v611, 7
  %v613 = vsub.s32 3, %v612
  %v614 = vrot.slane %v597, %v613
  %v619 = vld [vmem:[#allocation2] sm:$0xff]
  %620 = vmatprep.subr.mxu0 %v406
  %621 = vmatpush1.msra.mxu0 %v405
  %622 = vmatprep.subr.mxu0 %v410
  %623 = vmatpush1.msra.mxu0 %v409
  %624 = vmatprep.subr.mxu0 %v414
  %625 = vmatpush1.msra.mxu0 %v413
  %626 = vmatprep.subr.mxu0 %v418
  %627 = vmatpush1.msra.mxu0 %v417
  %628 = vmatprep.subr.mxu0 %v422
  %629 = vmatpush1.msra.mxu0 %v421
  %630 = vmatprep.subr.mxu0 %v426
  %631 = vmatpush1.msra.mxu0 %v425
  %632 = vmatprep.subr.mxu0 %v430
  %633 = vmatpush1.msra.mxu0 %v429
  %634 = vmatprep.subr.mxu0 %v434
  %635 = vmatpush1.msra.mxu0 %v433
  %636 = vmatprep.subr.mxu0 %v438
  %637 = vmatpush1.msra.mxu0 %v437
  %638 = vmatprep.subr.mxu0 %v442
  %639 = vmatpush1.msra.mxu0 %v441
  %640 = vmatprep.subr.mxu0 %v446
  %641 = vmatpush1.msra.mxu0 %v445
  %642 = vmatprep.subr.mxu0 %v450
  %643 = vmatpush1.msra.mxu0 %v449
  %644 = vmatprep.subr.mxu0 %v454
  %645 = vmatpush1.msra.mxu0 %v453
  %646 = vmatprep.subr.mxu0 %v458
  %647 = vmatpush1.msra.mxu0 %v457
  %648 = vmatprep.subr.mxu0 %v462
  %649 = vmatpush1.msra.mxu0 %v461
  %650 = vmatprep.subr.mxu0 %v466
  %651 = vmatpush1.msra.mxu0 %v465
  %652 = vmatprep.subr.mxu0 0.0
  %653 = vmatpush1.msra.mxu0 0.0
  %654 = vmatprep.subr.mxu0 0.0
  %655 = vmatpush1.msra.mxu0 0.0
  %656 = vmatprep.subr.mxu0 0.0
  %657 = vmatpush1.msra.mxu0 0.0
  %658 = vmatprep.subr.mxu0 0.0
  %659 = vmatpush1.msra.mxu0 0.0
  %660 = vmatprep.subr.mxu0 0.0
  %661 = vmatpush1.msra.mxu0 0.0
  %662 = vmatprep.subr.mxu0 0.0
  %663 = vmatpush1.msra.mxu0 0.0
  %664 = vmatprep.subr.mxu0 0.0
  %665 = vmatpush1.msra.mxu0 0.0
  %666 = vmatprep.subr.mxu0 0.0
  %667 = vmatpush1.msra.mxu0 0.0
  %668 = vmatprep.subr.mxu0 0.0
  %669 = vmatpush1.msra.mxu0 0.0
  %670 = vmatprep.subr.mxu0 0.0
  %671 = vmatpush1.msra.mxu0 0.0
  %672 = vmatprep.subr.mxu0 0.0
  %673 = vmatpush1.msra.mxu0 0.0
  %674 = vmatprep.subr.mxu0 0.0
  %675 = vmatpush1.msra.mxu0 0.0
  %676 = vmatprep.subr.mxu0 0.0
  %677 = vmatpush1.msra.mxu0 0.0
  %678 = vmatprep.subr.mxu0 0.0
  %679 = vmatpush1.msra.mxu0 0.0
  %680 = vmatprep.subr.mxu0 0.0
  %681 = vmatpush1.msra.mxu0 0.0
  %682 = vmatprep.subr.mxu0 0.0
  %683 = vmatpush1.msra.mxu0 0.0
  %684 = vmatprep.mubr.f32.mxu0 0.0
  %685 = vmatmul.mubr.f32.gmra.mrb[0].mxu0 0.0
  %v686 = vpop.f32.mrb[0].mxu0
  %v687 = vadd.f32 0.0, %v686
  %v688 = vpop.f32.mrb[0].mxu0
  %v689 = vadd.f32 0.0, %v688
  %690 = vdwg.mxu0
  %691 = vmatprep.subr.mxu0 %v408
  %692 = vmatpush1.msra.mxu0 %v407
  %693 = vmatprep.subr.mxu0 %v412
  %694 = vmatpush1.msra.mxu0 %v411
  %695 = vmatprep.subr.mxu0 %v416
  %696 = vmatpush1.msra.mxu0 %v415
  %697 = vmatprep.subr.mxu0 %v420
  %698 = vmatpush1.msra.mxu0 %v419
  %699 = vmatprep.subr.mxu0 %v424
  %700 = vmatpush1.msra.mxu0 %v423
  %701 = vmatprep.subr.mxu0 %v428
  %702 = vmatpush1.msra.mxu0 %v427
  %703 = vmatprep.subr.mxu0 %v432
  %704 = vmatpush1.msra.mxu0 %v431
  %705 = vmatprep.subr.mxu0 %v436
  %706 = vmatpush1.msra.mxu0 %v435
  %707 = vmatprep.subr.mxu0 %v440
  %708 = vmatpush1.msra.mxu0 %v439
  %709 = vmatprep.subr.mxu0 %v444
  %710 = vmatpush1.msra.mxu0 %v443
  %711 = vmatprep.subr.mxu0 %v448
  %712 = vmatpush1.msra.mxu0 %v447
  %713 = vmatprep.subr.mxu0 %v452
  %714 = vmatpush1.msra.mxu0 %v451
  %715 = vmatprep.subr.mxu0 %v456
  %716 = vmatpush1.msra.mxu0 %v455
  %717 = vmatprep.subr.mxu0 %v460
  %718 = vmatpush1.msra.mxu0 %v459
  %719 = vmatprep.subr.mxu0 %v464
  %720 = vmatpush1.msra.mxu0 %v463
  %721 = vmatprep.subr.mxu0 %v468
  %722 = vmatpush1.msra.mxu0 %v467
  %723 = vmatprep.subr.mxu0 0.0
  %724 = vmatpush1.msra.mxu0 0.0
  %725 = vmatprep.subr.mxu0 0.0
  %726 = vmatpush1.msra.mxu0 0.0
  %727 = vmatprep.subr.mxu0 0.0
  %728 = vmatpush1.msra.mxu0 0.0
  %729 = vmatprep.subr.mxu0 0.0
  %730 = vmatpush1.msra.mxu0 0.0
  %731 = vmatprep.subr.mxu0 0.0
  %732 = vmatpush1.msra.mxu0 0.0
  %733 = vmatprep.subr.mxu0 0.0
  %734 = vmatpush1.msra.mxu0 0.0
  %735 = vmatprep.subr.mxu0 0.0
  %736 = vmatpush1.msra.mxu0 0.0
  %737 = vmatprep.subr.mxu0 0.0
  %738 = vmatpush1.msra.mxu0 0.0
  %739 = vmatprep.subr.mxu0 0.0
  %740 = vmatpush1.msra.mxu0 0.0
  %741 = vmatprep.subr.mxu0 0.0
  %742 = vmatpush1.msra.mxu0 0.0
  %743 = vmatprep.subr.mxu0 0.0
  %744 = vmatpush1.msra.mxu0 0.0
  %745 = vmatprep.subr.mxu0 0.0
  %746 = vmatpush1.msra.mxu0 0.0
  %747 = vmatprep.subr.mxu0 0.0
  %748 = vmatpush1.msra.mxu0 0.0
  %749 = vmatprep.subr.mxu0 0.0
  %750 = vmatpush1.msra.mxu0 0.0
  %751 = vmatprep.subr.mxu0 0.0
  %752 = vmatpush1.msra.mxu0 0.0
  %753 = vmatprep.subr.mxu0 0.0
  %754 = vmatpush1.msra.mxu0 0.0
  %755 = vmatprep.mubr.f32.mxu0 0.0
  %756 = vmatmul.mubr.f32.gmra.mrb[0].mxu0 0.0
  %v757 = vpop.f32.mrb[0].mxu0
  %v758 = vadd.f32 0.0, %v757
  %v759 = vpop.f32.mrb[0].mxu0
  %v760 = vadd.f32 0.0, %v759
  %761 = vdwg.mxu0
  %v766 = vcombine.low %v687, %v689
  %v767 = vcombine.low %v758, %v760
  %v769 = vunpack.c.l.s4 1983009808
  %v770 = vunpack.c.0.s8 %v769
  %v771 = vlaneseq
  %v772 = vshrl.u32 %v771, 7
  %v773 = vsub.s32 %v770, %v772
  %v774 = vrot.slane %v766, %v773
  %v776 = vunpack.c.l.s4 1983009808
  %v777 = vunpack.c.0.s8 %v776
  %v778 = vlaneseq
  %v779 = vshrl.u32 %v778, 7
  %v780 = vsub.s32 %v777, %v779
  %v781 = vrot.slane %v767, %v780
  %v782 = vcombine.low %v774, %v781
  %v784 = vadd.f32 %v619, %v782
  %v785 = vxor.u32 %v784, 2147483648
  %v786 = vmul.f32 %v785, 1.442695
  %v787 = vpow.pop %v786
  %v788 = vadd.f32 %v787, 1.0
  %v789 = vrcp.pop %v788
  %v790 = vmul.f32 1.0, %v789
  %v792 = vrot.slane %v784, 2
  %v794 = vxor.u32 %v792, 2147483648
  %v795 = vmul.f32 %v794, 1.442695
  %v796 = vpow.pop %v795
  %v797 = vadd.f32 %v796, 1.0
  %v798 = vrcp.pop %v797
  %v799 = vmul.f32 1.0, %v798
  %v800 = vrot.slane %v784, 4
  %v802 = vtanh.pop %v800
  %v803 = vrot.slane %v784, 6
  %v805 = vxor.u32 %v803, 2147483648
  %v806 = vmul.f32 %v805, 1.442695
  %v807 = vpow.pop %v806
  %v808 = vadd.f32 %v807, 1.0
  %v809 = vrcp.pop %v808
  %v810 = vmul.f32 1.0, %v809
  %v811 = vmul.f32 %v799, 0.0
  %v812 = vmul.f32 %v790, %v802
  %v813 = vadd.f32 %v811, %v812
  %v814 = vtanh.pop %v813
  %v815 = vmul.f32 %v810, %v814
  %816 = vmatprep.subr.mxu0 %v470
  %817 = vmatpush1.msra.mxu0 %v469
  %818 = vmatprep.subr.mxu0 %v474
  %819 = vmatpush1.msra.mxu0 %v473
  %820 = vmatprep.subr.mxu0 %v478
  %821 = vmatpush1.msra.mxu0 %v477
  %822 = vmatprep.subr.mxu0 %v482
  %823 = vmatpush1.msra.mxu0 %v481
  %824 = vmatprep.subr.mxu0 %v486
  %825 = vmatpush1.msra.mxu0 %v485
  %826 = vmatprep.subr.mxu0 %v490
  %827 = vmatpush1.msra.mxu0 %v489
  %828 = vmatprep.subr.mxu0 %v494
  %829 = vmatpush1.msra.mxu0 %v493
  %830 = vmatprep.subr.mxu0 %v498
  %831 = vmatpush1.msra.mxu0 %v497
  %832 = vmatprep.subr.mxu0 %v502
  %833 = vmatpush1.msra.mxu0 %v501
  %834 = vmatprep.subr.mxu0 %v506
  %835 = vmatpush1.msra.mxu0 %v505
  %836 = vmatprep.subr.mxu0 %v510
  %837 = vmatpush1.msra.mxu0 %v509
  %838 = vmatprep.subr.mxu0 %v514
  %839 = vmatpush1.msra.mxu0 %v513
  %840 = vmatprep.subr.mxu0 %v518
  %841 = vmatpush1.msra.mxu0 %v517
  %842 = vmatprep.subr.mxu0 %v522
  %843 = vmatpush1.msra.mxu0 %v521
  %844 = vmatprep.subr.mxu0 %v526
  %845 = vmatpush1.msra.mxu0 %v525
  %846 = vmatprep.subr.mxu0 %v530
  %847 = vmatpush1.msra.mxu0 %v529
  %848 = vmatprep.subr.mxu0 %v534
  %849 = vmatpush1.msra.mxu0 %v533
  %850 = vmatprep.subr.mxu0 %v538
  %851 = vmatpush1.msra.mxu0 %v537
  %852 = vmatprep.subr.mxu0 %v542
  %853 = vmatpush1.msra.mxu0 %v541
  %854 = vmatprep.subr.mxu0 %v546
  %855 = vmatpush1.msra.mxu0 %v545
  %856 = vmatprep.subr.mxu0 %v550
  %857 = vmatpush1.msra.mxu0 %v549
  %858 = vmatprep.subr.mxu0 %v554
  %859 = vmatpush1.msra.mxu0 %v553
  %860 = vmatprep.subr.mxu0 %v558
  %861 = vmatpush1.msra.mxu0 %v557
  %862 = vmatprep.subr.mxu0 %v562
  %863 = vmatpush1.msra.mxu0 %v561
  %864 = vmatprep.subr.mxu0 %v566
  %865 = vmatpush1.msra.mxu0 %v565
  %866 = vmatprep.subr.mxu0 %v570
  %867 = vmatpush1.msra.mxu0 %v569
  %868 = vmatprep.subr.mxu0 %v574
  %869 = vmatpush1.msra.mxu0 %v573
  %870 = vmatprep.subr.mxu0 %v578
  %871 = vmatpush1.msra.mxu0 %v577
  %872 = vmatprep.subr.mxu0 %v582
  %873 = vmatpush1.msra.mxu0 %v581
  %874 = vmatprep.subr.mxu0 %v586
  %875 = vmatpush1.msra.mxu0 %v585
  %876 = vmatprep.subr.mxu0 %v590
  %877 = vmatpush1.msra.mxu0 %v589
  %878 = vmatprep.subr.mxu0 %v594
  %879 = vmatpush1.msra.mxu0 %v593
  %880 = vmatprep.mubr.f32.mxu0 0.0
  %881 = vmatmul.mubr.f32.gmra.mrb[0].mxu0 %v815
  %v882 = vpop.f32.mrb[0].mxu0
  %v883 = vadd.f32 %v602, %v882
  %v884 = vpop.f32.mrb[0].mxu0
  %v885 = vadd.f32 %v606, %v884
  %886 = vdwg.mxu0
  %887 = vmatprep.subr.mxu0 %v472
  %888 = vmatpush1.msra.mxu0 %v471
  %889 = vmatprep.subr.mxu0 %v476
  %890 = vmatpush1.msra.mxu0 %v475
  %891 = vmatprep.subr.mxu0 %v480
  %892 = vmatpush1.msra.mxu0 %v479
  %893 = vmatprep.subr.mxu0 %v484
  %894 = vmatpush1.msra.mxu0 %v483
  %895 = vmatprep.subr.mxu0 %v488
  %896 = vmatpush1.msra.mxu0 %v487
  %897 = vmatprep.subr.mxu0 %v492
  %898 = vmatpush1.msra.mxu0 %v491
  %899 = vmatprep.subr.mxu0 %v496
  %900 = vmatpush1.msra.mxu0 %v495
  %901 = vmatprep.subr.mxu0 %v500
  %902 = vmatpush1.msra.mxu0 %v499
  %903 = vmatprep.subr.mxu0 %v504
  %904 = vmatpush1.msra.mxu0 %v503
  %905 = vmatprep.subr.mxu0 %v508
  %906 = vmatpush1.msra.mxu0 %v507
  %907 = vmatprep.subr.mxu0 %v512
  %908 = vmatpush1.msra.mxu0 %v511
  %909 = vmatprep.subr.mxu0 %v516
  %910 = vmatpush1.msra.mxu0 %v515
  %911 = vmatprep.subr.mxu0 %v520
  %912 = vmatpush1.msra.mxu0 %v519
  %913 = vmatprep.subr.mxu0 %v524
  %914 = vmatpush1.msra.mxu0 %v523
  %915 = vmatprep.subr.mxu0 %v528
  %916 = vmatpush1.msra.mxu0 %v527
  %917 = vmatprep.subr.mxu0 %v532
  %918 = vmatpush1.msra.mxu0 %v531
  %919 = vmatprep.subr.mxu0 %v536
  %920 = vmatpush1.msra.mxu0 %v535
  %921 = vmatprep.subr.mxu0 %v540
  %922 = vmatpush1.msra.mxu0 %v539
  %923 = vmatprep.subr.mxu0 %v544
  %924 = vmatpush1.msra.mxu0 %v543
  %925 = vmatprep.subr.mxu0 %v548
  %926 = vmatpush1.msra.mxu0 %v547
  %927 = vmatprep.subr.mxu0 %v552
  %928 = vmatpush1.msra.mxu0 %v551
  %929 = vmatprep.subr.mxu0 %v556
  %930 = vmatpush1.msra.mxu0 %v555
  %931 = vmatprep.subr.mxu0 %v560
  %932 = vmatpush1.msra.mxu0 %v559
  %933 = vmatprep.subr.mxu0 %v564
  %934 = vmatpush1.msra.mxu0 %v563
  %935 = vmatprep.subr.mxu0 %v568
  %936 = vmatpush1.msra.mxu0 %v567
  %937 = vmatprep.subr.mxu0 %v572
  %938 = vmatpush1.msra.mxu0 %v571
  %939 = vmatprep.subr.mxu0 %v576
  %940 = vmatpush1.msra.mxu0 %v575
  %941 = vmatprep.subr.mxu0 %v580
  %942 = vmatpush1.msra.mxu0 %v579
  %943 = vmatprep.subr.mxu0 %v584
  %944 = vmatpush1.msra.mxu0 %v583
  %945 = vmatprep.subr.mxu0 %v588
  %946 = vmatpush1.msra.mxu0 %v587
  %947 = vmatprep.subr.mxu0 %v592
  %948 = vmatpush1.msra.mxu0 %v591
  %949 = vmatprep.subr.mxu0 %v596
  %950 = vmatpush1.msra.mxu0 %v595
  %951 = vmatprep.mubr.f32.mxu0 0.0
  %952 = vmatmul.mubr.f32.gmra.mrb[0].mxu0 %v815
  %v953 = vpop.f32.mrb[0].mxu0
  %v954 = vadd.f32 %v610, %v953
  %v955 = vpop.f32.mrb[0].mxu0
  %v956 = vadd.f32 %v614, %v955
  %957 = vdwg.mxu0
  %v958 = vxor.u32 %v883, 2147483648
  %v959 = vmul.f32 %v958, 1.442695
  %v960 = vpow.pop %v959
  %v961 = vadd.f32 %v960, 1.0
  %v962 = vrcp.pop %v961
  %v963 = vmul.f32 1.0, %v962
  %v964 = vxor.u32 %v885, 2147483648
  %v965 = vmul.f32 %v964, 1.442695
  %v966 = vpow.pop %v965
  %v967 = vadd.f32 %v966, 1.0
  %v968 = vrcp.pop %v967
  %v969 = vmul.f32 1.0, %v968
  %v970 = vtanh.pop %v954
  %v971 = vxor.u32 %v956, 2147483648
  %v972 = vmul.f32 %v971, 1.442695
  %v973 = vpow.pop %v972
  %v974 = vadd.f32 %v973, 1.0
  %v975 = vrcp.pop %v974
  %v976 = vmul.f32 1.0, %v975
  %v977 = vmul.f32 %v969, 0.0
  %v978 = vmul.f32 %v963, %v970
  %v979 = vadd.f32 %v977, %v978
  %v980 = vtanh.pop %v979
  %v981 = vmul.f32 %v976, %v980
  %982 = vst [vmem:[#allocation3] sm:$0x3] %v981
  %s983 = scalar_lea.vmem [#allocation2], 8
  %v984 = vld [vmem:[%s983] sm:$0xff]
  %985 = vmatprep.subr.mxu0 %v406
  %986 = vmatpush1.msra.mxu0 %v405
  %987 = vmatprep.subr.mxu0 %v410
  %988 = vmatpush1.msra.mxu0 %v409
  %989 = vmatprep.subr.mxu0 %v414
  %990 = vmatpush1.msra.mxu0 %v413
  %991 = vmatprep.subr.mxu0 %v418
  %992 = vmatpush1.msra.mxu0 %v417
  %993 = vmatprep.subr.mxu0 %v422
  %994 = vmatpush1.msra.mxu0 %v421
  %995 = vmatprep.subr.mxu0 %v426
  %996 = vmatpush1.msra.mxu0 %v425
  %997 = vmatprep.subr.mxu0 %v430
  %998 = vmatpush1.msra.mxu0 %v429
  %999 = vmatprep.subr.mxu0 %v434
  %1000 = vmatpush1.msra.mxu0 %v433
  %1001 = vmatprep.subr.mxu0 %v438
  %1002 = vmatpush1.msra.mxu0 %v437
  %1003 = vmatprep.subr.mxu0 %v442
  %1004 = vmatpush1.msra.mxu0 %v441
  %1005 = vmatprep.subr.mxu0 %v446
  %1006 = vmatpush1.msra.mxu0 %v445
  %1007 = vmatprep.subr.mxu0 %v450
  %1008 = vmatpush1.msra.mxu0 %v449
  %1009 = vmatprep.subr.mxu0 %v454
  %1010 = vmatpush1.msra.mxu0 %v453
  %1011 = vmatprep.subr.mxu0 %v458
  %1012 = vmatpush1.msra.mxu0 %v457
  %1013 = vmatprep.subr.mxu0 %v462
  %1014 = vmatpush1.msra.mxu0 %v461
  %1015 = vmatprep.subr.mxu0 %v466
  %1016 = vmatpush1.msra.mxu0 %v465
  %1017 = vmatprep.subr.mxu0 0.0
  %1018 = vmatpush1.msra.mxu0 0.0
  %1019 = vmatprep.subr.mxu0 0.0
  %1020 = vmatpush1.msra.mxu0 0.0
  %1021 = vmatprep.subr.mxu0 0.0
  %1022 = vmatpush1.msra.mxu0 0.0
  %1023 = vmatprep.subr.mxu0 0.0
  %1024 = vmatpush1.msra.mxu0 0.0
  %1025 = vmatprep.subr.mxu0 0.0
  %1026 = vmatpush1.msra.mxu0 0.0
  %1027 = vmatprep.subr.mxu0 0.0
  %1028 = vmatpush1.msra.mxu0 0.0
  %1029 = vmatprep.subr.mxu0 0.0
  %1030 = vmatpush1.msra.mxu0 0.0
  %1031 = vmatprep.subr.mxu0 0.0
  %1032 = vmatpush1.msra.mxu0 0.0
  %1033 = vmatprep.subr.mxu0 0.0
  %1034 = vmatpush1.msra.mxu0 0.0
  %1035 = vmatprep.subr.mxu0 0.0
  %1036 = vmatpush1.msra.mxu0 0.0
  %1037 = vmatprep.subr.mxu0 0.0
  %1038 = vmatpush1.msra.mxu0 0.0
  %1039 = vmatprep.subr.mxu0 0.0
  %1040 = vmatpush1.msra.mxu0 0.0
  %1041 = vmatprep.subr.mxu0 0.0
  %1042 = vmatpush1.msra.mxu0 0.0
  %1043 = vmatprep.subr.mxu0 0.0
  %1044 = vmatpush1.msra.mxu0 0.0
  %1045 = vmatprep.subr.mxu0 0.0
  %1046 = vmatpush1.msra.mxu0 0.0
  %1047 = vmatprep.subr.mxu0 0.0
  %1048 = vmatpush1.msra.mxu0 0.0
  %1049 = vmatprep.mubr.f32.mxu0 0.0
  %1050 = vmatmul.mubr.f32.gmra.mrb[0].mxu0 %v815
  %v1051 = vpop.f32.mrb[0].mxu0
  %v1052 = vadd.f32 0.0, %v1051
  %v1053 = vpop.f32.mrb[0].mxu0
  %v1054 = vadd.f32 0.0, %v1053
  %1055 = vdwg.mxu0
  %1056 = vmatprep.subr.mxu0 %v408
  %1057 = vmatpush1.msra.mxu0 %v407
  %1058 = vmatprep.subr.mxu0 %v412
  %1059 = vmatpush1.msra.mxu0 %v411
  %1060 = vmatprep.subr.mxu0 %v416
  %1061 = vmatpush1.msra.mxu0 %v415
  %1062 = vmatprep.subr.mxu0 %v420
  %1063 = vmatpush1.msra.mxu0 %v419
  %1064 = vmatprep.subr.mxu0 %v424
  %1065 = vmatpush1.msra.mxu0 %v423
  %1066 = vmatprep.subr.mxu0 %v428
  %1067 = vmatpush1.msra.mxu0 %v427
  %1068 = vmatprep.subr.mxu0 %v432
  %1069 = vmatpush1.msra.mxu0 %v431
  %1070 = vmatprep.subr.mxu0 %v436
  %1071 = vmatpush1.msra.mxu0 %v435
  %1072 = vmatprep.subr.mxu0 %v440
  %1073 = vmatpush1.msra.mxu0 %v439
  %1074 = vmatprep.subr.mxu0 %v444
  %1075 = vmatpush1.msra.mxu0 %v443
  %1076 = vmatprep.subr.mxu0 %v448
  %1077 = vmatpush1.msra.mxu0 %v447
  %1078 = vmatprep.subr.mxu0 %v452
  %1079 = vmatpush1.msra.mxu0 %v451
  %1080 = vmatprep.subr.mxu0 %v456
  %1081 = vmatpush1.msra.mxu0 %v455
  %1082 = vmatprep.subr.mxu0 %v460
  %1083 = vmatpush1.msra.mxu0 %v459
  %1084 = vmatprep.subr.mxu0 %v464
  %1085 = vmatpush1.msra.mxu0 %v463
  %1086 = vmatprep.subr.mxu0 %v468
  %1087 = vmatpush1.msra.mxu0 %v467
  %1088 = vmatprep.subr.mxu0 0.0
  %1089 = vmatpush1.msra.mxu0 0.0
  %1090 = vmatprep.subr.mxu0 0.0
  %1091 = vmatpush1.msra.mxu0 0.0
  %1092 = vmatprep.subr.mxu0 0.0
  %1093 = vmatpush1.msra.mxu0 0.0
  %1094 = vmatprep.subr.mxu0 0.0
  %1095 = vmatpush1.msra.mxu0 0.0
  %1096 = vmatprep.subr.mxu0 0.0
  %1097 = vmatpush1.msra.mxu0 0.0
  %1098 = vmatprep.subr.mxu0 0.0
  %1099 = vmatpush1.msra.mxu0 0.0
  %1100 = vmatprep.subr.mxu0 0.0
  %1101 = vmatpush1.msra.mxu0 0.0
  %1102 = vmatprep.subr.mxu0 0.0
  %1103 = vmatpush1.msra.mxu0 0.0
  %1104 = vmatprep.subr.mxu0 0.0
  %1105 = vmatpush1.msra.mxu0 0.0
  %1106 = vmatprep.subr.mxu0 0.0
  %1107 = vmatpush1.msra.mxu0 0.0
  %1108 = vmatprep.subr.mxu0 0.0
  %1109 = vmatpush1.msra.mxu0 0.0
  %1110 = vmatprep.subr.mxu0 0.0
  %1111 = vmatpush1.msra.mxu0 0.0
  %1112 = vmatprep.subr.mxu0 0.0
  %1113 = vmatpush1.msra.mxu0 0.0
  %1114 = vmatprep.subr.mxu0 0.0
  %1115 = vmatpush1.msra.mxu0 0.0
  %1116 = vmatprep.subr.mxu0 0.0
  %1117 = vmatpush1.msra.mxu0 0.0
  %1118 = vmatprep.subr.mxu0 0.0
  %1119 = vmatpush1.msra.mxu0 0.0
  %1120 = vmatprep.mubr.f32.mxu0 0.0
  %1121 = vmatmul.mubr.f32.gmra.mrb[0].mxu0 %v815
  %v1122 = vpop.f32.mrb[0].mxu0
  %v1123 = vadd.f32 0.0, %v1122
  %v1124 = vpop.f32.mrb[0].mxu0
  %v1125 = vadd.f32 0.0, %v1124
  %1126 = vdwg.mxu0
  %v1131 = vcombine.low %v1052, %v1054
  %v1132 = vcombine.low %v1123, %v1125
  %v1134 = vunpack.c.l.s4 1983009808
  %v1135 = vunpack.c.0.s8 %v1134
  %v1136 = vlaneseq
  %v1137 = vshrl.u32 %v1136, 7
  %v1138 = vsub.s32 %v1135, %v1137
  %v1139 = vrot.slane %v1131, %v1138
  %v1141 = vunpack.c.l.s4 1983009808
  %v1142 = vunpack.c.0.s8 %v1141
  %v1143 = vlaneseq
  %v1144 = vshrl.u32 %v1143, 7
  %v1145 = vsub.s32 %v1142, %v1144
  %v1146 = vrot.slane %v1132, %v1145
  %v1147 = vcombine.low %v1139, %v1146
  %v1149 = vadd.f32 %v984, %v1147
  %v1150 = vxor.u32 %v1149, 2147483648
  %v1151 = vmul.f32 %v1150, 1.442695
  %v1152 = vpow.pop %v1151
  %v1153 = vadd.f32 %v1152, 1.0
  %v1154 = vrcp.pop %v1153
  %v1155 = vmul.f32 1.0, %v1154
  %v1157 = vrot.slane %v1149, 2
  %v1159 = vxor.u32 %v1157, 2147483648
  %v1160 = vmul.f32 %v1159, 1.442695
  %v1161 = vpow.pop %v1160
  %v1162 = vadd.f32 %v1161, 1.0
  %v1163 = vrcp.pop %v1162
  %v1164 = vmul.f32 1.0, %v1163
  %v1165 = vrot.slane %v1149, 4
  %v1167 = vtanh.pop %v1165
  %v1168 = vrot.slane %v1149, 6
  %v1170 = vxor.u32 %v1168, 2147483648
  %v1171 = vmul.f32 %v1170, 1.442695
  %v1172 = vpow.pop %v1171
  %v1173 = vadd.f32 %v1172, 1.0
  %v1174 = vrcp.pop %v1173
  %v1175 = vmul.f32 1.0, %v1174
  %v1176 = vmul.f32 %v1164, %v813
  %v1177 = vmul.f32 %v1155, %v1167
  %v1178 = vadd.f32 %v1176, %v1177
  %v1179 = vtanh.pop %v1178
  %v1180 = vmul.f32 %v1175, %v1179
  %1181 = vmatprep.subr.mxu0 %v470
  %1182 = vmatpush1.msra.mxu0 %v469
  %1183 = vmatprep.subr.mxu0 %v474
  %1184 = vmatpush1.msra.mxu0 %v473
  %1185 = vmatprep.subr.mxu0 %v478
  %1186 = vmatpush1.msra.mxu0 %v477
  %1187 = vmatprep.subr.mxu0 %v482
  %1188 = vmatpush1.msra.mxu0 %v481
  %1189 = vmatprep.subr.mxu0 %v486
  %1190 = vmatpush1.msra.mxu0 %v485
  %1191 = vmatprep.subr.mxu0 %v490
  %1192 = vmatpush1.msra.mxu0 %v489
  %1193 = vmatprep.subr.mxu0 %v494
  %1194 = vmatpush1.msra.mxu0 %v493
  %1195 = vmatprep.subr.mxu0 %v498
  %1196 = vmatpush1.msra.mxu0 %v497
  %1197 = vmatprep.subr.mxu0 %v502
  %1198 = vmatpush1.msra.mxu0 %v501
  %1199 = vmatprep.subr.mxu0 %v506
  %1200 = vmatpush1.msra.mxu0 %v505
  %1201 = vmatprep.subr.mxu0 %v510
  %1202 = vmatpush1.msra.mxu0 %v509
  %1203 = vmatprep.subr.mxu0 %v514
  %1204 = vmatpush1.msra.mxu0 %v513
  %1205 = vmatprep.subr.mxu0 %v518
  %1206 = vmatpush1.msra.mxu0 %v517
  %1207 = vmatprep.subr.mxu0 %v522
  %1208 = vmatpush1.msra.mxu0 %v521
  %1209 = vmatprep.subr.mxu0 %v526
  %1210 = vmatpush1.msra.mxu0 %v525
  %1211 = vmatprep.subr.mxu0 %v530
  %1212 = vmatpush1.msra.mxu0 %v529
  %1213 = vmatprep.subr.mxu0 %v534
  %1214 = vmatpush1.msra.mxu0 %v533
  %1215 = vmatprep.subr.mxu0 %v538
  %1216 = vmatpush1.msra.mxu0 %v537
  %1217 = vmatprep.subr.mxu0 %v542
  %1218 = vmatpush1.msra.mxu0 %v541
  %1219 = vmatprep.subr.mxu0 %v546
  %1220 = vmatpush1.msra.mxu0 %v545
  %1221 = vmatprep.subr.mxu0 %v550
  %1222 = vmatpush1.msra.mxu0 %v549
  %1223 = vmatprep.subr.mxu0 %v554
  %1224 = vmatpush1.msra.mxu0 %v553
  %1225 = vmatprep.subr.mxu0 %v558
  %1226 = vmatpush1.msra.mxu0 %v557
  %1227 = vmatprep.subr.mxu0 %v562
  %1228 = vmatpush1.msra.mxu0 %v561
  %1229 = vmatprep.subr.mxu0 %v566
  %1230 = vmatpush1.msra.mxu0 %v565
  %1231 = vmatprep.subr.mxu0 %v570
  %1232 = vmatpush1.msra.mxu0 %v569
  %1233 = vmatprep.subr.mxu0 %v574
  %1234 = vmatpush1.msra.mxu0 %v573
  %1235 = vmatprep.subr.mxu0 %v578
  %1236 = vmatpush1.msra.mxu0 %v577
  %1237 = vmatprep.subr.mxu0 %v582
  %1238 = vmatpush1.msra.mxu0 %v581
  %1239 = vmatprep.subr.mxu0 %v586
  %1240 = vmatpush1.msra.mxu0 %v585
  %1241 = vmatprep.subr.mxu0 %v590
  %1242 = vmatpush1.msra.mxu0 %v589
  %1243 = vmatprep.subr.mxu0 %v594
  %1244 = vmatpush1.msra.mxu0 %v593
  %1245 = vmatprep.mubr.f32.mxu0 %v981
  %1246 = vmatmul.mubr.f32.gmra.mrb[0].mxu0 %v1180
  %v1247 = vpop.f32.mrb[0].mxu0
  %v1248 = vadd.f32 %v602, %v1247
  %v1249 = vpop.f32.mrb[0].mxu0
  %v1250 = vadd.f32 %v606, %v1249
  %1251 = vdwg.mxu0
  %1252 = vmatprep.subr.mxu0 %v472
  %1253 = vmatpush1.msra.mxu0 %v471
  %1254 = vmatprep.subr.mxu0 %v476
  %1255 = vmatpush1.msra.mxu0 %v475
  %1256 = vmatprep.subr.mxu0 %v480
  %1257 = vmatpush1.msra.mxu0 %v479
  %1258 = vmatprep.subr.mxu0 %v484
  %1259 = vmatpush1.msra.mxu0 %v483
  %1260 = vmatprep.subr.mxu0 %v488
  %1261 = vmatpush1.msra.mxu0 %v487
  %1262 = vmatprep.subr.mxu0 %v492
  %1263 = vmatpush1.msra.mxu0 %v491
  %1264 = vmatprep.subr.mxu0 %v496
  %1265 = vmatpush1.msra.mxu0 %v495
  %1266 = vmatprep.subr.mxu0 %v500
  %1267 = vmatpush1.msra.mxu0 %v499
  %1268 = vmatprep.subr.mxu0 %v504
  %1269 = vmatpush1.msra.mxu0 %v503
  %1270 = vmatprep.subr.mxu0 %v508
  %1271 = vmatpush1.msra.mxu0 %v507
  %1272 = vmatprep.subr.mxu0 %v512
  %1273 = vmatpush1.msra.mxu0 %v511
  %1274 = vmatprep.subr.mxu0 %v516
  %1275 = vmatpush1.msra.mxu0 %v515
  %1276 = vmatprep.subr.mxu0 %v520
  %1277 = vmatpush1.msra.mxu0 %v519
  %1278 = vmatprep.subr.mxu0 %v524
  %1279 = vmatpush1.msra.mxu0 %v523
  %1280 = vmatprep.subr.mxu0 %v528
  %1281 = vmatpush1.msra.mxu0 %v527
  %1282 = vmatprep.subr.mxu0 %v532
  %1283 = vmatpush1.msra.mxu0 %v531
  %1284 = vmatprep.subr.mxu0 %v536
  %1285 = vmatpush1.msra.mxu0 %v535
  %1286 = vmatprep.subr.mxu0 %v540
  %1287 = vmatpush1.msra.mxu0 %v539
  %1288 = vmatprep.subr.mxu0 %v544
  %1289 = vmatpush1.msra.mxu0 %v543
  %1290 = vmatprep.subr.mxu0 %v548
  %1291 = vmatpush1.msra.mxu0 %v547
  %1292 = vmatprep.subr.mxu0 %v552
  %1293 = vmatpush1.msra.mxu0 %v551
  %1294 = vmatprep.subr.mxu0 %v556
  %1295 = vmatpush1.msra.mxu0 %v555
  %1296 = vmatprep.subr.mxu0 %v560
  %1297 = vmatpush1.msra.mxu0 %v559
  %1298 = vmatprep.subr.mxu0 %v564
  %1299 = vmatpush1.msra.mxu0 %v563
  %1300 = vmatprep.subr.mxu0 %v568
  %1301 = vmatpush1.msra.mxu0 %v567
  %1302 = vmatprep.subr.mxu0 %v572
  %1303 = vmatpush1.msra.mxu0 %v571
  %1304 = vmatprep.subr.mxu0 %v576
  %1305 = vmatpush1.msra.mxu0 %v575
  %1306 = vmatprep.subr.mxu0 %v580
  %1307 = vmatpush1.msra.mxu0 %v579
  %1308 = vmatprep.subr.mxu0 %v584
  %1309 = vmatpush1.msra.mxu0 %v583
  %1310 = vmatprep.subr.mxu0 %v588
  %1311 = vmatpush1.msra.mxu0 %v587
  %1312 = vmatprep.subr.mxu0 %v592
  %1313 = vmatpush1.msra.mxu0 %v591
  %1314 = vmatprep.subr.mxu0 %v596
  %1315 = vmatpush1.msra.mxu0 %v595
  %1316 = vmatprep.mubr.f32.mxu0 %v981
  %1317 = vmatmul.mubr.f32.gmra.mrb[0].mxu0 %v1180
  %v1318 = vpop.f32.mrb[0].mxu0
  %v1319 = vadd.f32 %v610, %v1318
  %v1320 = vpop.f32.mrb[0].mxu0
  %v1321 = vadd.f32 %v614, %v1320
  %1322 = vdwg.mxu0
  %v1323 = vxor.u32 %v1248, 2147483648
  %v1324 = vmul.f32 %v1323, 1.442695
  %v1325 = vpow.pop %v1324
  %v1326 = vadd.f32 %v1325, 1.0
  %v1327 = vrcp.pop %v1326
  %v1328 = vmul.f32 1.0, %v1327
  %v1329 = vxor.u32 %v1250, 2147483648
  %v1330 = vmul.f32 %v1329, 1.442695
  %v1331 = vpow.pop %v1330
  %v1332 = vadd.f32 %v1331, 1.0
  %v1333 = vrcp.pop %v1332
  %v1334 = vmul.f32 1.0, %v1333
  %v1335 = vtanh.pop %v1319
  %v1336 = vxor.u32 %v1321, 2147483648
  %v1337 = vmul.f32 %v1336, 1.442695
  %v1338 = vpow.pop %v1337
  %v1339 = vadd.f32 %v1338, 1.0
  %v1340 = vrcp.pop %v1339
  %v1341 = vmul.f32 1.0, %v1340
  %v1342 = vmul.f32 %v1334, %v979
  %v1343 = vmul.f32 %v1328, %v1335
  %v1344 = vadd.f32 %v1342, %v1343
  %v1345 = vtanh.pop %v1344
  %v1346 = vmul.f32 %v1341, %v1345
  %s1347 = scalar_lea.vmem [#allocation3], 2
  %1348 = vst [vmem:[%s1347] sm:$0x3] %v1346
  %s1349 = scalar_lea.vmem [#allocation2], 16
  %v1350 = vld [vmem:[%s1349] sm:$0xff]
  %1351 = vmatprep.subr.mxu0 %v406
  %1352 = vmatpush1.msra.mxu0 %v405
  %1353 = vmatprep.subr.mxu0 %v410
  %1354 = vmatpush1.msra.mxu0 %v409
  %1355 = vmatprep.subr.mxu0 %v414
  %1356 = vmatpush1.msra.mxu0 %v413
  %1357 = vmatprep.subr.mxu0 %v418
  %1358 = vmatpush1.msra.mxu0 %v417
  %1359 = vmatprep.subr.mxu0 %v422
  %1360 = vmatpush1.msra.mxu0 %v421
  %1361 = vmatprep.subr.mxu0 %v426
  %1362 = vmatpush1.msra.mxu0 %v425
  %1363 = vmatprep.subr.mxu0 %v430
  %1364 = vmatpush1.msra.mxu0 %v429
  %1365 = vmatprep.subr.mxu0 %v434
  %1366 = vmatpush1.msra.mxu0 %v433
  %1367 = vmatprep.subr.mxu0 %v438
  %1368 = vmatpush1.msra.mxu0 %v437
  %1369 = vmatprep.subr.mxu0 %v442
  %1370 = vmatpush1.msra.mxu0 %v441
  %1371 = vmatprep.subr.mxu0 %v446
  %1372 = vmatpush1.msra.mxu0 %v445
  %1373 = vmatprep.subr.mxu0 %v450
  %1374 = vmatpush1.msra.mxu0 %v449
  %1375 = vmatprep.subr.mxu0 %v454
  %1376 = vmatpush1.msra.mxu0 %v453
  %1377 = vmatprep.subr.mxu0 %v458
  %1378 = vmatpush1.msra.mxu0 %v457
  %1379 = vmatprep.subr.mxu0 %v462
  %1380 = vmatpush1.msra.mxu0 %v461
  %1381 = vmatprep.subr.mxu0 %v466
  %1382 = vmatpush1.msra.mxu0 %v465
  %1383 = vmatprep.subr.mxu0 0.0
  %1384 = vmatpush1.msra.mxu0 0.0
  %1385 = vmatprep.subr.mxu0 0.0
  %1386 = vmatpush1.msra.mxu0 0.0
  %1387 = vmatprep.subr.mxu0 0.0
  %1388 = vmatpush1.msra.mxu0 0.0
  %1389 = vmatprep.subr.mxu0 0.0
  %1390 = vmatpush1.msra.mxu0 0.0
  %1391 = vmatprep.subr.mxu0 0.0
  %1392 = vmatpush1.msra.mxu0 0.0
  %1393 = vmatprep.subr.mxu0 0.0
  %1394 = vmatpush1.msra.mxu0 0.0
  %1395 = vmatprep.subr.mxu0 0.0
  %1396 = vmatpush1.msra.mxu0 0.0
  %1397 = vmatprep.subr.mxu0 0.0
  %1398 = vmatpush1.msra.mxu0 0.0
  %1399 = vmatprep.subr.mxu0 0.0
  %1400 = vmatpush1.msra.mxu0 0.0
  %1401 = vmatprep.subr.mxu0 0.0
  %1402 = vmatpush1.msra.mxu0 0.0
  %1403 = vmatprep.subr.mxu0 0.0
  %1404 = vmatpush1.msra.mxu0 0.0
  %1405 = vmatprep.subr.mxu0 0.0
  %1406 = vmatpush1.msra.mxu0 0.0
  %1407 = vmatprep.subr.mxu0 0.0
  %1408 = vmatpush1.msra.mxu0 0.0
  %1409 = vmatprep.subr.mxu0 0.0
  %1410 = vmatpush1.msra.mxu0 0.0
  %1411 = vmatprep.subr.mxu0 0.0
  %1412 = vmatpush1.msra.mxu0 0.0
  %1413 = vmatprep.subr.mxu0 0.0
  %1414 = vmatpush1.msra.mxu0 0.0
  %1415 = vmatprep.mubr.f32.mxu0 0.0
  %1416 = vmatmul.mubr.f32.gmra.mrb[0].mxu0 %v1180
  %v1417 = vpop.f32.mrb[0].mxu0
  %v1418 = vadd.f32 0.0, %v1417
  %v1419 = vpop.f32.mrb[0].mxu0
  %v1420 = vadd.f32 0.0, %v1419
  %1421 = vdwg.mxu0
  %1422 = vmatprep.subr.mxu0 %v408
  %1423 = vmatpush1.msra.mxu0 %v407
  %1424 = vmatprep.subr.mxu0 %v412
  %1425 = vmatpush1.msra.mxu0 %v411
  %1426 = vmatprep.subr.mxu0 %v416
  %1427 = vmatpush1.msra.mxu0 %v415
  %1428 = vmatprep.subr.mxu0 %v420
  %1429 = vmatpush1.msra.mxu0 %v419
  %1430 = vmatprep.subr.mxu0 %v424
  %1431 = vmatpush1.msra.mxu0 %v423
  %1432 = vmatprep.subr.mxu0 %v428
  %1433 = vmatpush1.msra.mxu0 %v427
  %1434 = vmatprep.subr.mxu0 %v432
  %1435 = vmatpush1.msra.mxu0 %v431
  %1436 = vmatprep.subr.mxu0 %v436
  %1437 = vmatpush1.msra.mxu0 %v435
  %1438 = vmatprep.subr.mxu0 %v440
  %1439 = vmatpush1.msra.mxu0 %v439
  %1440 = vmatprep.subr.mxu0 %v444
  %1441 = vmatpush1.msra.mxu0 %v443
  %1442 = vmatprep.subr.mxu0 %v448
  %1443 = vmatpush1.msra.mxu0 %v447
  %1444 = vmatprep.subr.mxu0 %v452
  %1445 = vmatpush1.msra.mxu0 %v451
  %1446 = vmatprep.subr.mxu0 %v456
  %1447 = vmatpush1.msra.mxu0 %v455
  %1448 = vmatprep.subr.mxu0 %v460
  %1449 = vmatpush1.msra.mxu0 %v459
  %1450 = vmatprep.subr.mxu0 %v464
  %1451 = vmatpush1.msra.mxu0 %v463
  %1452 = vmatprep.subr.mxu0 %v468
  %1453 = vmatpush1.msra.mxu0 %v467
  %1454 = vmatprep.subr.mxu0 0.0
  %1455 = vmatpush1.msra.mxu0 0.0
  %1456 = vmatprep.subr.mxu0 0.0
  %1457 = vmatpush1.msra.mxu0 0.0
  %1458 = vmatprep.subr.mxu0 0.0
  %1459 = vmatpush1.msra.mxu0 0.0
  %1460 = vmatprep.subr.mxu0 0.0
  %1461 = vmatpush1.msra.mxu0 0.0
  %1462 = vmatprep.subr.mxu0 0.0
  %1463 = vmatpush1.msra.mxu0 0.0
  %1464 = vmatprep.subr.mxu0 0.0
  %1465 = vmatpush1.msra.mxu0 0.0
  %1466 = vmatprep.subr.mxu0 0.0
  %1467 = vmatpush1.msra.mxu0 0.0
  %1468 = vmatprep.subr.mxu0 0.0
  %1469 = vmatpush1.msra.mxu0 0.0
  %1470 = vmatprep.subr.mxu0 0.0
  %1471 = vmatpush1.msra.mxu0 0.0
  %1472 = vmatprep.subr.mxu0 0.0
  %1473 = vmatpush1.msra.mxu0 0.0
  %1474 = vmatprep.subr.mxu0 0.0
  %1475 = vmatpush1.msra.mxu0 0.0
  %1476 = vmatprep.subr.mxu0 0.0
  %1477 = vmatpush1.msra.mxu0 0.0
  %1478 = vmatprep.subr.mxu0 0.0
  %1479 = vmatpush1.msra.mxu0 0.0
  %1480 = vmatprep.subr.mxu0 0.0
  %1481 = vmatpush1.msra.mxu0 0.0
  %1482 = vmatprep.subr.mxu0 0.0
  %1483 = vmatpush1.msra.mxu0 0.0
  %1484 = vmatprep.subr.mxu0 0.0
  %1485 = vmatpush1.msra.mxu0 0.0
  %1486 = vmatprep.mubr.f32.mxu0 0.0
  %1487 = vmatmul.mubr.f32.gmra.mrb[0].mxu0 %v1180
  %v1488 = vpop.f32.mrb[0].mxu0
  %v1489 = vadd.f32 0.0, %v1488
  %v1490 = vpop.f32.mrb[0].mxu0
  %v1491 = vadd.f32 0.0, %v1490
  %1492 = vdwg.mxu0
  %v1497 = vcombine.low %v1418, %v1420
  %v1498 = vcombine.low %v1489, %v1491
  %v1500 = vunpack.c.l.s4 1983009808
  %v1501 = vunpack.c.0.s8 %v1500
  %v1502 = vlaneseq
  %v1503 = vshrl.u32 %v1502, 7
  %v1504 = vsub.s32 %v1501, %v1503
  %v1505 = vrot.slane %v1497, %v1504
  %v1507 = vunpack.c.l.s4 1983009808
  %v1508 = vunpack.c.0.s8 %v1507
  %v1509 = vlaneseq
  %v1510 = vshrl.u32 %v1509, 7
  %v1511 = vsub.s32 %v1508, %v1510
  %v1512 = vrot.slane %v1498, %v1511
  %v1513 = vcombine.low %v1505, %v1512
  %v1515 = vadd.f32 %v1350, %v1513
  %v1516 = vxor.u32 %v1515, 2147483648
  %v1517 = vmul.f32 %v1516, 1.442695
  %v1518 = vpow.pop %v1517
  %v1519 = vadd.f32 %v1518, 1.0
  %v1520 = vrcp.pop %v1519
  %v1521 = vmul.f32 1.0, %v1520
  %v1523 = vrot.slane %v1515, 2
  %v1525 = vxor.u32 %v1523, 2147483648
  %v1526 = vmul.f32 %v1525, 1.442695
  %v1527 = vpow.pop %v1526
  %v1528 = vadd.f32 %v1527, 1.0
  %v1529 = vrcp.pop %v1528
  %v1530 = vmul.f32 1.0, %v1529
  %v1531 = vrot.slane %v1515, 4
  %v1533 = vtanh.pop %v1531
  %v1534 = vrot.slane %v1515, 6
  %v1536 = vxor.u32 %v1534, 2147483648
  %v1537 = vmul.f32 %v1536, 1.442695
  %v1538 = vpow.pop %v1537
  %v1539 = vadd.f32 %v1538, 1.0
  %v1540 = vrcp.pop %v1539
  %v1541 = vmul.f32 1.0, %v1540
  %v1542 = vmul.f32 %v1530, %v1178
  %v1543 = vmul.f32 %v1521, %v1533
  %v1544 = vadd.f32 %v1542, %v1543
  %v1545 = vtanh.pop %v1544
  %v1546 = vmul.f32 %v1541, %v1545
  %1547 = vmatprep.subr.mxu0 %v470
  %1548 = vmatpush1.msra.mxu0 %v469
  %1549 = vmatprep.subr.mxu0 %v474
  %1550 = vmatpush1.msra.mxu0 %v473
  %1551 = vmatprep.subr.mxu0 %v478
  %1552 = vmatpush1.msra.mxu0 %v477
  %1553 = vmatprep.subr.mxu0 %v482
  %1554 = vmatpush1.msra.mxu0 %v481
  %1555 = vmatprep.subr.mxu0 %v486
  %1556 = vmatpush1.msra.mxu0 %v485
  %1557 = vmatprep.subr.mxu0 %v490
  %1558 = vmatpush1.msra.mxu0 %v489
  %1559 = vmatprep.subr.mxu0 %v494
  %1560 = vmatpush1.msra.mxu0 %v493
  %1561 = vmatprep.subr.mxu0 %v498
  %1562 = vmatpush1.msra.mxu0 %v497
  %1563 = vmatprep.subr.mxu0 %v502
  %1564 = vmatpush1.msra.mxu0 %v501
  %1565 = vmatprep.subr.mxu0 %v506
  %1566 = vmatpush1.msra.mxu0 %v505
  %1567 = vmatprep.subr.mxu0 %v510
  %1568 = vmatpush1.msra.mxu0 %v509
  %1569 = vmatprep.subr.mxu0 %v514
  %1570 = vmatpush1.msra.mxu0 %v513
  %1571 = vmatprep.subr.mxu0 %v518
  %1572 = vmatpush1.msra.mxu0 %v517
  %1573 = vmatprep.subr.mxu0 %v522
  %1574 = vmatpush1.msra.mxu0 %v521
  %1575 = vmatprep.subr.mxu0 %v526
  %1576 = vmatpush1.msra.mxu0 %v525
  %1577 = vmatprep.subr.mxu0 %v530
  %1578 = vmatpush1.msra.mxu0 %v529
  %1579 = vmatprep.subr.mxu0 %v534
  %1580 = vmatpush1.msra.mxu0 %v533
  %1581 = vmatprep.subr.mxu0 %v538
  %1582 = vmatpush1.msra.mxu0 %v537
  %1583 = vmatprep.subr.mxu0 %v542
  %1584 = vmatpush1.msra.mxu0 %v541
  %1585 = vmatprep.subr.mxu0 %v546
  %1586 = vmatpush1.msra.mxu0 %v545
  %1587 = vmatprep.subr.mxu0 %v550
  %1588 = vmatpush1.msra.mxu0 %v549
  %1589 = vmatprep.subr.mxu0 %v554
  %1590 = vmatpush1.msra.mxu0 %v553
  %1591 = vmatprep.subr.mxu0 %v558
  %1592 = vmatpush1.msra.mxu0 %v557
  %1593 = vmatprep.subr.mxu0 %v562
  %1594 = vmatpush1.msra.mxu0 %v561
  %1595 = vmatprep.subr.mxu0 %v566
  %1596 = vmatpush1.msra.mxu0 %v565
  %1597 = vmatprep.subr.mxu0 %v570
  %1598 = vmatpush1.msra.mxu0 %v569
  %1599 = vmatprep.subr.mxu0 %v574
  %1600 = vmatpush1.msra.mxu0 %v573
  %1601 = vmatprep.subr.mxu0 %v578
  %1602 = vmatpush1.msra.mxu0 %v577
  %1603 = vmatprep.subr.mxu0 %v582
  %1604 = vmatpush1.msra.mxu0 %v581
  %1605 = vmatprep.subr.mxu0 %v586
  %1606 = vmatpush1.msra.mxu0 %v585
  %1607 = vmatprep.subr.mxu0 %v590
  %1608 = vmatpush1.msra.mxu0 %v589
  %1609 = vmatprep.subr.mxu0 %v594
  %1610 = vmatpush1.msra.mxu0 %v593
  %1611 = vmatprep.mubr.f32.mxu0 %v1346
  %1612 = vmatmul.mubr.f32.gmra.mrb[0].mxu0 %v1546
  %v1613 = vpop.f32.mrb[0].mxu0
  %v1614 = vadd.f32 %v602, %v1613
  %v1615 = vpop.f32.mrb[0].mxu0
  %v1616 = vadd.f32 %v606, %v1615
  %1617 = vdwg.mxu0
  %1618 = vmatprep.subr.mxu0 %v472
  %1619 = vmatpush1.msra.mxu0 %v471
  %1620 = vmatprep.subr.mxu0 %v476
  %1621 = vmatpush1.msra.mxu0 %v475
  %1622 = vmatprep.subr.mxu0 %v480
  %1623 = vmatpush1.msra.mxu0 %v479
  %1624 = vmatprep.subr.mxu0 %v484
  %1625 = vmatpush1.msra.mxu0 %v483
  %1626 = vmatprep.subr.mxu0 %v488
  %1627 = vmatpush1.msra.mxu0 %v487
  %1628 = vmatprep.subr.mxu0 %v492
  %1629 = vmatpush1.msra.mxu0 %v491
  %1630 = vmatprep.subr.mxu0 %v496
  %1631 = vmatpush1.msra.mxu0 %v495
  %1632 = vmatprep.subr.mxu0 %v500
  %1633 = vmatpush1.msra.mxu0 %v499
  %1634 = vmatprep.subr.mxu0 %v504
  %1635 = vmatpush1.msra.mxu0 %v503
  %1636 = vmatprep.subr.mxu0 %v508
  %1637 = vmatpush1.msra.mxu0 %v507
  %1638 = vmatprep.subr.mxu0 %v512
  %1639 = vmatpush1.msra.mxu0 %v511
  %1640 = vmatprep.subr.mxu0 %v516
  %1641 = vmatpush1.msra.mxu0 %v515
  %1642 = vmatprep.subr.mxu0 %v520
  %1643 = vmatpush1.msra.mxu0 %v519
  %1644 = vmatprep.subr.mxu0 %v524
  %1645 = vmatpush1.msra.mxu0 %v523
  %1646 = vmatprep.subr.mxu0 %v528
  %1647 = vmatpush1.msra.mxu0 %v527
  %1648 = vmatprep.subr.mxu0 %v532
  %1649 = vmatpush1.msra.mxu0 %v531
  %1650 = vmatprep.subr.mxu0 %v536
  %1651 = vmatpush1.msra.mxu0 %v535
  %1652 = vmatprep.subr.mxu0 %v540
  %1653 = vmatpush1.msra.mxu0 %v539
  %1654 = vmatprep.subr.mxu0 %v544
  %1655 = vmatpush1.msra.mxu0 %v543
  %1656 = vmatprep.subr.mxu0 %v548
  %1657 = vmatpush1.msra.mxu0 %v547
  %1658 = vmatprep.subr.mxu0 %v552
  %1659 = vmatpush1.msra.mxu0 %v551
  %1660 = vmatprep.subr.mxu0 %v556
  %1661 = vmatpush1.msra.mxu0 %v555
  %1662 = vmatprep.subr.mxu0 %v560
  %1663 = vmatpush1.msra.mxu0 %v559
  %1664 = vmatprep.subr.mxu0 %v564
  %1665 = vmatpush1.msra.mxu0 %v563
  %1666 = vmatprep.subr.mxu0 %v568
  %1667 = vmatpush1.msra.mxu0 %v567
  %1668 = vmatprep.subr.mxu0 %v572
  %1669 = vmatpush1.msra.mxu0 %v571
  %1670 = vmatprep.subr.mxu0 %v576
  %1671 = vmatpush1.msra.mxu0 %v575
  %1672 = vmatprep.subr.mxu0 %v580
  %1673 = vmatpush1.msra.mxu0 %v579
  %1674 = vmatprep.subr.mxu0 %v584
  %1675 = vmatpush1.msra.mxu0 %v583
  %1676 = vmatprep.subr.mxu0 %v588
  %1677 = vmatpush1.msra.mxu0 %v587
  %1678 = vmatprep.subr.mxu0 %v592
  %1679 = vmatpush1.msra.mxu0 %v591
  %1680 = vmatprep.subr.mxu0 %v596
  %1681 = vmatpush1.msra.mxu0 %v595
  %1682 = vmatprep.mubr.f32.mxu0 %v1346
  %1683 = vmatmul.mubr.f32.gmra.mrb[0].mxu0 %v1546
  %v1684 = vpop.f32.mrb[0].mxu0
  %v1685 = vadd.f32 %v610, %v1684
  %v1686 = vpop.f32.mrb[0].mxu0
  %v1687 = vadd.f32 %v614, %v1686
  %1688 = vdwg.mxu0
  %v1689 = vxor.u32 %v1614, 2147483648
  %v1690 = vmul.f32 %v1689, 1.442695
  %v1691 = vpow.pop %v1690
  %v1692 = vadd.f32 %v1691, 1.0
  %v1693 = vrcp.pop %v1692
  %v1694 = vmul.f32 1.0, %v1693
  %v1695 = vxor.u32 %v1616, 2147483648
  %v1696 = vmul.f32 %v1695, 1.442695
  %v1697 = vpow.pop %v1696
  %v1698 = vadd.f32 %v1697, 1.0
  %v1699 = vrcp.pop %v1698
  %v1700 = vmul.f32 1.0, %v1699
  %v1701 = vtanh.pop %v1685
  %v1702 = vxor.u32 %v1687, 2147483648
  %v1703 = vmul.f32 %v1702, 1.442695
  %v1704 = vpow.pop %v1703
  %v1705 = vadd.f32 %v1704, 1.0
  %v1706 = vrcp.pop %v1705
  %v1707 = vmul.f32 1.0, %v1706
  %v1708 = vmul.f32 %v1700, %v1344
  %v1709 = vmul.f32 %v1694, %v1701
  %v1710 = vadd.f32 %v1708, %v1709
  %v1711 = vtanh.pop %v1710
  %v1712 = vmul.f32 %v1707, %v1711
  %s1713 = scalar_lea.vmem [#allocation3], 4
  %1714 = vst [vmem:[%s1713] sm:$0x3] %v1712
  %s1715 = scalar_lea.vmem [#allocation2], 24
  %v1716 = vld [vmem:[%s1715] sm:$0xff]
  %1717 = vmatprep.subr.mxu0 %v406
  %1718 = vmatpush1.msra.mxu0 %v405
  %1719 = vmatprep.subr.mxu0 %v410
  %1720 = vmatpush1.msra.mxu0 %v409
  %1721 = vmatprep.subr.mxu0 %v414
  %1722 = vmatpush1.msra.mxu0 %v413
  %1723 = vmatprep.subr.mxu0 %v418
  %1724 = vmatpush1.msra.mxu0 %v417
  %1725 = vmatprep.subr.mxu0 %v422
  %1726 = vmatpush1.msra.mxu0 %v421
  %1727 = vmatprep.subr.mxu0 %v426
  %1728 = vmatpush1.msra.mxu0 %v425
  %1729 = vmatprep.subr.mxu0 %v430
  %1730 = vmatpush1.msra.mxu0 %v429
  %1731 = vmatprep.subr.mxu0 %v434
  %1732 = vmatpush1.msra.mxu0 %v433
  %1733 = vmatprep.subr.mxu0 %v438
  %1734 = vmatpush1.msra.mxu0 %v437
  %1735 = vmatprep.subr.mxu0 %v442
  %1736 = vmatpush1.msra.mxu0 %v441
  %1737 = vmatprep.subr.mxu0 %v446
  %1738 = vmatpush1.msra.mxu0 %v445
  %1739 = vmatprep.subr.mxu0 %v450
  %1740 = vmatpush1.msra.mxu0 %v449
  %1741 = vmatprep.subr.mxu0 %v454
  %1742 = vmatpush1.msra.mxu0 %v453
  %1743 = vmatprep.subr.mxu0 %v458
  %1744 = vmatpush1.msra.mxu0 %v457
  %1745 = vmatprep.subr.mxu0 %v462
  %1746 = vmatpush1.msra.mxu0 %v461
  %1747 = vmatprep.subr.mxu0 %v466
  %1748 = vmatpush1.msra.mxu0 %v465
  %1749 = vmatprep.subr.mxu0 0.0
  %1750 = vmatpush1.msra.mxu0 0.0
  %1751 = vmatprep.subr.mxu0 0.0
  %1752 = vmatpush1.msra.mxu0 0.0
  %1753 = vmatprep.subr.mxu0 0.0
  %1754 = vmatpush1.msra.mxu0 0.0
  %1755 = vmatprep.subr.mxu0 0.0
  %1756 = vmatpush1.msra.mxu0 0.0
  %1757 = vmatprep.subr.mxu0 0.0
  %1758 = vmatpush1.msra.mxu0 0.0
  %1759 = vmatprep.subr.mxu0 0.0
  %1760 = vmatpush1.msra.mxu0 0.0
  %1761 = vmatprep.subr.mxu0 0.0
  %1762 = vmatpush1.msra.mxu0 0.0
  %1763 = vmatprep.subr.mxu0 0.0
  %1764 = vmatpush1.msra.mxu0 0.0
  %1765 = vmatprep.subr.mxu0 0.0
  %1766 = vmatpush1.msra.mxu0 0.0
  %1767 = vmatprep.subr.mxu0 0.0
  %1768 = vmatpush1.msra.mxu0 0.0
  %1769 = vmatprep.subr.mxu0 0.0
  %1770 = vmatpush1.msra.mxu0 0.0
  %1771 = vmatprep.subr.mxu0 0.0
  %1772 = vmatpush1.msra.mxu0 0.0
  %1773 = vmatprep.subr.mxu0 0.0
  %1774 = vmatpush1.msra.mxu0 0.0
  %1775 = vmatprep.subr.mxu0 0.0
  %1776 = vmatpush1.msra.mxu0 0.0
  %1777 = vmatprep.subr.mxu0 0.0
  %1778 = vmatpush1.msra.mxu0 0.0
  %1779 = vmatprep.subr.mxu0 0.0
  %1780 = vmatpush1.msra.mxu0 0.0
  %1781 = vmatprep.mubr.f32.mxu0 0.0
  %1782 = vmatmul.mubr.f32.gmra.mrb[0].mxu0 %v1546
  %v1783 = vpop.f32.mrb[0].mxu0
  %v1784 = vadd.f32 0.0, %v1783
  %v1785 = vpop.f32.mrb[0].mxu0
  %v1786 = vadd.f32 0.0, %v1785
  %1787 = vdwg.mxu0
  %1788 = vmatprep.subr.mxu0 %v408
  %1789 = vmatpush1.msra.mxu0 %v407
  %1790 = vmatprep.subr.mxu0 %v412
  %1791 = vmatpush1.msra.mxu0 %v411
  %1792 = vmatprep.subr.mxu0 %v416
  %1793 = vmatpush1.msra.mxu0 %v415
  %1794 = vmatprep.subr.mxu0 %v420
  %1795 = vmatpush1.msra.mxu0 %v419
  %1796 = vmatprep.subr.mxu0 %v424
  %1797 = vmatpush1.msra.mxu0 %v423
  %1798 = vmatprep.subr.mxu0 %v428
  %1799 = vmatpush1.msra.mxu0 %v427
  %1800 = vmatprep.subr.mxu0 %v432
  %1801 = vmatpush1.msra.mxu0 %v431
  %1802 = vmatprep.subr.mxu0 %v436
  %1803 = vmatpush1.msra.mxu0 %v435
  %1804 = vmatprep.subr.mxu0 %v440
  %1805 = vmatpush1.msra.mxu0 %v439
  %1806 = vmatprep.subr.mxu0 %v444
  %1807 = vmatpush1.msra.mxu0 %v443
  %1808 = vmatprep.subr.mxu0 %v448
  %1809 = vmatpush1.msra.mxu0 %v447
  %1810 = vmatprep.subr.mxu0 %v452
  %1811 = vmatpush1.msra.mxu0 %v451
  %1812 = vmatprep.subr.mxu0 %v456
  %1813 = vmatpush1.msra.mxu0 %v455
  %1814 = vmatprep.subr.mxu0 %v460
  %1815 = vmatpush1.msra.mxu0 %v459
  %1816 = vmatprep.subr.mxu0 %v464
  %1817 = vmatpush1.msra.mxu0 %v463
  %1818 = vmatprep.subr.mxu0 %v468
  %1819 = vmatpush1.msra.mxu0 %v467
  %1820 = vmatprep.subr.mxu0 0.0
  %1821 = vmatpush1.msra.mxu0 0.0
  %1822 = vmatprep.subr.mxu0 0.0
  %1823 = vmatpush1.msra.mxu0 0.0
  %1824 = vmatprep.subr.mxu0 0.0
  %1825 = vmatpush1.msra.mxu0 0.0
  %1826 = vmatprep.subr.mxu0 0.0
  %1827 = vmatpush1.msra.mxu0 0.0
  %1828 = vmatprep.subr.mxu0 0.0
  %1829 = vmatpush1.msra.mxu0 0.0
  %1830 = vmatprep.subr.mxu0 0.0
  %1831 = vmatpush1.msra.mxu0 0.0
  %1832 = vmatprep.subr.mxu0 0.0
  %1833 = vmatpush1.msra.mxu0 0.0
  %1834 = vmatprep.subr.mxu0 0.0
  %1835 = vmatpush1.msra.mxu0 0.0
  %1836 = vmatprep.subr.mxu0 0.0
  %1837 = vmatpush1.msra.mxu0 0.0
  %1838 = vmatprep.subr.mxu0 0.0
  %1839 = vmatpush1.msra.mxu0 0.0
  %1840 = vmatprep.subr.mxu0 0.0
  %1841 = vmatpush1.msra.mxu0 0.0
  %1842 = vmatprep.subr.mxu0 0.0
  %1843 = vmatpush1.msra.mxu0 0.0
  %1844 = vmatprep.subr.mxu0 0.0
  %1845 = vmatpush1.msra.mxu0 0.0
  %1846 = vmatprep.subr.mxu0 0.0
  %1847 = vmatpush1.msra.mxu0 0.0
  %1848 = vmatprep.subr.mxu0 0.0
  %1849 = vmatpush1.msra.mxu0 0.0
  %1850 = vmatprep.subr.mxu0 0.0
  %1851 = vmatpush1.msra.mxu0 0.0
  %1852 = vmatprep.mubr.f32.mxu0 0.0
  %1853 = vmatmul.mubr.f32.gmra.mrb[0].mxu0 %v1546
  %v1854 = vpop.f32.mrb[0].mxu0
  %v1855 = vadd.f32 0.0, %v1854
  %v1856 = vpop.f32.mrb[0].mxu0
  %v1857 = vadd.f32 0.0, %v1856
  %1858 = vdwg.mxu0
  %v1863 = vcombine.low %v1784, %v1786
  %v1864 = vcombine.low %v1855, %v1857
  %v1866 = vunpack.c.l.s4 1983009808
  %v1867 = vunpack.c.0.s8 %v1866
  %v1868 = vlaneseq
  %v1869 = vshrl.u32 %v1868, 7
  %v1870 = vsub.s32 %v1867, %v1869
  %v1871 = vrot.slane %v1863, %v1870
  %v1873 = vunpack.c.l.s4 1983009808
  %v1874 = vunpack.c.0.s8 %v1873
  %v1875 = vlaneseq
  %v1876 = vshrl.u32 %v1875, 7
  %v1877 = vsub.s32 %v1874, %v1876
  %v1878 = vrot.slane %v1864, %v1877
  %v1879 = vcombine.low %v1871, %v1878
  %v1881 = vadd.f32 %v1716, %v1879
  %v1882 = vxor.u32 %v1881, 2147483648
  %v1883 = vmul.f32 %v1882, 1.442695
  %v1884 = vpow.pop %v1883
  %v1885 = vadd.f32 %v1884, 1.0
  %v1886 = vrcp.pop %v1885
  %v1887 = vmul.f32 1.0, %v1886
  %v1889 = vrot.slane %v1881, 2
  %v1891 = vxor.u32 %v1889, 2147483648
  %v1892 = vmul.f32 %v1891, 1.442695
  %v1893 = vpow.pop %v1892
  %v1894 = vadd.f32 %v1893, 1.0
  %v1895 = vrcp.pop %v1894
  %v1896 = vmul.f32 1.0, %v1895
  %v1897 = vrot.slane %v1881, 4
  %v1899 = vtanh.pop %v1897
  %v1900 = vrot.slane %v1881, 6
  %v1902 = vxor.u32 %v1900, 2147483648
  %v1903 = vmul.f32 %v1902, 1.442695
  %v1904 = vpow.pop %v1903
  %v1905 = vadd.f32 %v1904, 1.0
  %v1906 = vrcp.pop %v1905
  %v1907 = vmul.f32 1.0, %v1906
  %v1908 = vmul.f32 %v1896, %v1544
  %v1909 = vmul.f32 %v1887, %v1899
  %v1910 = vadd.f32 %v1908, %v1909
  %v1911 = vtanh.pop %v1910
  %v1912 = vmul.f32 %v1907, %v1911
  %1913 = vmatprep.subr.mxu0 %v470
  %1914 = vmatpush1.msra.mxu0 %v469
  %1915 = vmatprep.subr.mxu0 %v474
  %1916 = vmatpush1.msra.mxu0 %v473
  %1917 = vmatprep.subr.mxu0 %v478
  %1918 = vmatpush1.msra.mxu0 %v477
  %1919 = vmatprep.subr.mxu0 %v482
  %1920 = vmatpush1.msra.mxu0 %v481
  %1921 = vmatprep.subr.mxu0 %v486
  %1922 = vmatpush1.msra.mxu0 %v485
  %1923 = vmatprep.subr.mxu0 %v490
  %1924 = vmatpush1.msra.mxu0 %v489
  %1925 = vmatprep.subr.mxu0 %v494
  %1926 = vmatpush1.msra.mxu0 %v493
  %1927 = vmatprep.subr.mxu0 %v498
  %1928 = vmatpush1.msra.mxu0 %v497
  %1929 = vmatprep.subr.mxu0 %v502
  %1930 = vmatpush1.msra.mxu0 %v501
  %1931 = vmatprep.subr.mxu0 %v506
  %1932 = vmatpush1.msra.mxu0 %v505
  %1933 = vmatprep.subr.mxu0 %v510
  %1934 = vmatpush1.msra.mxu0 %v509
  %1935 = vmatprep.subr.mxu0 %v514
  %1936 = vmatpush1.msra.mxu0 %v513
  %1937 = vmatprep.subr.mxu0 %v518
  %1938 = vmatpush1.msra.mxu0 %v517
  %1939 = vmatprep.subr.mxu0 %v522
  %1940 = vmatpush1.msra.mxu0 %v521
  %1941 = vmatprep.subr.mxu0 %v526
  %1942 = vmatpush1.msra.mxu0 %v525
  %1943 = vmatprep.subr.mxu0 %v530
  %1944 = vmatpush1.msra.mxu0 %v529
  %1945 = vmatprep.subr.mxu0 %v534
  %1946 = vmatpush1.msra.mxu0 %v533
  %1947 = vmatprep.subr.mxu0 %v538
  %1948 = vmatpush1.msra.mxu0 %v537
  %1949 = vmatprep.subr.mxu0 %v542
  %1950 = vmatpush1.msra.mxu0 %v541
  %1951 = vmatprep.subr.mxu0 %v546
  %1952 = vmatpush1.msra.mxu0 %v545
  %1953 = vmatprep.subr.mxu0 %v550
  %1954 = vmatpush1.msra.mxu0 %v549
  %1955 = vmatprep.subr.mxu0 %v554
  %1956 = vmatpush1.msra.mxu0 %v553
  %1957 = vmatprep.subr.mxu0 %v558
  %1958 = vmatpush1.msra.mxu0 %v557
  %1959 = vmatprep.subr.mxu0 %v562
  %1960 = vmatpush1.msra.mxu0 %v561
  %1961 = vmatprep.subr.mxu0 %v566
  %1962 = vmatpush1.msra.mxu0 %v565
  %1963 = vmatprep.subr.mxu0 %v570
  %1964 = vmatpush1.msra.mxu0 %v569
  %1965 = vmatprep.subr.mxu0 %v574
  %1966 = vmatpush1.msra.mxu0 %v573
  %1967 = vmatprep.subr.mxu0 %v578
  %1968 = vmatpush1.msra.mxu0 %v577
  %1969 = vmatprep.subr.mxu0 %v582
  %1970 = vmatpush1.msra.mxu0 %v581
  %1971 = vmatprep.subr.mxu0 %v586
  %1972 = vmatpush1.msra.mxu0 %v585
  %1973 = vmatprep.subr.mxu0 %v590
  %1974 = vmatpush1.msra.mxu0 %v589
  %1975 = vmatprep.subr.mxu0 %v594
  %1976 = vmatpush1.msra.mxu0 %v593
  %1977 = vmatprep.mubr.f32.mxu0 %v1712
  %1978 = vmatmul.mubr.f32.gmra.mrb[0].mxu0 %v1912
  %v1979 = vpop.f32.mrb[0].mxu0
  %v1980 = vadd.f32 %v602, %v1979
  %v1981 = vpop.f32.mrb[0].mxu0
  %v1982 = vadd.f32 %v606, %v1981
  %1983 = vdwg.mxu0
  %1984 = vmatprep.subr.mxu0 %v472
  %1985 = vmatpush1.msra.mxu0 %v471
  %1986 = vmatprep.subr.mxu0 %v476
  %1987 = vmatpush1.msra.mxu0 %v475
  %1988 = vmatprep.subr.mxu0 %v480
  %1989 = vmatpush1.msra.mxu0 %v479
  %1990 = vmatprep.subr.mxu0 %v484
  %1991 = vmatpush1.msra.mxu0 %v483
  %1992 = vmatprep.subr.mxu0 %v488
  %1993 = vmatpush1.msra.mxu0 %v487
  %1994 = vmatprep.subr.mxu0 %v492
  %1995 = vmatpush1.msra.mxu0 %v491
  %1996 = vmatprep.subr.mxu0 %v496
  %1997 = vmatpush1.msra.mxu0 %v495
  %1998 = vmatprep.subr.mxu0 %v500
  %1999 = vmatpush1.msra.mxu0 %v499
  %2000 = vmatprep.subr.mxu0 %v504
  %2001 = vmatpush1.msra.mxu0 %v503
  %2002 = vmatprep.subr.mxu0 %v508
  %2003 = vmatpush1.msra.mxu0 %v507
  %2004 = vmatprep.subr.mxu0 %v512
  %2005 = vmatpush1.msra.mxu0 %v511
  %2006 = vmatprep.subr.mxu0 %v516
  %2007 = vmatpush1.msra.mxu0 %v515
  %2008 = vmatprep.subr.mxu0 %v520
  %2009 = vmatpush1.msra.mxu0 %v519
  %2010 = vmatprep.subr.mxu0 %v524
  %2011 = vmatpush1.msra.mxu0 %v523
  %2012 = vmatprep.subr.mxu0 %v528
  %2013 = vmatpush1.msra.mxu0 %v527
  %2014 = vmatprep.subr.mxu0 %v532
  %2015 = vmatpush1.msra.mxu0 %v531
  %2016 = vmatprep.subr.mxu0 %v536
  %2017 = vmatpush1.msra.mxu0 %v535
  %2018 = vmatprep.subr.mxu0 %v540
  %2019 = vmatpush1.msra.mxu0 %v539
  %2020 = vmatprep.subr.mxu0 %v544
  %2021 = vmatpush1.msra.mxu0 %v543
  %2022 = vmatprep.subr.mxu0 %v548
  %2023 = vmatpush1.msra.mxu0 %v547
  %2024 = vmatprep.subr.mxu0 %v552
  %2025 = vmatpush1.msra.mxu0 %v551
  %2026 = vmatprep.subr.mxu0 %v556
  %2027 = vmatpush1.msra.mxu0 %v555
  %2028 = vmatprep.subr.mxu0 %v560
  %2029 = vmatpush1.msra.mxu0 %v559
  %2030 = vmatprep.subr.mxu0 %v564
  %2031 = vmatpush1.msra.mxu0 %v563
  %2032 = vmatprep.subr.mxu0 %v568
  %2033 = vmatpush1.msra.mxu0 %v567
  %2034 = vmatprep.subr.mxu0 %v572
  %2035 = vmatpush1.msra.mxu0 %v571
  %2036 = vmatprep.subr.mxu0 %v576
  %2037 = vmatpush1.msra.mxu0 %v575
  %2038 = vmatprep.subr.mxu0 %v580
  %2039 = vmatpush1.msra.mxu0 %v579
  %2040 = vmatprep.subr.mxu0 %v584
  %2041 = vmatpush1.msra.mxu0 %v583
  %2042 = vmatprep.subr.mxu0 %v588
  %2043 = vmatpush1.msra.mxu0 %v587
  %2044 = vmatprep.subr.mxu0 %v592
  %2045 = vmatpush1.msra.mxu0 %v591
  %2046 = vmatprep.subr.mxu0 %v596
  %2047 = vmatpush1.msra.mxu0 %v595
  %2048 = vmatprep.mubr.f32.mxu0 %v1712
  %2049 = vmatmul.mubr.f32.gmra.mrb[0].mxu0 %v1912
  %v2050 = vpop.f32.mrb[0].mxu0
  %v2051 = vadd.f32 %v610, %v2050
  %v2052 = vpop.f32.mrb[0].mxu0
  %v2053 = vadd.f32 %v614, %v2052
  %2054 = vdwg.mxu0
  %v2055 = vxor.u32 %v1980, 2147483648
  %v2056 = vmul.f32 %v2055, 1.442695
  %v2057 = vpow.pop %v2056
  %v2058 = vadd.f32 %v2057, 1.0
  %v2059 = vrcp.pop %v2058
  %v2060 = vmul.f32 1.0, %v2059
  %v2061 = vxor.u32 %v1982, 2147483648
  %v2062 = vmul.f32 %v2061, 1.442695
  %v2063 = vpow.pop %v2062
  %v2064 = vadd.f32 %v2063, 1.0
  %v2065 = vrcp.pop %v2064
  %v2066 = vmul.f32 1.0, %v2065
  %v2067 = vtanh.pop %v2051
  %v2068 = vxor.u32 %v2053, 2147483648
  %v2069 = vmul.f32 %v2068, 1.442695
  %v2070 = vpow.pop %v2069
  %v2071 = vadd.f32 %v2070, 1.0
  %v2072 = vrcp.pop %v2071
  %v2073 = vmul.f32 1.0, %v2072
  %v2074 = vmul.f32 %v2066, %v1710
  %v2075 = vmul.f32 %v2060, %v2067
  %v2076 = vadd.f32 %v2074, %v2075
  %v2077 = vtanh.pop %v2076
  %v2078 = vmul.f32 %v2073, %v2077
  %s2079 = scalar_lea.vmem [#allocation3], 6
  %2080 = vst [vmem:[%s2079] sm:$0x3] %v2078
  %s2081 = scalar_lea.vmem [#allocation2], 32
  %v2082 = vld [vmem:[%s2081] sm:$0xff]
  %2083 = vmatprep.subr.mxu0 %v406
  %2084 = vmatpush1.msra.mxu0 %v405
  %2085 = vmatprep.subr.mxu0 %v410
  %2086 = vmatpush1.msra.mxu0 %v409
  %2087 = vmatprep.subr.mxu0 %v414
  %2088 = vmatpush1.msra.mxu0 %v413
  %2089 = vmatprep.subr.mxu0 %v418
  %2090 = vmatpush1.msra.mxu0 %v417
  %2091 = vmatprep.subr.mxu0 %v422
  %2092 = vmatpush1.msra.mxu0 %v421
  %2093 = vmatprep.subr.mxu0 %v426
  %2094 = vmatpush1.msra.mxu0 %v425
  %2095 = vmatprep.subr.mxu0 %v430
  %2096 = vmatpush1.msra.mxu0 %v429
  %2097 = vmatprep.subr.mxu0 %v434
  %2098 = vmatpush1.msra.mxu0 %v433
  %2099 = vmatprep.subr.mxu0 %v438
  %2100 = vmatpush1.msra.mxu0 %v437
  %2101 = vmatprep.subr.mxu0 %v442
  %2102 = vmatpush1.msra.mxu0 %v441
  %2103 = vmatprep.subr.mxu0 %v446
  %2104 = vmatpush1.msra.mxu0 %v445
  %2105 = vmatprep.subr.mxu0 %v450
  %2106 = vmatpush1.msra.mxu0 %v449
  %2107 = vmatprep.subr.mxu0 %v454
  %2108 = vmatpush1.msra.mxu0 %v453
  %2109 = vmatprep.subr.mxu0 %v458
  %2110 = vmatpush1.msra.mxu0 %v457
  %2111 = vmatprep.subr.mxu0 %v462
  %2112 = vmatpush1.msra.mxu0 %v461
  %2113 = vmatprep.subr.mxu0 %v466
  %2114 = vmatpush1.msra.mxu0 %v465
  %2115 = vmatprep.subr.mxu0 0.0
  %2116 = vmatpush1.msra.mxu0 0.0
  %2117 = vmatprep.subr.mxu0 0.0
  %2118 = vmatpush1.msra.mxu0 0.0
  %2119 = vmatprep.subr.mxu0 0.0
  %2120 = vmatpush1.msra.mxu0 0.0
  %2121 = vmatprep.subr.mxu0 0.0
  %2122 = vmatpush1.msra.mxu0 0.0
  %2123 = vmatprep.subr.mxu0 0.0
  %2124 = vmatpush1.msra.mxu0 0.0
  %2125 = vmatprep.subr.mxu0 0.0
  %2126 = vmatpush1.msra.mxu0 0.0
  %2127 = vmatprep.subr.mxu0 0.0
  %2128 = vmatpush1.msra.mxu0 0.0
  %2129 = vmatprep.subr.mxu0 0.0
  %2130 = vmatpush1.msra.mxu0 0.0
  %2131 = vmatprep.subr.mxu0 0.0
  %2132 = vmatpush1.msra.mxu0 0.0
  %2133 = vmatprep.subr.mxu0 0.0
  %2134 = vmatpush1.msra.mxu0 0.0
  %2135 = vmatprep.subr.mxu0 0.0
  %2136 = vmatpush1.msra.mxu0 0.0
  %2137 = vmatprep.subr.mxu0 0.0
  %2138 = vmatpush1.msra.mxu0 0.0
  %2139 = vmatprep.subr.mxu0 0.0
  %2140 = vmatpush1.msra.mxu0 0.0
  %2141 = vmatprep.subr.mxu0 0.0
  %2142 = vmatpush1.msra.mxu0 0.0
  %2143 = vmatprep.subr.mxu0 0.0
  %2144 = vmatpush1.msra.mxu0 0.0
  %2145 = vmatprep.subr.mxu0 0.0
  %2146 = vmatpush1.msra.mxu0 0.0
  %2147 = vmatprep.mubr.f32.mxu0 0.0
  %2148 = vmatmul.mubr.f32.gmra.mrb[0].mxu0 %v1912
  %v2149 = vpop.f32.mrb[0].mxu0
  %v2150 = vadd.f32 0.0, %v2149
  %v2151 = vpop.f32.mrb[0].mxu0
  %v2152 = vadd.f32 0.0, %v2151
  %2153 = vdwg.mxu0
  %2154 = vmatprep.subr.mxu0 %v408
  %2155 = vmatpush1.msra.mxu0 %v407
  %2156 = vmatprep.subr.mxu0 %v412
  %2157 = vmatpush1.msra.mxu0 %v411
  %2158 = vmatprep.subr.mxu0 %v416
  %2159 = vmatpush1.msra.mxu0 %v415
  %2160 = vmatprep.subr.mxu0 %v420
  %2161 = vmatpush1.msra.mxu0 %v419
  %2162 = vmatprep.subr.mxu0 %v424
  %2163 = vmatpush1.msra.mxu0 %v423
  %2164 = vmatprep.subr.mxu0 %v428
  %2165 = vmatpush1.msra.mxu0 %v427
  %2166 = vmatprep.subr.mxu0 %v432
  %2167 = vmatpush1.msra.mxu0 %v431
  %2168 = vmatprep.subr.mxu0 %v436
  %2169 = vmatpush1.msra.mxu0 %v435
  %2170 = vmatprep.subr.mxu0 %v440
  %2171 = vmatpush1.msra.mxu0 %v439
  %2172 = vmatprep.subr.mxu0 %v444
  %2173 = vmatpush1.msra.mxu0 %v443
  %2174 = vmatprep.subr.mxu0 %v448
  %2175 = vmatpush1.msra.mxu0 %v447
  %2176 = vmatprep.subr.mxu0 %v452
  %2177 = vmatpush1.msra.mxu0 %v451
  %2178 = vmatprep.subr.mxu0 %v456
  %2179 = vmatpush1.msra.mxu0 %v455
  %2180 = vmatprep.subr.mxu0 %v460
  %2181 = vmatpush1.msra.mxu0 %v459
  %2182 = vmatprep.subr.mxu0 %v464
  %2183 = vmatpush1.msra.mxu0 %v463
  %2184 = vmatprep.subr.mxu0 %v468
  %2185 = vmatpush1.msra.mxu0 %v467
  %2186 = vmatprep.subr.mxu0 0.0
  %2187 = vmatpush1.msra.mxu0 0.0
  %2188 = vmatprep.subr.mxu0 0.0
  %2189 = vmatpush1.msra.mxu0 0.0
  %2190 = vmatprep.subr.mxu0 0.0
  %2191 = vmatpush1.msra.mxu0 0.0
  %2192 = vmatprep.subr.mxu0 0.0
  %2193 = vmatpush1.msra.mxu0 0.0
  %2194 = vmatprep.subr.mxu0 0.0
  %2195 = vmatpush1.msra.mxu0 0.0
  %2196 = vmatprep.subr.mxu0 0.0
  %2197 = vmatpush1.msra.mxu0 0.0
  %2198 = vmatprep.subr.mxu0 0.0
  %2199 = vmatpush1.msra.mxu0 0.0
  %2200 = vmatprep.subr.mxu0 0.0
  %2201 = vmatpush1.msra.mxu0 0.0
  %2202 = vmatprep.subr.mxu0 0.0
  %2203 = vmatpush1.msra.mxu0 0.0
  %2204 = vmatprep.subr.mxu0 0.0
  %2205 = vmatpush1.msra.mxu0 0.0
  %2206 = vmatprep.subr.mxu0 0.0
  %2207 = vmatpush1.msra.mxu0 0.0
  %2208 = vmatprep.subr.mxu0 0.0
  %2209 = vmatpush1.msra.mxu0 0.0
  %2210 = vmatprep.subr.mxu0 0.0
  %2211 = vmatpush1.msra.mxu0 0.0
  %2212 = vmatprep.subr.mxu0 0.0
  %2213 = vmatpush1.msra.mxu0 0.0
  %2214 = vmatprep.subr.mxu0 0.0
  %2215 = vmatpush1.msra.mxu0 0.0
  %2216 = vmatprep.subr.mxu0 0.0
  %2217 = vmatpush1.msra.mxu0 0.0
  %2218 = vmatprep.mubr.f32.mxu0 0.0
  %2219 = vmatmul.mubr.f32.gmra.mrb[0].mxu0 %v1912
  %v2220 = vpop.f32.mrb[0].mxu0
  %v2221 = vadd.f32 0.0, %v2220
  %v2222 = vpop.f32.mrb[0].mxu0
  %v2223 = vadd.f32 0.0, %v2222
  %2224 = vdwg.mxu0
  %v2229 = vcombine.low %v2150, %v2152
  %v2230 = vcombine.low %v2221, %v2223
  %v2232 = vunpack.c.l.s4 1983009808
  %v2233 = vunpack.c.0.s8 %v2232
  %v2234 = vlaneseq
  %v2235 = vshrl.u32 %v2234, 7
  %v2236 = vsub.s32 %v2233, %v2235
  %v2237 = vrot.slane %v2229, %v2236
  %v2239 = vunpack.c.l.s4 1983009808
  %v2240 = vunpack.c.0.s8 %v2239
  %v2241 = vlaneseq
  %v2242 = vshrl.u32 %v2241, 7
  %v2243 = vsub.s32 %v2240, %v2242
  %v2244 = vrot.slane %v2230, %v2243
  %v2245 = vcombine.low %v2237, %v2244
  %v2247 = vadd.f32 %v2082, %v2245
  %v2248 = vxor.u32 %v2247, 2147483648
  %v2249 = vmul.f32 %v2248, 1.442695
  %v2250 = vpow.pop %v2249
  %v2251 = vadd.f32 %v2250, 1.0
  %v2252 = vrcp.pop %v2251
  %v2253 = vmul.f32 1.0, %v2252
  %v2255 = vrot.slane %v2247, 2
  %v2257 = vxor.u32 %v2255, 2147483648
  %v2258 = vmul.f32 %v2257, 1.442695
  %v2259 = vpow.pop %v2258
  %v2260 = vadd.f32 %v2259, 1.0
  %v2261 = vrcp.pop %v2260
  %v2262 = vmul.f32 1.0, %v2261
  %v2263 = vrot.slane %v2247, 4
  %v2265 = vtanh.pop %v2263
  %v2266 = vrot.slane %v2247, 6
  %v2268 = vxor.u32 %v2266, 2147483648
  %v2269 = vmul.f32 %v2268, 1.442695
  %v2270 = vpow.pop %v2269
  %v2271 = vadd.f32 %v2270, 1.0
  %v2272 = vrcp.pop %v2271
  %v2273 = vmul.f32 1.0, %v2272
  %v2274 = vmul.f32 %v2262, %v1910
  %v2275 = vmul.f32 %v2253, %v2265
  %v2276 = vadd.f32 %v2274, %v2275
  %v2277 = vtanh.pop %v2276
  %v2278 = vmul.f32 %v2273, %v2277
  %2279 = vmatprep.subr.mxu0 %v470
  %2280 = vmatpush1.msra.mxu0 %v469
  %2281 = vmatprep.subr.mxu0 %v474
  %2282 = vmatpush1.msra.mxu0 %v473
  %2283 = vmatprep.subr.mxu0 %v478
  %2284 = vmatpush1.msra.mxu0 %v477
  %2285 = vmatprep.subr.mxu0 %v482
  %2286 = vmatpush1.msra.mxu0 %v481
  %2287 = vmatprep.subr.mxu0 %v486
  %2288 = vmatpush1.msra.mxu0 %v485
  %2289 = vmatprep.subr.mxu0 %v490
  %2290 = vmatpush1.msra.mxu0 %v489
  %2291 = vmatprep.subr.mxu0 %v494
  %2292 = vmatpush1.msra.mxu0 %v493
  %2293 = vmatprep.subr.mxu0 %v498
  %2294 = vmatpush1.msra.mxu0 %v497
  %2295 = vmatprep.subr.mxu0 %v502
  %2296 = vmatpush1.msra.mxu0 %v501
  %2297 = vmatprep.subr.mxu0 %v506
  %2298 = vmatpush1.msra.mxu0 %v505
  %2299 = vmatprep.subr.mxu0 %v510
  %2300 = vmatpush1.msra.mxu0 %v509
  %2301 = vmatprep.subr.mxu0 %v514
  %2302 = vmatpush1.msra.mxu0 %v513
  %2303 = vmatprep.subr.mxu0 %v518
  %2304 = vmatpush1.msra.mxu0 %v517
  %2305 = vmatprep.subr.mxu0 %v522
  %2306 = vmatpush1.msra.mxu0 %v521
  %2307 = vmatprep.subr.mxu0 %v526
  %2308 = vmatpush1.msra.mxu0 %v525
  %2309 = vmatprep.subr.mxu0 %v530
  %2310 = vmatpush1.msra.mxu0 %v529
  %2311 = vmatprep.subr.mxu0 %v534
  %2312 = vmatpush1.msra.mxu0 %v533
  %2313 = vmatprep.subr.mxu0 %v538
  %2314 = vmatpush1.msra.mxu0 %v537
  %2315 = vmatprep.subr.mxu0 %v542
  %2316 = vmatpush1.msra.mxu0 %v541
  %2317 = vmatprep.subr.mxu0 %v546
  %2318 = vmatpush1.msra.mxu0 %v545
  %2319 = vmatprep.subr.mxu0 %v550
  %2320 = vmatpush1.msra.mxu0 %v549
  %2321 = vmatprep.subr.mxu0 %v554
  %2322 = vmatpush1.msra.mxu0 %v553
  %2323 = vmatprep.subr.mxu0 %v558
  %2324 = vmatpush1.msra.mxu0 %v557
  %2325 = vmatprep.subr.mxu0 %v562
  %2326 = vmatpush1.msra.mxu0 %v561
  %2327 = vmatprep.subr.mxu0 %v566
  %2328 = vmatpush1.msra.mxu0 %v565
  %2329 = vmatprep.subr.mxu0 %v570
  %2330 = vmatpush1.msra.mxu0 %v569
  %2331 = vmatprep.subr.mxu0 %v574
  %2332 = vmatpush1.msra.mxu0 %v573
  %2333 = vmatprep.subr.mxu0 %v578
  %2334 = vmatpush1.msra.mxu0 %v577
  %2335 = vmatprep.subr.mxu0 %v582
  %2336 = vmatpush1.msra.mxu0 %v581
  %2337 = vmatprep.subr.mxu0 %v586
  %2338 = vmatpush1.msra.mxu0 %v585
  %2339 = vmatprep.subr.mxu0 %v590
  %2340 = vmatpush1.msra.mxu0 %v589
  %2341 = vmatprep.subr.mxu0 %v594
  %2342 = vmatpush1.msra.mxu0 %v593
  %2343 = vmatprep.mubr.f32.mxu0 %v2078
  %2344 = vmatmul.mubr.f32.gmra.mrb[0].mxu0 %v2278
  %v2345 = vpop.f32.mrb[0].mxu0
  %v2346 = vadd.f32 %v602, %v2345
  %v2347 = vpop.f32.mrb[0].mxu0
  %v2348 = vadd.f32 %v606, %v2347
  %2349 = vdwg.mxu0
  %2350 = vmatprep.subr.mxu0 %v472
  %2351 = vmatpush1.msra.mxu0 %v471
  %2352 = vmatprep.subr.mxu0 %v476
  %2353 = vmatpush1.msra.mxu0 %v475
  %2354 = vmatprep.subr.mxu0 %v480
  %2355 = vmatpush1.msra.mxu0 %v479
  %2356 = vmatprep.subr.mxu0 %v484
  %2357 = vmatpush1.msra.mxu0 %v483
  %2358 = vmatprep.subr.mxu0 %v488
  %2359 = vmatpush1.msra.mxu0 %v487
  %2360 = vmatprep.subr.mxu0 %v492
  %2361 = vmatpush1.msra.mxu0 %v491
  %2362 = vmatprep.subr.mxu0 %v496
  %2363 = vmatpush1.msra.mxu0 %v495
  %2364 = vmatprep.subr.mxu0 %v500
  %2365 = vmatpush1.msra.mxu0 %v499
  %2366 = vmatprep.subr.mxu0 %v504
  %2367 = vmatpush1.msra.mxu0 %v503
  %2368 = vmatprep.subr.mxu0 %v508
  %2369 = vmatpush1.msra.mxu0 %v507
  %2370 = vmatprep.subr.mxu0 %v512
  %2371 = vmatpush1.msra.mxu0 %v511
  %2372 = vmatprep.subr.mxu0 %v516
  %2373 = vmatpush1.msra.mxu0 %v515
  %2374 = vmatprep.subr.mxu0 %v520
  %2375 = vmatpush1.msra.mxu0 %v519
  %2376 = vmatprep.subr.mxu0 %v524
  %2377 = vmatpush1.msra.mxu0 %v523
  %2378 = vmatprep.subr.mxu0 %v528
  %2379 = vmatpush1.msra.mxu0 %v527
  %2380 = vmatprep.subr.mxu0 %v532
  %2381 = vmatpush1.msra.mxu0 %v531
  %2382 = vmatprep.subr.mxu0 %v536
  %2383 = vmatpush1.msra.mxu0 %v535
  %2384 = vmatprep.subr.mxu0 %v540
  %2385 = vmatpush1.msra.mxu0 %v539
  %2386 = vmatprep.subr.mxu0 %v544
  %2387 = vmatpush1.msra.mxu0 %v543
  %2388 = vmatprep.subr.mxu0 %v548
  %2389 = vmatpush1.msra.mxu0 %v547
  %2390 = vmatprep.subr.mxu0 %v552
  %2391 = vmatpush1.msra.mxu0 %v551
  %2392 = vmatprep.subr.mxu0 %v556
  %2393 = vmatpush1.msra.mxu0 %v555
  %2394 = vmatprep.subr.mxu0 %v560
  %2395 = vmatpush1.msra.mxu0 %v559
  %2396 = vmatprep.subr.mxu0 %v564
  %2397 = vmatpush1.msra.mxu0 %v563
  %2398 = vmatprep.subr.mxu0 %v568
  %2399 = vmatpush1.msra.mxu0 %v567
  %2400 = vmatprep.subr.mxu0 %v572
  %2401 = vmatpush1.msra.mxu0 %v571
  %2402 = vmatprep.subr.mxu0 %v576
  %2403 = vmatpush1.msra.mxu0 %v575
  %2404 = vmatprep.subr.mxu0 %v580
  %2405 = vmatpush1.msra.mxu0 %v579
  %2406 = vmatprep.subr.mxu0 %v584
  %2407 = vmatpush1.msra.mxu0 %v583
  %2408 = vmatprep.subr.mxu0 %v588
  %2409 = vmatpush1.msra.mxu0 %v587
  %2410 = vmatprep.subr.mxu0 %v592
  %2411 = vmatpush1.msra.mxu0 %v591
  %2412 = vmatprep.subr.mxu0 %v596
  %2413 = vmatpush1.msra.mxu0 %v595
  %2414 = vmatprep.mubr.f32.mxu0 %v2078
  %2415 = vmatmul.mubr.f32.gmra.mrb[0].mxu0 %v2278
  %v2416 = vpop.f32.mrb[0].mxu0
  %v2417 = vadd.f32 %v610, %v2416
  %v2418 = vpop.f32.mrb[0].mxu0
  %v2419 = vadd.f32 %v614, %v2418
  %2420 = vdwg.mxu0
  %v2421 = vxor.u32 %v2346, 2147483648
  %v2422 = vmul.f32 %v2421, 1.442695
  %v2423 = vpow.pop %v2422
  %v2424 = vadd.f32 %v2423, 1.0
  %v2425 = vrcp.pop %v2424
  %v2426 = vmul.f32 1.0, %v2425
  %v2427 = vxor.u32 %v2348, 2147483648
  %v2428 = vmul.f32 %v2427, 1.442695
  %v2429 = vpow.pop %v2428
  %v2430 = vadd.f32 %v2429, 1.0
  %v2431 = vrcp.pop %v2430
  %v2432 = vmul.f32 1.0, %v2431
  %v2433 = vtanh.pop %v2417
  %v2434 = vxor.u32 %v2419, 2147483648
  %v2435 = vmul.f32 %v2434, 1.442695
  %v2436 = vpow.pop %v2435
  %v2437 = vadd.f32 %v2436, 1.0
  %v2438 = vrcp.pop %v2437
  %v2439 = vmul.f32 1.0, %v2438
  %v2440 = vmul.f32 %v2432, %v2076
  %v2441 = vmul.f32 %v2426, %v2433
  %v2442 = vadd.f32 %v2440, %v2441
  %v2443 = vtanh.pop %v2442
  %v2444 = vmul.f32 %v2439, %v2443
  %s2445 = scalar_lea.vmem [#allocation3], 8
  %2446 = vst [vmem:[%s2445] sm:$0x3] %v2444
  %s2447 = scalar_lea.vmem [#allocation2], 40
  %v2448 = vld [vmem:[%s2447] sm:$0xff]
  %2449 = vmatprep.subr.mxu0 %v406
  %2450 = vmatpush1.msra.mxu0 %v405
  %2451 = vmatprep.subr.mxu0 %v410
  %2452 = vmatpush1.msra.mxu0 %v409
  %2453 = vmatprep.subr.mxu0 %v414
  %2454 = vmatpush1.msra.mxu0 %v413
  %2455 = vmatprep.subr.mxu0 %v418
  %2456 = vmatpush1.msra.mxu0 %v417
  %2457 = vmatprep.subr.mxu0 %v422
  %2458 = vmatpush1.msra.mxu0 %v421
  %2459 = vmatprep.subr.mxu0 %v426
  %2460 = vmatpush1.msra.mxu0 %v425
  %2461 = vmatprep.subr.mxu0 %v430
  %2462 = vmatpush1.msra.mxu0 %v429
  %2463 = vmatprep.subr.mxu0 %v434
  %2464 = vmatpush1.msra.mxu0 %v433
  %2465 = vmatprep.subr.mxu0 %v438
  %2466 = vmatpush1.msra.mxu0 %v437
  %2467 = vmatprep.subr.mxu0 %v442
  %2468 = vmatpush1.msra.mxu0 %v441
  %2469 = vmatprep.subr.mxu0 %v446
  %2470 = vmatpush1.msra.mxu0 %v445
  %2471 = vmatprep.subr.mxu0 %v450
  %2472 = vmatpush1.msra.mxu0 %v449
  %2473 = vmatprep.subr.mxu0 %v454
  %2474 = vmatpush1.msra.mxu0 %v453
  %2475 = vmatprep.subr.mxu0 %v458
  %2476 = vmatpush1.msra.mxu0 %v457
  %2477 = vmatprep.subr.mxu0 %v462
  %2478 = vmatpush1.msra.mxu0 %v461
  %2479 = vmatprep.subr.mxu0 %v466
  %2480 = vmatpush1.msra.mxu0 %v465
  %2481 = vmatprep.subr.mxu0 0.0
  %2482 = vmatpush1.msra.mxu0 0.0
  %2483 = vmatprep.subr.mxu0 0.0
  %2484 = vmatpush1.msra.mxu0 0.0
  %2485 = vmatprep.subr.mxu0 0.0
  %2486 = vmatpush1.msra.mxu0 0.0
  %2487 = vmatprep.subr.mxu0 0.0
  %2488 = vmatpush1.msra.mxu0 0.0
  %2489 = vmatprep.subr.mxu0 0.0
  %2490 = vmatpush1.msra.mxu0 0.0
  %2491 = vmatprep.subr.mxu0 0.0
  %2492 = vmatpush1.msra.mxu0 0.0
  %2493 = vmatprep.subr.mxu0 0.0
  %2494 = vmatpush1.msra.mxu0 0.0
  %2495 = vmatprep.subr.mxu0 0.0
  %2496 = vmatpush1.msra.mxu0 0.0
  %2497 = vmatprep.subr.mxu0 0.0
  %2498 = vmatpush1.msra.mxu0 0.0
  %2499 = vmatprep.subr.mxu0 0.0
  %2500 = vmatpush1.msra.mxu0 0.0
  %2501 = vmatprep.subr.mxu0 0.0
  %2502 = vmatpush1.msra.mxu0 0.0
  %2503 = vmatprep.subr.mxu0 0.0
  %2504 = vmatpush1.msra.mxu0 0.0
  %2505 = vmatprep.subr.mxu0 0.0
  %2506 = vmatpush1.msra.mxu0 0.0
  %2507 = vmatprep.subr.mxu0 0.0
  %2508 = vmatpush1.msra.mxu0 0.0
  %2509 = vmatprep.subr.mxu0 0.0
  %2510 = vmatpush1.msra.mxu0 0.0
  %2511 = vmatprep.subr.mxu0 0.0
  %2512 = vmatpush1.msra.mxu0 0.0
  %2513 = vmatprep.mubr.f32.mxu0 0.0
  %2514 = vmatmul.mubr.f32.gmra.mrb[0].mxu0 %v2278
  %v2515 = vpop.f32.mrb[0].mxu0
  %v2516 = vadd.f32 0.0, %v2515
  %v2517 = vpop.f32.mrb[0].mxu0
  %v2518 = vadd.f32 0.0, %v2517
  %2519 = vdwg.mxu0
  %2520 = vmatprep.subr.mxu0 %v408
  %2521 = vmatpush1.msra.mxu0 %v407
  %2522 = vmatprep.subr.mxu0 %v412
  %2523 = vmatpush1.msra.mxu0 %v411
  %2524 = vmatprep.subr.mxu0 %v416
  %2525 = vmatpush1.msra.mxu0 %v415
  %2526 = vmatprep.subr.mxu0 %v420
  %2527 = vmatpush1.msra.mxu0 %v419
  %2528 = vmatprep.subr.mxu0 %v424
  %2529 = vmatpush1.msra.mxu0 %v423
  %2530 = vmatprep.subr.mxu0 %v428
  %2531 = vmatpush1.msra.mxu0 %v427
  %2532 = vmatprep.subr.mxu0 %v432
  %2533 = vmatpush1.msra.mxu0 %v431
  %2534 = vmatprep.subr.mxu0 %v436
  %2535 = vmatpush1.msra.mxu0 %v435
  %2536 = vmatprep.subr.mxu0 %v440
  %2537 = vmatpush1.msra.mxu0 %v439
  %2538 = vmatprep.subr.mxu0 %v444
  %2539 = vmatpush1.msra.mxu0 %v443
  %2540 = vmatprep.subr.mxu0 %v448
  %2541 = vmatpush1.msra.mxu0 %v447
  %2542 = vmatprep.subr.mxu0 %v452
  %2543 = vmatpush1.msra.mxu0 %v451
  %2544 = vmatprep.subr.mxu0 %v456
  %2545 = vmatpush1.msra.mxu0 %v455
  %2546 = vmatprep.subr.mxu0 %v460
  %2547 = vmatpush1.msra.mxu0 %v459
  %2548 = vmatprep.subr.mxu0 %v464
  %2549 = vmatpush1.msra.mxu0 %v463
  %2550 = vmatprep.subr.mxu0 %v468
  %2551 = vmatpush1.msra.mxu0 %v467
  %2552 = vmatprep.subr.mxu0 0.0
  %2553 = vmatpush1.msra.mxu0 0.0
  %2554 = vmatprep.subr.mxu0 0.0
  %2555 = vmatpush1.msra.mxu0 0.0
  %2556 = vmatprep.subr.mxu0 0.0
  %2557 = vmatpush1.msra.mxu0 0.0
  %2558 = vmatprep.subr.mxu0 0.0
  %2559 = vmatpush1.msra.mxu0 0.0
  %2560 = vmatprep.subr.mxu0 0.0
  %2561 = vmatpush1.msra.mxu0 0.0
  %2562 = vmatprep.subr.mxu0 0.0
  %2563 = vmatpush1.msra.mxu0 0.0
  %2564 = vmatprep.subr.mxu0 0.0
  %2565 = vmatpush1.msra.mxu0 0.0
  %2566 = vmatprep.subr.mxu0 0.0
  %2567 = vmatpush1.msra.mxu0 0.0
  %2568 = vmatprep.subr.mxu0 0.0
  %2569 = vmatpush1.msra.mxu0 0.0
  %2570 = vmatprep.subr.mxu0 0.0
  %2571 = vmatpush1.msra.mxu0 0.0
  %2572 = vmatprep.subr.mxu0 0.0
  %2573 = vmatpush1.msra.mxu0 0.0
  %2574 = vmatprep.subr.mxu0 0.0
  %2575 = vmatpush1.msra.mxu0 0.0
  %2576 = vmatprep.subr.mxu0 0.0
  %2577 = vmatpush1.msra.mxu0 0.0
  %2578 = vmatprep.subr.mxu0 0.0
  %2579 = vmatpush1.msra.mxu0 0.0
  %2580 = vmatprep.subr.mxu0 0.0
  %2581 = vmatpush1.msra.mxu0 0.0
  %2582 = vmatprep.subr.mxu0 0.0
  %2583 = vmatpush1.msra.mxu0 0.0
  %2584 = vmatprep.mubr.f32.mxu0 0.0
  %2585 = vmatmul.mubr.f32.gmra.mrb[0].mxu0 %v2278
  %v2586 = vpop.f32.mrb[0].mxu0
  %v2587 = vadd.f32 0.0, %v2586
  %v2588 = vpop.f32.mrb[0].mxu0
  %v2589 = vadd.f32 0.0, %v2588
  %2590 = vdwg.mxu0
  %v2595 = vcombine.low %v2516, %v2518
  %v2596 = vcombine.low %v2587, %v2589
  %v2598 = vunpack.c.l.s4 1983009808
  %v2599 = vunpack.c.0.s8 %v2598
  %v2600 = vlaneseq
  %v2601 = vshrl.u32 %v2600, 7
  %v2602 = vsub.s32 %v2599, %v2601
  %v2603 = vrot.slane %v2595, %v2602
  %v2605 = vunpack.c.l.s4 1983009808
  %v2606 = vunpack.c.0.s8 %v2605
  %v2607 = vlaneseq
  %v2608 = vshrl.u32 %v2607, 7
  %v2609 = vsub.s32 %v2606, %v2608
  %v2610 = vrot.slane %v2596, %v2609
  %v2611 = vcombine.low %v2603, %v2610
  %v2613 = vadd.f32 %v2448, %v2611
  %v2614 = vxor.u32 %v2613, 2147483648
  %v2615 = vmul.f32 %v2614, 1.442695
  %v2616 = vpow.pop %v2615
  %v2617 = vadd.f32 %v2616, 1.0
  %v2618 = vrcp.pop %v2617
  %v2619 = vmul.f32 1.0, %v2618
  %v2621 = vrot.slane %v2613, 2
  %v2623 = vxor.u32 %v2621, 2147483648
  %v2624 = vmul.f32 %v2623, 1.442695
  %v2625 = vpow.pop %v2624
  %v2626 = vadd.f32 %v2625, 1.0
  %v2627 = vrcp.pop %v2626
  %v2628 = vmul.f32 1.0, %v2627
  %v2629 = vrot.slane %v2613, 4
  %v2631 = vtanh.pop %v2629
  %v2632 = vrot.slane %v2613, 6
  %v2634 = vxor.u32 %v2632, 2147483648
  %v2635 = vmul.f32 %v2634, 1.442695
  %v2636 = vpow.pop %v2635
  %v2637 = vadd.f32 %v2636, 1.0
  %v2638 = vrcp.pop %v2637
  %v2639 = vmul.f32 1.0, %v2638
  %v2640 = vmul.f32 %v2628, %v2276
  %v2641 = vmul.f32 %v2619, %v2631
  %v2642 = vadd.f32 %v2640, %v2641
  %v2643 = vtanh.pop %v2642
  %v2644 = vmul.f32 %v2639, %v2643
  %2645 = vmatprep.subr.mxu0 %v470
  %2646 = vmatpush1.msra.mxu0 %v469
  %2647 = vmatprep.subr.mxu0 %v474
  %2648 = vmatpush1.msra.mxu0 %v473
  %2649 = vmatprep.subr.mxu0 %v478
  %2650 = vmatpush1.msra.mxu0 %v477
  %2651 = vmatprep.subr.mxu0 %v482
  %2652 = vmatpush1.msra.mxu0 %v481
  %2653 = vmatprep.subr.mxu0 %v486
  %2654 = vmatpush1.msra.mxu0 %v485
  %2655 = vmatprep.subr.mxu0 %v490
  %2656 = vmatpush1.msra.mxu0 %v489
  %2657 = vmatprep.subr.mxu0 %v494
  %2658 = vmatpush1.msra.mxu0 %v493
  %2659 = vmatprep.subr.mxu0 %v498
  %2660 = vmatpush1.msra.mxu0 %v497
  %2661 = vmatprep.subr.mxu0 %v502
  %2662 = vmatpush1.msra.mxu0 %v501
  %2663 = vmatprep.subr.mxu0 %v506
  %2664 = vmatpush1.msra.mxu0 %v505
  %2665 = vmatprep.subr.mxu0 %v510
  %2666 = vmatpush1.msra.mxu0 %v509
  %2667 = vmatprep.subr.mxu0 %v514
  %2668 = vmatpush1.msra.mxu0 %v513
  %2669 = vmatprep.subr.mxu0 %v518
  %2670 = vmatpush1.msra.mxu0 %v517
  %2671 = vmatprep.subr.mxu0 %v522
  %2672 = vmatpush1.msra.mxu0 %v521
  %2673 = vmatprep.subr.mxu0 %v526
  %2674 = vmatpush1.msra.mxu0 %v525
  %2675 = vmatprep.subr.mxu0 %v530
  %2676 = vmatpush1.msra.mxu0 %v529
  %2677 = vmatprep.subr.mxu0 %v534
  %2678 = vmatpush1.msra.mxu0 %v533
  %2679 = vmatprep.subr.mxu0 %v538
  %2680 = vmatpush1.msra.mxu0 %v537
  %2681 = vmatprep.subr.mxu0 %v542
  %2682 = vmatpush1.msra.mxu0 %v541
  %2683 = vmatprep.subr.mxu0 %v546
  %2684 = vmatpush1.msra.mxu0 %v545
  %2685 = vmatprep.subr.mxu0 %v550
  %2686 = vmatpush1.msra.mxu0 %v549
  %2687 = vmatprep.subr.mxu0 %v554
  %2688 = vmatpush1.msra.mxu0 %v553
  %2689 = vmatprep.subr.mxu0 %v558
  %2690 = vmatpush1.msra.mxu0 %v557
  %2691 = vmatprep.subr.mxu0 %v562
  %2692 = vmatpush1.msra.mxu0 %v561
  %2693 = vmatprep.subr.mxu0 %v566
  %2694 = vmatpush1.msra.mxu0 %v565
  %2695 = vmatprep.subr.mxu0 %v570
  %2696 = vmatpush1.msra.mxu0 %v569
  %2697 = vmatprep.subr.mxu0 %v574
  %2698 = vmatpush1.msra.mxu0 %v573
  %2699 = vmatprep.subr.mxu0 %v578
  %2700 = vmatpush1.msra.mxu0 %v577
  %2701 = vmatprep.subr.mxu0 %v582
  %2702 = vmatpush1.msra.mxu0 %v581
  %2703 = vmatprep.subr.mxu0 %v586
  %2704 = vmatpush1.msra.mxu0 %v585
  %2705 = vmatprep.subr.mxu0 %v590
  %2706 = vmatpush1.msra.mxu0 %v589
  %2707 = vmatprep.subr.mxu0 %v594
  %2708 = vmatpush1.msra.mxu0 %v593
  %2709 = vmatprep.mubr.f32.mxu0 %v2444
  %2710 = vmatmul.mubr.f32.gmra.mrb[0].mxu0 %v2644
  %v2711 = vpop.f32.mrb[0].mxu0
  %v2712 = vadd.f32 %v602, %v2711
  %v2713 = vpop.f32.mrb[0].mxu0
  %v2714 = vadd.f32 %v606, %v2713
  %2715 = vdwg.mxu0
  %2716 = vmatprep.subr.mxu0 %v472
  %2717 = vmatpush1.msra.mxu0 %v471
  %2718 = vmatprep.subr.mxu0 %v476
  %2719 = vmatpush1.msra.mxu0 %v475
  %2720 = vmatprep.subr.mxu0 %v480
  %2721 = vmatpush1.msra.mxu0 %v479
  %2722 = vmatprep.subr.mxu0 %v484
  %2723 = vmatpush1.msra.mxu0 %v483
  %2724 = vmatprep.subr.mxu0 %v488
  %2725 = vmatpush1.msra.mxu0 %v487
  %2726 = vmatprep.subr.mxu0 %v492
  %2727 = vmatpush1.msra.mxu0 %v491
  %2728 = vmatprep.subr.mxu0 %v496
  %2729 = vmatpush1.msra.mxu0 %v495
  %2730 = vmatprep.subr.mxu0 %v500
  %2731 = vmatpush1.msra.mxu0 %v499
  %2732 = vmatprep.subr.mxu0 %v504
  %2733 = vmatpush1.msra.mxu0 %v503
  %2734 = vmatprep.subr.mxu0 %v508
  %2735 = vmatpush1.msra.mxu0 %v507
  %2736 = vmatprep.subr.mxu0 %v512
  %2737 = vmatpush1.msra.mxu0 %v511
  %2738 = vmatprep.subr.mxu0 %v516
  %2739 = vmatpush1.msra.mxu0 %v515
  %2740 = vmatprep.subr.mxu0 %v520
  %2741 = vmatpush1.msra.mxu0 %v519
  %2742 = vmatprep.subr.mxu0 %v524
  %2743 = vmatpush1.msra.mxu0 %v523
  %2744 = vmatprep.subr.mxu0 %v528
  %2745 = vmatpush1.msra.mxu0 %v527
  %2746 = vmatprep.subr.mxu0 %v532
  %2747 = vmatpush1.msra.mxu0 %v531
  %2748 = vmatprep.subr.mxu0 %v536
  %2749 = vmatpush1.msra.mxu0 %v535
  %2750 = vmatprep.subr.mxu0 %v540
  %2751 = vmatpush1.msra.mxu0 %v539
  %2752 = vmatprep.subr.mxu0 %v544
  %2753 = vmatpush1.msra.mxu0 %v543
  %2754 = vmatprep.subr.mxu0 %v548
  %2755 = vmatpush1.msra.mxu0 %v547
  %2756 = vmatprep.subr.mxu0 %v552
  %2757 = vmatpush1.msra.mxu0 %v551
  %2758 = vmatprep.subr.mxu0 %v556
  %2759 = vmatpush1.msra.mxu0 %v555
  %2760 = vmatprep.subr.mxu0 %v560
  %2761 = vmatpush1.msra.mxu0 %v559
  %2762 = vmatprep.subr.mxu0 %v564
  %2763 = vmatpush1.msra.mxu0 %v563
  %2764 = vmatprep.subr.mxu0 %v568
  %2765 = vmatpush1.msra.mxu0 %v567
  %2766 = vmatprep.subr.mxu0 %v572
  %2767 = vmatpush1.msra.mxu0 %v571
  %2768 = vmatprep.subr.mxu0 %v576
  %2769 = vmatpush1.msra.mxu0 %v575
  %2770 = vmatprep.subr.mxu0 %v580
  %2771 = vmatpush1.msra.mxu0 %v579
  %2772 = vmatprep.subr.mxu0 %v584
  %2773 = vmatpush1.msra.mxu0 %v583
  %2774 = vmatprep.subr.mxu0 %v588
  %2775 = vmatpush1.msra.mxu0 %v587
  %2776 = vmatprep.subr.mxu0 %v592
  %2777 = vmatpush1.msra.mxu0 %v591
  %2778 = vmatprep.subr.mxu0 %v596
  %2779 = vmatpush1.msra.mxu0 %v595
  %2780 = vmatprep.mubr.f32.mxu0 %v2444
  %2781 = vmatmul.mubr.f32.gmra.mrb[0].mxu0 %v2644
  %v2782 = vpop.f32.mrb[0].mxu0
  %v2783 = vadd.f32 %v610, %v2782
  %v2784 = vpop.f32.mrb[0].mxu0
  %v2785 = vadd.f32 %v614, %v2784
  %2786 = vdwg.mxu0
  %v2787 = vxor.u32 %v2712, 2147483648
  %v2788 = vmul.f32 %v2787, 1.442695
  %v2789 = vpow.pop %v2788
  %v2790 = vadd.f32 %v2789, 1.0
  %v2791 = vrcp.pop %v2790
  %v2792 = vmul.f32 1.0, %v2791
  %v2793 = vxor.u32 %v2714, 2147483648
  %v2794 = vmul.f32 %v2793, 1.442695
  %v2795 = vpow.pop %v2794
  %v2796 = vadd.f32 %v2795, 1.0
  %v2797 = vrcp.pop %v2796
  %v2798 = vmul.f32 1.0, %v2797
  %v2799 = vtanh.pop %v2783
  %v2800 = vxor.u32 %v2785, 2147483648
  %v2801 = vmul.f32 %v2800, 1.442695
  %v2802 = vpow.pop %v2801
  %v2803 = vadd.f32 %v2802, 1.0
  %v2804 = vrcp.pop %v2803
  %v2805 = vmul.f32 1.0, %v2804
  %v2806 = vmul.f32 %v2798, %v2442
  %v2807 = vmul.f32 %v2792, %v2799
  %v2808 = vadd.f32 %v2806, %v2807
  %v2809 = vtanh.pop %v2808
  %v2810 = vmul.f32 %v2805, %v2809
  %s2811 = scalar_lea.vmem [#allocation3], 10
  %2812 = vst [vmem:[%s2811] sm:$0x3] %v2810
  %s2813 = scalar_lea.vmem [#allocation2], 48
  %v2814 = vld [vmem:[%s2813] sm:$0xff]
  %2815 = vmatprep.subr.mxu0 %v406
  %2816 = vmatpush1.msra.mxu0 %v405
  %2817 = vmatprep.subr.mxu0 %v410
  %2818 = vmatpush1.msra.mxu0 %v409
  %2819 = vmatprep.subr.mxu0 %v414
  %2820 = vmatpush1.msra.mxu0 %v413
  %2821 = vmatprep.subr.mxu0 %v418
  %2822 = vmatpush1.msra.mxu0 %v417
  %2823 = vmatprep.subr.mxu0 %v422
  %2824 = vmatpush1.msra.mxu0 %v421
  %2825 = vmatprep.subr.mxu0 %v426
  %2826 = vmatpush1.msra.mxu0 %v425
  %2827 = vmatprep.subr.mxu0 %v430
  %2828 = vmatpush1.msra.mxu0 %v429
  %2829 = vmatprep.subr.mxu0 %v434
  %2830 = vmatpush1.msra.mxu0 %v433
  %2831 = vmatprep.subr.mxu0 %v438
  %2832 = vmatpush1.msra.mxu0 %v437
  %2833 = vmatprep.subr.mxu0 %v442
  %2834 = vmatpush1.msra.mxu0 %v441
  %2835 = vmatprep.subr.mxu0 %v446
  %2836 = vmatpush1.msra.mxu0 %v445
  %2837 = vmatprep.subr.mxu0 %v450
  %2838 = vmatpush1.msra.mxu0 %v449
  %2839 = vmatprep.subr.mxu0 %v454
  %2840 = vmatpush1.msra.mxu0 %v453
  %2841 = vmatprep.subr.mxu0 %v458
  %2842 = vmatpush1.msra.mxu0 %v457
  %2843 = vmatprep.subr.mxu0 %v462
  %2844 = vmatpush1.msra.mxu0 %v461
  %2845 = vmatprep.subr.mxu0 %v466
  %2846 = vmatpush1.msra.mxu0 %v465
  %2847 = vmatprep.subr.mxu0 0.0
  %2848 = vmatpush1.msra.mxu0 0.0
  %2849 = vmatprep.subr.mxu0 0.0
  %2850 = vmatpush1.msra.mxu0 0.0
  %2851 = vmatprep.subr.mxu0 0.0
  %2852 = vmatpush1.msra.mxu0 0.0
  %2853 = vmatprep.subr.mxu0 0.0
  %2854 = vmatpush1.msra.mxu0 0.0
  %2855 = vmatprep.subr.mxu0 0.0
  %2856 = vmatpush1.msra.mxu0 0.0
  %2857 = vmatprep.subr.mxu0 0.0
  %2858 = vmatpush1.msra.mxu0 0.0
  %2859 = vmatprep.subr.mxu0 0.0
  %2860 = vmatpush1.msra.mxu0 0.0
  %2861 = vmatprep.subr.mxu0 0.0
  %2862 = vmatpush1.msra.mxu0 0.0
  %2863 = vmatprep.subr.mxu0 0.0
  %2864 = vmatpush1.msra.mxu0 0.0
  %2865 = vmatprep.subr.mxu0 0.0
  %2866 = vmatpush1.msra.mxu0 0.0
  %2867 = vmatprep.subr.mxu0 0.0
  %2868 = vmatpush1.msra.mxu0 0.0
  %2869 = vmatprep.subr.mxu0 0.0
  %2870 = vmatpush1.msra.mxu0 0.0
  %2871 = vmatprep.subr.mxu0 0.0
  %2872 = vmatpush1.msra.mxu0 0.0
  %2873 = vmatprep.subr.mxu0 0.0
  %2874 = vmatpush1.msra.mxu0 0.0
  %2875 = vmatprep.subr.mxu0 0.0
  %2876 = vmatpush1.msra.mxu0 0.0
  %2877 = vmatprep.subr.mxu0 0.0
  %2878 = vmatpush1.msra.mxu0 0.0
  %2879 = vmatprep.mubr.f32.mxu0 0.0
  %2880 = vmatmul.mubr.f32.gmra.mrb[0].mxu0 %v2644
  %v2881 = vpop.f32.mrb[0].mxu0
  %v2882 = vadd.f32 0.0, %v2881
  %v2883 = vpop.f32.mrb[0].mxu0
  %v2884 = vadd.f32 0.0, %v2883
  %2885 = vdwg.mxu0
  %2886 = vmatprep.subr.mxu0 %v408
  %2887 = vmatpush1.msra.mxu0 %v407
  %2888 = vmatprep.subr.mxu0 %v412
  %2889 = vmatpush1.msra.mxu0 %v411
  %2890 = vmatprep.subr.mxu0 %v416
  %2891 = vmatpush1.msra.mxu0 %v415
  %2892 = vmatprep.subr.mxu0 %v420
  %2893 = vmatpush1.msra.mxu0 %v419
  %2894 = vmatprep.subr.mxu0 %v424
  %2895 = vmatpush1.msra.mxu0 %v423
  %2896 = vmatprep.subr.mxu0 %v428
  %2897 = vmatpush1.msra.mxu0 %v427
  %2898 = vmatprep.subr.mxu0 %v432
  %2899 = vmatpush1.msra.mxu0 %v431
  %2900 = vmatprep.subr.mxu0 %v436
  %2901 = vmatpush1.msra.mxu0 %v435
  %2902 = vmatprep.subr.mxu0 %v440
  %2903 = vmatpush1.msra.mxu0 %v439
  %2904 = vmatprep.subr.mxu0 %v444
  %2905 = vmatpush1.msra.mxu0 %v443
  %2906 = vmatprep.subr.mxu0 %v448
  %2907 = vmatpush1.msra.mxu0 %v447
  %2908 = vmatprep.subr.mxu0 %v452
  %2909 = vmatpush1.msra.mxu0 %v451
  %2910 = vmatprep.subr.mxu0 %v456
  %2911 = vmatpush1.msra.mxu0 %v455
  %2912 = vmatprep.subr.mxu0 %v460
  %2913 = vmatpush1.msra.mxu0 %v459
  %2914 = vmatprep.subr.mxu0 %v464
  %2915 = vmatpush1.msra.mxu0 %v463
  %2916 = vmatprep.subr.mxu0 %v468
  %2917 = vmatpush1.msra.mxu0 %v467
  %2918 = vmatprep.subr.mxu0 0.0
  %2919 = vmatpush1.msra.mxu0 0.0
  %2920 = vmatprep.subr.mxu0 0.0
  %2921 = vmatpush1.msra.mxu0 0.0
  %2922 = vmatprep.subr.mxu0 0.0
  %2923 = vmatpush1.msra.mxu0 0.0
  %2924 = vmatprep.subr.mxu0 0.0
  %2925 = vmatpush1.msra.mxu0 0.0
  %2926 = vmatprep.subr.mxu0 0.0
  %2927 = vmatpush1.msra.mxu0 0.0
  %2928 = vmatprep.subr.mxu0 0.0
  %2929 = vmatpush1.msra.mxu0 0.0
  %2930 = vmatprep.subr.mxu0 0.0
  %2931 = vmatpush1.msra.mxu0 0.0
  %2932 = vmatprep.subr.mxu0 0.0
  %2933 = vmatpush1.msra.mxu0 0.0
  %2934 = vmatprep.subr.mxu0 0.0
  %2935 = vmatpush1.msra.mxu0 0.0
  %2936 = vmatprep.subr.mxu0 0.0
  %2937 = vmatpush1.msra.mxu0 0.0
  %2938 = vmatprep.subr.mxu0 0.0
  %2939 = vmatpush1.msra.mxu0 0.0
  %2940 = vmatprep.subr.mxu0 0.0
  %2941 = vmatpush1.msra.mxu0 0.0
  %2942 = vmatprep.subr.mxu0 0.0
  %2943 = vmatpush1.msra.mxu0 0.0
  %2944 = vmatprep.subr.mxu0 0.0
  %2945 = vmatpush1.msra.mxu0 0.0
  %2946 = vmatprep.subr.mxu0 0.0
  %2947 = vmatpush1.msra.mxu0 0.0
  %2948 = vmatprep.subr.mxu0 0.0
  %2949 = vmatpush1.msra.mxu0 0.0
  %2950 = vmatprep.mubr.f32.mxu0 0.0
  %2951 = vmatmul.mubr.f32.gmra.mrb[0].mxu0 %v2644
  %v2952 = vpop.f32.mrb[0].mxu0
  %v2953 = vadd.f32 0.0, %v2952
  %v2954 = vpop.f32.mrb[0].mxu0
  %v2955 = vadd.f32 0.0, %v2954
  %2956 = vdwg.mxu0
  %v2961 = vcombine.low %v2882, %v2884
  %v2962 = vcombine.low %v2953, %v2955
  %v2964 = vunpack.c.l.s4 1983009808
  %v2965 = vunpack.c.0.s8 %v2964
  %v2966 = vlaneseq
  %v2967 = vshrl.u32 %v2966, 7
  %v2968 = vsub.s32 %v2965, %v2967
  %v2969 = vrot.slane %v2961, %v2968
  %v2971 = vunpack.c.l.s4 1983009808
  %v2972 = vunpack.c.0.s8 %v2971
  %v2973 = vlaneseq
  %v2974 = vshrl.u32 %v2973, 7
  %v2975 = vsub.s32 %v2972, %v2974
  %v2976 = vrot.slane %v2962, %v2975
  %v2977 = vcombine.low %v2969, %v2976
  %v2979 = vadd.f32 %v2814, %v2977
  %v2980 = vxor.u32 %v2979, 2147483648
  %v2981 = vmul.f32 %v2980, 1.442695
  %v2982 = vpow.pop %v2981
  %v2983 = vadd.f32 %v2982, 1.0
  %v2984 = vrcp.pop %v2983
  %v2985 = vmul.f32 1.0, %v2984
  %v2987 = vrot.slane %v2979, 2
  %v2989 = vxor.u32 %v2987, 2147483648
  %v2990 = vmul.f32 %v2989, 1.442695
  %v2991 = vpow.pop %v2990
  %v2992 = vadd.f32 %v2991, 1.0
  %v2993 = vrcp.pop %v2992
  %v2994 = vmul.f32 1.0, %v2993
  %v2995 = vrot.slane %v2979, 4
  %v2997 = vtanh.pop %v2995
  %v2998 = vrot.slane %v2979, 6
  %v3000 = vxor.u32 %v2998, 2147483648
  %v3001 = vmul.f32 %v3000, 1.442695
  %v3002 = vpow.pop %v3001
  %v3003 = vadd.f32 %v3002, 1.0
  %v3004 = vrcp.pop %v3003
  %v3005 = vmul.f32 1.0, %v3004
  %v3006 = vmul.f32 %v2994, %v2642
  %v3007 = vmul.f32 %v2985, %v2997
  %v3008 = vadd.f32 %v3006, %v3007
  %v3009 = vtanh.pop %v3008
  %v3010 = vmul.f32 %v3005, %v3009
  %3011 = vmatprep.subr.mxu0 %v470
  %3012 = vmatpush1.msra.mxu0 %v469
  %3013 = vmatprep.subr.mxu0 %v474
  %3014 = vmatpush1.msra.mxu0 %v473
  %3015 = vmatprep.subr.mxu0 %v478
  %3016 = vmatpush1.msra.mxu0 %v477
  %3017 = vmatprep.subr.mxu0 %v482
  %3018 = vmatpush1.msra.mxu0 %v481
  %3019 = vmatprep.subr.mxu0 %v486
  %3020 = vmatpush1.msra.mxu0 %v485
  %3021 = vmatprep.subr.mxu0 %v490
  %3022 = vmatpush1.msra.mxu0 %v489
  %3023 = vmatprep.subr.mxu0 %v494
  %3024 = vmatpush1.msra.mxu0 %v493
  %3025 = vmatprep.subr.mxu0 %v498
  %3026 = vmatpush1.msra.mxu0 %v497
  %3027 = vmatprep.subr.mxu0 %v502
  %3028 = vmatpush1.msra.mxu0 %v501
  %3029 = vmatprep.subr.mxu0 %v506
  %3030 = vmatpush1.msra.mxu0 %v505
  %3031 = vmatprep.subr.mxu0 %v510
  %3032 = vmatpush1.msra.mxu0 %v509
  %3033 = vmatprep.subr.mxu0 %v514
  %3034 = vmatpush1.msra.mxu0 %v513
  %3035 = vmatprep.subr.mxu0 %v518
  %3036 = vmatpush1.msra.mxu0 %v517
  %3037 = vmatprep.subr.mxu0 %v522
  %3038 = vmatpush1.msra.mxu0 %v521
  %3039 = vmatprep.subr.mxu0 %v526
  %3040 = vmatpush1.msra.mxu0 %v525
  %3041 = vmatprep.subr.mxu0 %v530
  %3042 = vmatpush1.msra.mxu0 %v529
  %3043 = vmatprep.subr.mxu0 %v534
  %3044 = vmatpush1.msra.mxu0 %v533
  %3045 = vmatprep.subr.mxu0 %v538
  %3046 = vmatpush1.msra.mxu0 %v537
  %3047 = vmatprep.subr.mxu0 %v542
  %3048 = vmatpush1.msra.mxu0 %v541
  %3049 = vmatprep.subr.mxu0 %v546
  %3050 = vmatpush1.msra.mxu0 %v545
  %3051 = vmatprep.subr.mxu0 %v550
  %3052 = vmatpush1.msra.mxu0 %v549
  %3053 = vmatprep.subr.mxu0 %v554
  %3054 = vmatpush1.msra.mxu0 %v553
  %3055 = vmatprep.subr.mxu0 %v558
  %3056 = vmatpush1.msra.mxu0 %v557
  %3057 = vmatprep.subr.mxu0 %v562
  %3058 = vmatpush1.msra.mxu0 %v561
  %3059 = vmatprep.subr.mxu0 %v566
  %3060 = vmatpush1.msra.mxu0 %v565
  %3061 = vmatprep.subr.mxu0 %v570
  %3062 = vmatpush1.msra.mxu0 %v569
  %3063 = vmatprep.subr.mxu0 %v574
  %3064 = vmatpush1.msra.mxu0 %v573
  %3065 = vmatprep.subr.mxu0 %v578
  %3066 = vmatpush1.msra.mxu0 %v577
  %3067 = vmatprep.subr.mxu0 %v582
  %3068 = vmatpush1.msra.mxu0 %v581
  %3069 = vmatprep.subr.mxu0 %v586
  %3070 = vmatpush1.msra.mxu0 %v585
  %3071 = vmatprep.subr.mxu0 %v590
  %3072 = vmatpush1.msra.mxu0 %v589
  %3073 = vmatprep.subr.mxu0 %v594
  %3074 = vmatpush1.msra.mxu0 %v593
  %3075 = vmatprep.mubr.f32.mxu0 %v2810
  %3076 = vmatmul.mubr.f32.gmra.mrb[0].mxu0 %v3010
  %v3077 = vpop.f32.mrb[0].mxu0
  %v3078 = vadd.f32 %v602, %v3077
  %v3079 = vpop.f32.mrb[0].mxu0
  %v3080 = vadd.f32 %v606, %v3079
  %3081 = vdwg.mxu0
  %3082 = vmatprep.subr.mxu0 %v472
  %3083 = vmatpush1.msra.mxu0 %v471
  %3084 = vmatprep.subr.mxu0 %v476
  %3085 = vmatpush1.msra.mxu0 %v475
  %3086 = vmatprep.subr.mxu0 %v480
  %3087 = vmatpush1.msra.mxu0 %v479
  %3088 = vmatprep.subr.mxu0 %v484
  %3089 = vmatpush1.msra.mxu0 %v483
  %3090 = vmatprep.subr.mxu0 %v488
  %3091 = vmatpush1.msra.mxu0 %v487
  %3092 = vmatprep.subr.mxu0 %v492
  %3093 = vmatpush1.msra.mxu0 %v491
  %3094 = vmatprep.subr.mxu0 %v496
  %3095 = vmatpush1.msra.mxu0 %v495
  %3096 = vmatprep.subr.mxu0 %v500
  %3097 = vmatpush1.msra.mxu0 %v499
  %3098 = vmatprep.subr.mxu0 %v504
  %3099 = vmatpush1.msra.mxu0 %v503
  %3100 = vmatprep.subr.mxu0 %v508
  %3101 = vmatpush1.msra.mxu0 %v507
  %3102 = vmatprep.subr.mxu0 %v512
  %3103 = vmatpush1.msra.mxu0 %v511
  %3104 = vmatprep.subr.mxu0 %v516
  %3105 = vmatpush1.msra.mxu0 %v515
  %3106 = vmatprep.subr.mxu0 %v520
  %3107 = vmatpush1.msra.mxu0 %v519
  %3108 = vmatprep.subr.mxu0 %v524
  %3109 = vmatpush1.msra.mxu0 %v523
  %3110 = vmatprep.subr.mxu0 %v528
  %3111 = vmatpush1.msra.mxu0 %v527
  %3112 = vmatprep.subr.mxu0 %v532
  %3113 = vmatpush1.msra.mxu0 %v531
  %3114 = vmatprep.subr.mxu0 %v536
  %3115 = vmatpush1.msra.mxu0 %v535
  %3116 = vmatprep.subr.mxu0 %v540
  %3117 = vmatpush1.msra.mxu0 %v539
  %3118 = vmatprep.subr.mxu0 %v544
  %3119 = vmatpush1.msra.mxu0 %v543
  %3120 = vmatprep.subr.mxu0 %v548
  %3121 = vmatpush1.msra.mxu0 %v547
  %3122 = vmatprep.subr.mxu0 %v552
  %3123 = vmatpush1.msra.mxu0 %v551
  %3124 = vmatprep.subr.mxu0 %v556
  %3125 = vmatpush1.msra.mxu0 %v555
  %3126 = vmatprep.subr.mxu0 %v560
  %3127 = vmatpush1.msra.mxu0 %v559
  %3128 = vmatprep.subr.mxu0 %v564
  %3129 = vmatpush1.msra.mxu0 %v563
  %3130 = vmatprep.subr.mxu0 %v568
  %3131 = vmatpush1.msra.mxu0 %v567
  %3132 = vmatprep.subr.mxu0 %v572
  %3133 = vmatpush1.msra.mxu0 %v571
  %3134 = vmatprep.subr.mxu0 %v576
  %3135 = vmatpush1.msra.mxu0 %v575
  %3136 = vmatprep.subr.mxu0 %v580
  %3137 = vmatpush1.msra.mxu0 %v579
  %3138 = vmatprep.subr.mxu0 %v584
  %3139 = vmatpush1.msra.mxu0 %v583
  %3140 = vmatprep.subr.mxu0 %v588
  %3141 = vmatpush1.msra.mxu0 %v587
  %3142 = vmatprep.subr.mxu0 %v592
  %3143 = vmatpush1.msra.mxu0 %v591
  %3144 = vmatprep.subr.mxu0 %v596
  %3145 = vmatpush1.msra.mxu0 %v595
  %3146 = vmatprep.mubr.f32.mxu0 %v2810
  %3147 = vmatmul.mubr.f32.gmra.mrb[0].mxu0 %v3010
  %v3148 = vpop.f32.mrb[0].mxu0
  %v3149 = vadd.f32 %v610, %v3148
  %v3150 = vpop.f32.mrb[0].mxu0
  %v3151 = vadd.f32 %v614, %v3150
  %3152 = vdwg.mxu0
  %v3153 = vxor.u32 %v3078, 2147483648
  %v3154 = vmul.f32 %v3153, 1.442695
  %v3155 = vpow.pop %v3154
  %v3156 = vadd.f32 %v3155, 1.0
  %v3157 = vrcp.pop %v3156
  %v3158 = vmul.f32 1.0, %v3157
  %v3159 = vxor.u32 %v3080, 2147483648
  %v3160 = vmul.f32 %v3159, 1.442695
  %v3161 = vpow.pop %v3160
  %v3162 = vadd.f32 %v3161, 1.0
  %v3163 = vrcp.pop %v3162
  %v3164 = vmul.f32 1.0, %v3163
  %v3165 = vtanh.pop %v3149
  %v3166 = vxor.u32 %v3151, 2147483648
  %v3167 = vmul.f32 %v3166, 1.442695
  %v3168 = vpow.pop %v3167
  %v3169 = vadd.f32 %v3168, 1.0
  %v3170 = vrcp.pop %v3169
  %v3171 = vmul.f32 1.0, %v3170
  %v3172 = vmul.f32 %v3164, %v2808
  %v3173 = vmul.f32 %v3158, %v3165
  %v3174 = vadd.f32 %v3172, %v3173
  %v3175 = vtanh.pop %v3174
  %v3176 = vmul.f32 %v3171, %v3175
  %s3177 = scalar_lea.vmem [#allocation3], 12
  %3178 = vst [vmem:[%s3177] sm:$0x3] %v3176
  %s3179 = scalar_lea.vmem [#allocation2], 56
  %v3180 = vld [vmem:[%s3179] sm:$0xff]
  %3181 = vmatprep.subr.mxu0 %v406
  %3182 = vmatpush1.msra.mxu0 %v405
  %3183 = vmatprep.subr.mxu0 %v410
  %3184 = vmatpush1.msra.mxu0 %v409
  %3185 = vmatprep.subr.mxu0 %v414
  %3186 = vmatpush1.msra.mxu0 %v413
  %3187 = vmatprep.subr.mxu0 %v418
  %3188 = vmatpush1.msra.mxu0 %v417
  %3189 = vmatprep.subr.mxu0 %v422
  %3190 = vmatpush1.msra.mxu0 %v421
  %3191 = vmatprep.subr.mxu0 %v426
  %3192 = vmatpush1.msra.mxu0 %v425
  %3193 = vmatprep.subr.mxu0 %v430
  %3194 = vmatpush1.msra.mxu0 %v429
  %3195 = vmatprep.subr.mxu0 %v434
  %3196 = vmatpush1.msra.mxu0 %v433
  %3197 = vmatprep.subr.mxu0 %v438
  %3198 = vmatpush1.msra.mxu0 %v437
  %3199 = vmatprep.subr.mxu0 %v442
  %3200 = vmatpush1.msra.mxu0 %v441
  %3201 = vmatprep.subr.mxu0 %v446
  %3202 = vmatpush1.msra.mxu0 %v445
  %3203 = vmatprep.subr.mxu0 %v450
  %3204 = vmatpush1.msra.mxu0 %v449
  %3205 = vmatprep.subr.mxu0 %v454
  %3206 = vmatpush1.msra.mxu0 %v453
  %3207 = vmatprep.subr.mxu0 %v458
  %3208 = vmatpush1.msra.mxu0 %v457
  %3209 = vmatprep.subr.mxu0 %v462
  %3210 = vmatpush1.msra.mxu0 %v461
  %3211 = vmatprep.subr.mxu0 %v466
  %3212 = vmatpush1.msra.mxu0 %v465
  %3213 = vmatprep.subr.mxu0 0.0
  %3214 = vmatpush1.msra.mxu0 0.0
  %3215 = vmatprep.subr.mxu0 0.0
  %3216 = vmatpush1.msra.mxu0 0.0
  %3217 = vmatprep.subr.mxu0 0.0
  %3218 = vmatpush1.msra.mxu0 0.0
  %3219 = vmatprep.subr.mxu0 0.0
  %3220 = vmatpush1.msra.mxu0 0.0
  %3221 = vmatprep.subr.mxu0 0.0
  %3222 = vmatpush1.msra.mxu0 0.0
  %3223 = vmatprep.subr.mxu0 0.0
  %3224 = vmatpush1.msra.mxu0 0.0
  %3225 = vmatprep.subr.mxu0 0.0
  %3226 = vmatpush1.msra.mxu0 0.0
  %3227 = vmatprep.subr.mxu0 0.0
  %3228 = vmatpush1.msra.mxu0 0.0
  %3229 = vmatprep.subr.mxu0 0.0
  %3230 = vmatpush1.msra.mxu0 0.0
  %3231 = vmatprep.subr.mxu0 0.0
  %3232 = vmatpush1.msra.mxu0 0.0
  %3233 = vmatprep.subr.mxu0 0.0
  %3234 = vmatpush1.msra.mxu0 0.0
  %3235 = vmatprep.subr.mxu0 0.0
  %3236 = vmatpush1.msra.mxu0 0.0
  %3237 = vmatprep.subr.mxu0 0.0
  %3238 = vmatpush1.msra.mxu0 0.0
  %3239 = vmatprep.subr.mxu0 0.0
  %3240 = vmatpush1.msra.mxu0 0.0
  %3241 = vmatprep.subr.mxu0 0.0
  %3242 = vmatpush1.msra.mxu0 0.0
  %3243 = vmatprep.subr.mxu0 0.0
  %3244 = vmatpush1.msra.mxu0 0.0
  %3245 = vmatprep.mubr.f32.mxu0 0.0
  %3246 = vmatmul.mubr.f32.gmra.mrb[0].mxu0 %v3010
  %v3247 = vpop.f32.mrb[0].mxu0
  %v3248 = vadd.f32 0.0, %v3247
  %v3249 = vpop.f32.mrb[0].mxu0
  %v3250 = vadd.f32 0.0, %v3249
  %3251 = vdwg.mxu0
  %3252 = vmatprep.subr.mxu0 %v408
  %3253 = vmatpush1.msra.mxu0 %v407
  %3254 = vmatprep.subr.mxu0 %v412
  %3255 = vmatpush1.msra.mxu0 %v411
  %3256 = vmatprep.subr.mxu0 %v416
  %3257 = vmatpush1.msra.mxu0 %v415
  %3258 = vmatprep.subr.mxu0 %v420
  %3259 = vmatpush1.msra.mxu0 %v419
  %3260 = vmatprep.subr.mxu0 %v424
  %3261 = vmatpush1.msra.mxu0 %v423
  %3262 = vmatprep.subr.mxu0 %v428
  %3263 = vmatpush1.msra.mxu0 %v427
  %3264 = vmatprep.subr.mxu0 %v432
  %3265 = vmatpush1.msra.mxu0 %v431
  %3266 = vmatprep.subr.mxu0 %v436
  %3267 = vmatpush1.msra.mxu0 %v435
  %3268 = vmatprep.subr.mxu0 %v440
  %3269 = vmatpush1.msra.mxu0 %v439
  %3270 = vmatprep.subr.mxu0 %v444
  %3271 = vmatpush1.msra.mxu0 %v443
  %3272 = vmatprep.subr.mxu0 %v448
  %3273 = vmatpush1.msra.mxu0 %v447
  %3274 = vmatprep.subr.mxu0 %v452
  %3275 = vmatpush1.msra.mxu0 %v451
  %3276 = vmatprep.subr.mxu0 %v456
  %3277 = vmatpush1.msra.mxu0 %v455
  %3278 = vmatprep.subr.mxu0 %v460
  %3279 = vmatpush1.msra.mxu0 %v459
  %3280 = vmatprep.subr.mxu0 %v464
  %3281 = vmatpush1.msra.mxu0 %v463
  %3282 = vmatprep.subr.mxu0 %v468
  %3283 = vmatpush1.msra.mxu0 %v467
  %3284 = vmatprep.subr.mxu0 0.0
  %3285 = vmatpush1.msra.mxu0 0.0
  %3286 = vmatprep.subr.mxu0 0.0
  %3287 = vmatpush1.msra.mxu0 0.0
  %3288 = vmatprep.subr.mxu0 0.0
  %3289 = vmatpush1.msra.mxu0 0.0
  %3290 = vmatprep.subr.mxu0 0.0
  %3291 = vmatpush1.msra.mxu0 0.0
  %3292 = vmatprep.subr.mxu0 0.0
  %3293 = vmatpush1.msra.mxu0 0.0
  %3294 = vmatprep.subr.mxu0 0.0
  %3295 = vmatpush1.msra.mxu0 0.0
  %3296 = vmatprep.subr.mxu0 0.0
  %3297 = vmatpush1.msra.mxu0 0.0
  %3298 = vmatprep.subr.mxu0 0.0
  %3299 = vmatpush1.msra.mxu0 0.0
  %3300 = vmatprep.subr.mxu0 0.0
  %3301 = vmatpush1.msra.mxu0 0.0
  %3302 = vmatprep.subr.mxu0 0.0
  %3303 = vmatpush1.msra.mxu0 0.0
  %3304 = vmatprep.subr.mxu0 0.0
  %3305 = vmatpush1.msra.mxu0 0.0
  %3306 = vmatprep.subr.mxu0 0.0
  %3307 = vmatpush1.msra.mxu0 0.0
  %3308 = vmatprep.subr.mxu0 0.0
  %3309 = vmatpush1.msra.mxu0 0.0
  %3310 = vmatprep.subr.mxu0 0.0
  %3311 = vmatpush1.msra.mxu0 0.0
  %3312 = vmatprep.subr.mxu0 0.0
  %3313 = vmatpush1.msra.mxu0 0.0
  %3314 = vmatprep.subr.mxu0 0.0
  %3315 = vmatpush1.msra.mxu0 0.0
  %3316 = vmatprep.mubr.f32.mxu0 0.0
  %3317 = vmatmul.mubr.f32.gmra.mrb[0].mxu0 %v3010
  %v3318 = vpop.f32.mrb[0].mxu0
  %v3319 = vadd.f32 0.0, %v3318
  %v3320 = vpop.f32.mrb[0].mxu0
  %v3321 = vadd.f32 0.0, %v3320
  %3322 = vdwg.mxu0
  %v3327 = vcombine.low %v3248, %v3250
  %v3328 = vcombine.low %v3319, %v3321
  %v3330 = vunpack.c.l.s4 1983009808
  %v3331 = vunpack.c.0.s8 %v3330
  %v3332 = vlaneseq
  %v3333 = vshrl.u32 %v3332, 7
  %v3334 = vsub.s32 %v3331, %v3333
  %v3335 = vrot.slane %v3327, %v3334
  %v3337 = vunpack.c.l.s4 1983009808
  %v3338 = vunpack.c.0.s8 %v3337
  %v3339 = vlaneseq
  %v3340 = vshrl.u32 %v3339, 7
  %v3341 = vsub.s32 %v3338, %v3340
  %v3342 = vrot.slane %v3328, %v3341
  %v3343 = vcombine.low %v3335, %v3342
  %v3345 = vadd.f32 %v3180, %v3343
  %v3346 = vxor.u32 %v3345, 2147483648
  %v3347 = vmul.f32 %v3346, 1.442695
  %v3348 = vpow.pop %v3347
  %v3349 = vadd.f32 %v3348, 1.0
  %v3350 = vrcp.pop %v3349
  %v3351 = vmul.f32 1.0, %v3350
  %v3353 = vrot.slane %v3345, 2
  %v3355 = vxor.u32 %v3353, 2147483648
  %v3356 = vmul.f32 %v3355, 1.442695
  %v3357 = vpow.pop %v3356
  %v3358 = vadd.f32 %v3357, 1.0
  %v3359 = vrcp.pop %v3358
  %v3360 = vmul.f32 1.0, %v3359
  %v3361 = vrot.slane %v3345, 4
  %v3363 = vtanh.pop %v3361
  %v3364 = vrot.slane %v3345, 6
  %v3366 = vxor.u32 %v3364, 2147483648
  %v3367 = vmul.f32 %v3366, 1.442695
  %v3368 = vpow.pop %v3367
  %v3369 = vadd.f32 %v3368, 1.0
  %v3370 = vrcp.pop %v3369
  %v3371 = vmul.f32 1.0, %v3370
  %v3372 = vmul.f32 %v3360, %v3008
  %v3373 = vmul.f32 %v3351, %v3363
  %v3374 = vadd.f32 %v3372, %v3373
  %v3375 = vtanh.pop %v3374
  %v3376 = vmul.f32 %v3371, %v3375
  %3377 = vmatprep.subr.mxu0 %v470
  %3378 = vmatpush1.msra.mxu0 %v469
  %3379 = vmatprep.subr.mxu0 %v474
  %3380 = vmatpush1.msra.mxu0 %v473
  %3381 = vmatprep.subr.mxu0 %v478
  %3382 = vmatpush1.msra.mxu0 %v477
  %3383 = vmatprep.subr.mxu0 %v482
  %3384 = vmatpush1.msra.mxu0 %v481
  %3385 = vmatprep.subr.mxu0 %v486
  %3386 = vmatpush1.msra.mxu0 %v485
  %3387 = vmatprep.subr.mxu0 %v490
  %3388 = vmatpush1.msra.mxu0 %v489
  %3389 = vmatprep.subr.mxu0 %v494
  %3390 = vmatpush1.msra.mxu0 %v493
  %3391 = vmatprep.subr.mxu0 %v498
  %3392 = vmatpush1.msra.mxu0 %v497
  %3393 = vmatprep.subr.mxu0 %v502
  %3394 = vmatpush1.msra.mxu0 %v501
  %3395 = vmatprep.subr.mxu0 %v506
  %3396 = vmatpush1.msra.mxu0 %v505
  %3397 = vmatprep.subr.mxu0 %v510
  %3398 = vmatpush1.msra.mxu0 %v509
  %3399 = vmatprep.subr.mxu0 %v514
  %3400 = vmatpush1.msra.mxu0 %v513
  %3401 = vmatprep.subr.mxu0 %v518
  %3402 = vmatpush1.msra.mxu0 %v517
  %3403 = vmatprep.subr.mxu0 %v522
  %3404 = vmatpush1.msra.mxu0 %v521
  %3405 = vmatprep.subr.mxu0 %v526
  %3406 = vmatpush1.msra.mxu0 %v525
  %3407 = vmatprep.subr.mxu0 %v530
  %3408 = vmatpush1.msra.mxu0 %v529
  %3409 = vmatprep.subr.mxu0 %v534
  %3410 = vmatpush1.msra.mxu0 %v533
  %3411 = vmatprep.subr.mxu0 %v538
  %3412 = vmatpush1.msra.mxu0 %v537
  %3413 = vmatprep.subr.mxu0 %v542
  %3414 = vmatpush1.msra.mxu0 %v541
  %3415 = vmatprep.subr.mxu0 %v546
  %3416 = vmatpush1.msra.mxu0 %v545
  %3417 = vmatprep.subr.mxu0 %v550
  %3418 = vmatpush1.msra.mxu0 %v549
  %3419 = vmatprep.subr.mxu0 %v554
  %3420 = vmatpush1.msra.mxu0 %v553
  %3421 = vmatprep.subr.mxu0 %v558
  %3422 = vmatpush1.msra.mxu0 %v557
  %3423 = vmatprep.subr.mxu0 %v562
  %3424 = vmatpush1.msra.mxu0 %v561
  %3425 = vmatprep.subr.mxu0 %v566
  %3426 = vmatpush1.msra.mxu0 %v565
  %3427 = vmatprep.subr.mxu0 %v570
  %3428 = vmatpush1.msra.mxu0 %v569
  %3429 = vmatprep.subr.mxu0 %v574
  %3430 = vmatpush1.msra.mxu0 %v573
  %3431 = vmatprep.subr.mxu0 %v578
  %3432 = vmatpush1.msra.mxu0 %v577
  %3433 = vmatprep.subr.mxu0 %v582
  %3434 = vmatpush1.msra.mxu0 %v581
  %3435 = vmatprep.subr.mxu0 %v586
  %3436 = vmatpush1.msra.mxu0 %v585
  %3437 = vmatprep.subr.mxu0 %v590
  %3438 = vmatpush1.msra.mxu0 %v589
  %3439 = vmatprep.subr.mxu0 %v594
  %3440 = vmatpush1.msra.mxu0 %v593
  %3441 = vmatprep.mubr.f32.mxu0 %v3176
  %3442 = vmatmul.mubr.f32.gmra.mrb[0].mxu0 %v3376
  %v3443 = vpop.f32.mrb[0].mxu0
  %v3444 = vadd.f32 %v602, %v3443
  %v3445 = vpop.f32.mrb[0].mxu0
  %v3446 = vadd.f32 %v606, %v3445
  %3447 = vdwg.mxu0
  %3448 = vmatprep.subr.mxu0 %v472
  %3449 = vmatpush1.msra.mxu0 %v471
  %3450 = vmatprep.subr.mxu0 %v476
  %3451 = vmatpush1.msra.mxu0 %v475
  %3452 = vmatprep.subr.mxu0 %v480
  %3453 = vmatpush1.msra.mxu0 %v479
  %3454 = vmatprep.subr.mxu0 %v484
  %3455 = vmatpush1.msra.mxu0 %v483
  %3456 = vmatprep.subr.mxu0 %v488
  %3457 = vmatpush1.msra.mxu0 %v487
  %3458 = vmatprep.subr.mxu0 %v492
  %3459 = vmatpush1.msra.mxu0 %v491
  %3460 = vmatprep.subr.mxu0 %v496
  %3461 = vmatpush1.msra.mxu0 %v495
  %3462 = vmatprep.subr.mxu0 %v500
  %3463 = vmatpush1.msra.mxu0 %v499
  %3464 = vmatprep.subr.mxu0 %v504
  %3465 = vmatpush1.msra.mxu0 %v503
  %3466 = vmatprep.subr.mxu0 %v508
  %3467 = vmatpush1.msra.mxu0 %v507
  %3468 = vmatprep.subr.mxu0 %v512
  %3469 = vmatpush1.msra.mxu0 %v511
  %3470 = vmatprep.subr.mxu0 %v516
  %3471 = vmatpush1.msra.mxu0 %v515
  %3472 = vmatprep.subr.mxu0 %v520
  %3473 = vmatpush1.msra.mxu0 %v519
  %3474 = vmatprep.subr.mxu0 %v524
  %3475 = vmatpush1.msra.mxu0 %v523
  %3476 = vmatprep.subr.mxu0 %v528
  %3477 = vmatpush1.msra.mxu0 %v527
  %3478 = vmatprep.subr.mxu0 %v532
  %3479 = vmatpush1.msra.mxu0 %v531
  %3480 = vmatprep.subr.mxu0 %v536
  %3481 = vmatpush1.msra.mxu0 %v535
  %3482 = vmatprep.subr.mxu0 %v540
  %3483 = vmatpush1.msra.mxu0 %v539
  %3484 = vmatprep.subr.mxu0 %v544
  %3485 = vmatpush1.msra.mxu0 %v543
  %3486 = vmatprep.subr.mxu0 %v548
  %3487 = vmatpush1.msra.mxu0 %v547
  %3488 = vmatprep.subr.mxu0 %v552
  %3489 = vmatpush1.msra.mxu0 %v551
  %3490 = vmatprep.subr.mxu0 %v556
  %3491 = vmatpush1.msra.mxu0 %v555
  %3492 = vmatprep.subr.mxu0 %v560
  %3493 = vmatpush1.msra.mxu0 %v559
  %3494 = vmatprep.subr.mxu0 %v564
  %3495 = vmatpush1.msra.mxu0 %v563
  %3496 = vmatprep.subr.mxu0 %v568
  %3497 = vmatpush1.msra.mxu0 %v567
  %3498 = vmatprep.subr.mxu0 %v572
  %3499 = vmatpush1.msra.mxu0 %v571
  %3500 = vmatprep.subr.mxu0 %v576
  %3501 = vmatpush1.msra.mxu0 %v575
  %3502 = vmatprep.subr.mxu0 %v580
  %3503 = vmatpush1.msra.mxu0 %v579
  %3504 = vmatprep.subr.mxu0 %v584
  %3505 = vmatpush1.msra.mxu0 %v583
  %3506 = vmatprep.subr.mxu0 %v588
  %3507 = vmatpush1.msra.mxu0 %v587
  %3508 = vmatprep.subr.mxu0 %v592
  %3509 = vmatpush1.msra.mxu0 %v591
  %3510 = vmatprep.subr.mxu0 %v596
  %3511 = vmatpush1.msra.mxu0 %v595
  %3512 = vmatprep.mubr.f32.mxu0 %v3176
  %3513 = vmatmul.mubr.f32.gmra.mrb[0].mxu0 %v3376
  %v3514 = vpop.f32.mrb[0].mxu0
  %v3515 = vadd.f32 %v610, %v3514
  %v3516 = vpop.f32.mrb[0].mxu0
  %v3517 = vadd.f32 %v614, %v3516
  %3518 = vdwg.mxu0
  %v3519 = vxor.u32 %v3444, 2147483648
  %v3520 = vmul.f32 %v3519, 1.442695
  %v3521 = vpow.pop %v3520
  %v3522 = vadd.f32 %v3521, 1.0
  %v3523 = vrcp.pop %v3522
  %v3524 = vmul.f32 1.0, %v3523
  %v3525 = vxor.u32 %v3446, 2147483648
  %v3526 = vmul.f32 %v3525, 1.442695
  %v3527 = vpow.pop %v3526
  %v3528 = vadd.f32 %v3527, 1.0
  %v3529 = vrcp.pop %v3528
  %v3530 = vmul.f32 1.0, %v3529
  %v3531 = vtanh.pop %v3515
  %v3532 = vxor.u32 %v3517, 2147483648
  %v3533 = vmul.f32 %v3532, 1.442695
  %v3534 = vpow.pop %v3533
  %v3535 = vadd.f32 %v3534, 1.0
  %v3536 = vrcp.pop %v3535
  %v3537 = vmul.f32 1.0, %v3536
  %v3538 = vmul.f32 %v3530, %v3174
  %v3539 = vmul.f32 %v3524, %v3531
  %v3540 = vadd.f32 %v3538, %v3539
  %v3541 = vtanh.pop %v3540
  %v3542 = vmul.f32 %v3537, %v3541
  %s3543 = scalar_lea.vmem [#allocation3], 14
  %3544 = vst [vmem:[%s3543] sm:$0x3] %v3542
  %v3545 = vld [vmem:[#allocation3] sm:$0x3]
  %v3546 = vld [vmem:[#allocation3 + $0x2] sm:$0x3]
  %v3547 = vld [vmem:[#allocation3 + $0x4] sm:$0x3]
  %v3548 = vld [vmem:[#allocation3 + $0x6] sm:$0x3]
  %v3549 = vld [vmem:[#allocation3 + $0x8] sm:$0x3]
  %v3550 = vld [vmem:[#allocation3 + $0xa] sm:$0x3]
  %v3551 = vld [vmem:[#allocation3 + $0xc] sm:$0x3]
  %v3552 = vld [vmem:[#allocation3 + $0xe] sm:$0x3]
  %v3553 = vld [vmem:[%s6] sm:$0xff]
  %v3554 = vld [vmem:[%s6 + $0x8] sm:$0xff]
  %v3555 = vld [vmem:[%s6 + $0x10] sm:$0xff]
  %v3556 = vld [vmem:[%s6 + $0x18] sm:$0xff]
  %v3557 = vld [vmem:[%s6 + $0x20] sm:$0xff]
  %v3558 = vld [vmem:[%s6 + $0x28] sm:$0xff]
  %v3559 = vld [vmem:[%s6 + $0x30] sm:$0xff]
  %v3560 = vld [vmem:[%s6 + $0x38] sm:$0xff]
  %v3561 = vld [vmem:[%s6 + $0x40] sm:$0xff]
  %v3562 = vld [vmem:[%s6 + $0x48] sm:$0xff]
  %v3563 = vld [vmem:[%s6 + $0x50] sm:$0xff]
  %v3564 = vld [vmem:[%s6 + $0x58] sm:$0xff]
  %v3565 = vld [vmem:[%s6 + $0x60] sm:$0xff]
  %v3566 = vld [vmem:[%s6 + $0x68] sm:$0xff]
  %v3567 = vld [vmem:[%s6 + $0x70] sm:$0xff]
  %v3568 = vld [vmem:[%s6 + $0x78] sm:$0xff]
  %v3569 = vld [vmem:[%s7] sm:$0x1]
  %v3571 = vlaneseq
  %v3572 = vshrl.u32 %v3571, 7
  %v3573 = vsub.s32 0, %v3572
  %v3574 = vrot.slane %v3569, %v3573
  %v3584 = vcombine.low %v3545, %v3546
  %v3585 = vcombine.low %v3547, %v3548
  %v3587 = vunpack.c.l.s4 1983009808
  %v3588 = vunpack.c.0.s8 %v3587
  %v3589 = vlaneseq
  %v3590 = vshrl.u32 %v3589, 7
  %v3591 = vsub.s32 %v3588, %v3590
  %v3592 = vrot.slane %v3584, %v3591
  %v3594 = vunpack.c.l.s4 1983009808
  %v3595 = vunpack.c.0.s8 %v3594
  %v3596 = vlaneseq
  %v3597 = vshrl.u32 %v3596, 7
  %v3598 = vsub.s32 %v3595, %v3597
  %v3599 = vrot.slane %v3585, %v3598
  %v3600 = vcombine.low %v3592, %v3599
  %v3601 = vcombine.low %v3549, %v3550
  %v3602 = vcombine.low %v3551, %v3552
  %v3604 = vunpack.c.l.s4 1983009808
  %v3605 = vunpack.c.0.s8 %v3604
  %v3606 = vlaneseq
  %v3607 = vshrl.u32 %v3606, 7
  %v3608 = vsub.s32 %v3605, %v3607
  %v3609 = vrot.slane %v3601, %v3608
  %v3611 = vunpack.c.l.s4 1983009808
  %v3612 = vunpack.c.0.s8 %v3611
  %v3613 = vlaneseq
  %v3614 = vshrl.u32 %v3613, 7
  %v3615 = vsub.s32 %v3612, %v3614
  %v3616 = vrot.slane %v3602, %v3615
  %v3617 = vcombine.low %v3609, %v3616
  %3620 = vmatprep.subr.mxu0 0.0
  %3621 = vmatpush1.msra.mxu0 %v3553
  %3622 = vmatprep.subr.mxu0 0.0
  %3623 = vmatpush1.msra.mxu0 %v3554
  %3624 = vmatprep.subr.mxu0 0.0
  %3625 = vmatpush1.msra.mxu0 %v3555
  %3626 = vmatprep.subr.mxu0 0.0
  %3627 = vmatpush1.msra.mxu0 %v3556
  %3628 = vmatprep.subr.mxu0 0.0
  %3629 = vmatpush1.msra.mxu0 %v3557
  %3630 = vmatprep.subr.mxu0 0.0
  %3631 = vmatpush1.msra.mxu0 %v3558
  %3632 = vmatprep.subr.mxu0 0.0
  %3633 = vmatpush1.msra.mxu0 %v3559
  %3634 = vmatprep.subr.mxu0 0.0
  %3635 = vmatpush1.msra.mxu0 %v3560
  %3636 = vmatprep.subr.mxu0 0.0
  %3637 = vmatpush1.msra.mxu0 %v3561
  %3638 = vmatprep.subr.mxu0 0.0
  %3639 = vmatpush1.msra.mxu0 %v3562
  %3640 = vmatprep.subr.mxu0 0.0
  %3641 = vmatpush1.msra.mxu0 %v3563
  %3642 = vmatprep.subr.mxu0 0.0
  %3643 = vmatpush1.msra.mxu0 %v3564
  %3644 = vmatprep.subr.mxu0 0.0
  %3645 = vmatpush1.msra.mxu0 %v3565
  %3646 = vmatprep.subr.mxu0 0.0
  %3647 = vmatpush1.msra.mxu0 %v3566
  %3648 = vmatprep.subr.mxu0 0.0
  %3649 = vmatpush1.msra.mxu0 %v3567
  %3650 = vmatprep.subr.mxu0 0.0
  %3651 = vmatpush1.msra.mxu0 %v3568
  %3652 = vmatprep.subr.mxu0 0.0
  %3653 = vmatpush1.msra.mxu0 0.0
  %3654 = vmatprep.subr.mxu0 0.0
  %3655 = vmatpush1.msra.mxu0 0.0
  %3656 = vmatprep.subr.mxu0 0.0
  %3657 = vmatpush1.msra.mxu0 0.0
  %3658 = vmatprep.subr.mxu0 0.0
  %3659 = vmatpush1.msra.mxu0 0.0
  %3660 = vmatprep.subr.mxu0 0.0
  %3661 = vmatpush1.msra.mxu0 0.0
  %3662 = vmatprep.subr.mxu0 0.0
  %3663 = vmatpush1.msra.mxu0 0.0
  %3664 = vmatprep.subr.mxu0 0.0
  %3665 = vmatpush1.msra.mxu0 0.0
  %3666 = vmatprep.subr.mxu0 0.0
  %3667 = vmatpush1.msra.mxu0 0.0
  %3668 = vmatprep.subr.mxu0 0.0
  %3669 = vmatpush1.msra.mxu0 0.0
  %3670 = vmatprep.subr.mxu0 0.0
  %3671 = vmatpush1.msra.mxu0 0.0
  %3672 = vmatprep.subr.mxu0 0.0
  %3673 = vmatpush1.msra.mxu0 0.0
  %3674 = vmatprep.subr.mxu0 0.0
  %3675 = vmatpush1.msra.mxu0 0.0
  %3676 = vmatprep.subr.mxu0 0.0
  %3677 = vmatpush1.msra.mxu0 0.0
  %3678 = vmatprep.subr.mxu0 0.0
  %3679 = vmatpush1.msra.mxu0 0.0
  %3680 = vmatprep.subr.mxu0 0.0
  %3681 = vmatpush1.msra.mxu0 0.0
  %3682 = vmatprep.subr.mxu0 0.0
  %3683 = vmatpush1.msra.mxu0 0.0
  %3684 = vmatprep.mubr.f32.mxu0 0.0
  %3685 = vmatmul.mubr.f32.gmra.mrb[0].mxu0 %v3600
  %v3686 = vpop.f32.mrb[0].mxu0
  %v3687 = vadd.f32 %v3574, %v3686
  %v3688 = vpop.f32.mrb[0].mxu0
  %3689 = vmatprep.mubr.f32.mxu0 0.0
  %3690 = vmatmul.mubr.f32.gmra.mrb[0].mxu0 %v3617
  %v3691 = vpop.f32.mrb[0].mxu0
  %v3692 = vadd.f32 %v3574, %v3691
  %v3693 = vpop.f32.mrb[0].mxu0
  %3694 = vdwg.mxu0
  %v3697 = vcombine.high %v3687, %v3687
  %v3699 = vunpack.c.l.s4 1983009808
  %v3700 = vunpack.c.0.s8 %v3699
  %v3701 = vlaneseq
  %v3702 = vshrl.u32 %v3701, 7
  %v3703 = vsub.s32 %v3700, %v3702
  %v3704 = vrot.slane %v3687, %v3703
  %v3706 = vunpack.c.l.s4 1983009808
  %v3707 = vunpack.c.0.s8 %v3706
  %v3708 = vlaneseq
  %v3709 = vshrl.u32 %v3708, 7
  %v3710 = vsub.s32 %v3707, %v3709
  %v3711 = vrot.slane %v3697, %v3710
  %v3712 = vcombine.high %v3704, %v3704
  %v3713 = vcombine.high %v3711, %v3711
  %v3714 = vcombine.high %v3692, %v3692
  %v3716 = vunpack.c.l.s4 1983009808
  %v3717 = vunpack.c.0.s8 %v3716
  %v3718 = vlaneseq
  %v3719 = vshrl.u32 %v3718, 7
  %v3720 = vsub.s32 %v3717, %v3719
  %v3721 = vrot.slane %v3692, %v3720
  %v3723 = vunpack.c.l.s4 1983009808
  %v3724 = vunpack.c.0.s8 %v3723
  %v3725 = vlaneseq
  %v3726 = vshrl.u32 %v3725, 7
  %v3727 = vsub.s32 %v3724, %v3726
  %v3728 = vrot.slane %v3714, %v3727
  %v3729 = vcombine.high %v3721, %v3721
  %v3730 = vcombine.high %v3728, %v3728
  %vm3739 = vcmask 66560
  %3740 = vst.msk [vmem:[%s8] sm:$0x3] %vm3739, %v3704
  %3741 = vst.msk [vmem:[%s8 + $0x2] sm:$0x3] %vm3739, %v3712
  %3742 = vst.msk [vmem:[%s8 + $0x4] sm:$0x3] %vm3739, %v3711
  %3743 = vst.msk [vmem:[%s8 + $0x6] sm:$0x3] %vm3739, %v3713
  %3744 = vst.msk [vmem:[%s8 + $0x8] sm:$0x3] %vm3739, %v3721
  %3745 = vst.msk [vmem:[%s8 + $0xa] sm:$0x3] %vm3739, %v3729
  %3746 = vst.msk [vmem:[%s8 + $0xc] sm:$0x3] %vm3739, %v3728
  %3747 = vst.msk [vmem:[%s8 + $0xe] sm:$0x3] %vm3739, %v3730
  // Predicated region
  $region34: #{lstm_model_forward.1} parent=0 // pred_check
    _
  $region35: #{lstm_model_forward.1} parent=0 // pred_check_branch
    %3749 = sbr.rel (0) target = $region37
  $region36: #{lstm_model_forward.1} parent=0 // pred_region
    _
  $region37: #{lstm_model_forward.1} parent=0 // pred_fallthru
    _
  // Predicated region
  $region38: #{lstm_model_forward.1} parent=0 // pred_check
    _
  $region39: #{lstm_model_forward.1} parent=0 // pred_check_branch
    %3751 = sbr.rel (0) target = $region41
  $region40: #{lstm_model_forward.1} parent=0 // pred_region
    _
  $region41: #{lstm_model_forward.1} parent=0 // pred_fallthru
    _

</llo_original>
